<compile_context>
chip_gen: v7x
topology: tpu7x:2x2x1
jax: 0.10.0
libtpu: 0.0.40
codegen_flags: <defaults>
</compile_context>

<pallas_src>
import functools

import jax
import jax.numpy as jnp
from jax import lax
from jax.experimental import pallas as pl
from jax.experimental.pallas import tpu as pltpu


def _round_up(x, m):
    return ((x + m - 1) // m) * m


def _fused_lstm_kernel(x_emb_ref, wih0_ref, wih_ref, whh_ref, bias_ref,
                       out_ref, h_all_ref, c_all_ref, gx_ref, *,
                       seq_len, b_pad, e_pad, h_pad):
    """One grid step == one LSTM layer (grid axis 0 is sequential over layers).

    x_emb_ref : (L, B_pad, E_pad)        padded embeddings (read at layer 0 only)
    wih0_ref  : (E_pad, 4*H_pad)         layer-0 input->gates weights (pre-transposed)
    wih_ref   : (1, H_pad, 4*H_pad)      layer-l input->gates weights (slot 0 unused)
    whh_ref   : (1, H_pad, 4*H_pad)      layer-l hidden->gates weights
    bias_ref  : (1, 1, 4*H_pad)          layer-l b_ih + b_hh (gate-padded)
    out_ref   : (L, B_pad, H_pad)        VMEM-resident activations (const index map)
    h_all_ref : (1, B_pad, H_pad)        final hidden state of this layer
    c_all_ref : (1, B_pad, H_pad)        final cell state of this layer
    gx_ref    : (L*B_pad, 4*H_pad)       scratch: hoisted x @ W_ih^T + bias
    Gate order (PyTorch): i, f, g, o; each gate sits in its own H_pad-lane group.
    """
    layer = pl.program_id(0)
    H = h_pad
    bias = bias_ref[0, 0]                          # (4*H_pad,)

    # ---- hoisted, time-independent input projection: one big MXU matmul ----
    @pl.when(layer == 0)
    def _():
        x2 = x_emb_ref[...].reshape(seq_len * b_pad, e_pad)
        gx_ref[...] = jnp.dot(x2, wih0_ref[...],
                              preferred_element_type=jnp.float32) + bias

    @pl.when(layer > 0)
    def _():
        # Previous layer's activations are still resident in the output block.
        x2 = out_ref[...].reshape(seq_len * b_pad, H)
        gx_ref[...] = jnp.dot(x2, wih_ref[0],
                              preferred_element_type=jnp.float32) + bias

    # ---- sequential recurrence over time ----
    whh = whh_ref[0]                               # (H_pad, 4*H_pad)

    def step(t, carry):
        h, c = carry
        row = pl.multiple_of(t * b_pad, b_pad)
        gates = gx_ref[pl.ds(row, b_pad), :] + jnp.dot(
            h, whh, preferred_element_type=jnp.float32)
        i_g = jax.nn.sigmoid(gates[:, 0 * H:1 * H])
        f_g = jax.nn.sigmoid(gates[:, 1 * H:2 * H])
        g_g = jnp.tanh(gates[:, 2 * H:3 * H])
        o_g = jax.nn.sigmoid(gates[:, 3 * H:4 * H])
        c_new = f_g * c + i_g * g_g
        h_new = o_g * jnp.tanh(c_new)
        out_ref[t] = h_new.astype(out_ref.dtype)
        return h_new, c_new

    h0 = jnp.zeros((b_pad, H), jnp.float32)
    c0 = jnp.zeros((b_pad, H), jnp.float32)
    h_fin, c_fin = lax.fori_loop(0, seq_len, step, (h0, c0), unroll=True)
    h_all_ref[0] = h_fin
    c_all_ref[0] = c_fin


def _build_fused_call(n_layers, seq_len, b_pad, e_pad, h_pad):
    kernel = functools.partial(_fused_lstm_kernel, seq_len=seq_len,
                               b_pad=b_pad, e_pad=e_pad, h_pad=h_pad)
    grid_spec = pltpu.PrefetchScalarGridSpec(
        num_scalar_prefetch=0,
        grid=(n_layers,),
        in_specs=[
            # Constant index maps -> fetched once, stay VMEM-resident across layers.
            pl.BlockSpec((seq_len, b_pad, e_pad), lambda l: (0, 0, 0)),
            pl.BlockSpec((e_pad, 4 * h_pad), lambda l: (0, 0)),
            # Per-layer weights/bias: prefetched for layer l+1 while layer l computes.
            pl.BlockSpec((1, h_pad, 4 * h_pad), lambda l: (l, 0, 0)),
            pl.BlockSpec((1, h_pad, 4 * h_pad), lambda l: (l, 0, 0)),
            pl.BlockSpec((1, 1, 4 * h_pad), lambda l: (l, 0, 0)),
        ],
        out_specs=[
            # Constant index map -> activation slab resident in VMEM, flushed once.
            pl.BlockSpec((seq_len, b_pad, h_pad), lambda l: (0, 0, 0)),
            pl.BlockSpec((1, b_pad, h_pad), lambda l: (l, 0, 0)),
            pl.BlockSpec((1, b_pad, h_pad), lambda l: (l, 0, 0)),
        ],
        scratch_shapes=[pltpu.VMEM((seq_len * b_pad, 4 * h_pad), jnp.float32)],
    )
    out_shapes = (
        jax.ShapeDtypeStruct((seq_len, b_pad, h_pad), jnp.float32),
        jax.ShapeDtypeStruct((n_layers, b_pad, h_pad), jnp.float32),
        jax.ShapeDtypeStruct((n_layers, b_pad, h_pad), jnp.float32),
    )
    return pl.pallas_call(
        kernel,
        out_shape=out_shapes,
        grid_spec=grid_spec,
        compiler_params=pltpu.CompilerParams(
            dimension_semantics=("arbitrary",)),
    )


def _pad_gate_cols(w_t, hid_dim, hid_pad):
    """(in_dim, 4*hid_dim) -> (in_dim, 4*hid_pad): each gate padded to hid_pad lanes."""
    in_dim = w_t.shape[0]
    w4 = w_t.reshape(in_dim, 4, hid_dim)
    w4 = jnp.pad(w4, ((0, 0), (0, 0), (0, hid_pad - hid_dim)))
    return w4.reshape(in_dim, 4 * hid_pad)


class EncoderPallas:
    """JAX/Pallas re-implementation of the PyTorch Encoder forward pass."""

    def __init__(self, input_dim, emb_dim, hid_dim, n_layers, dropout, key):
        self.input_dim = input_dim
        self.emb_dim = emb_dim
        self.hid_dim = hid_dim
        self.n_layers = n_layers
        self.dropout_p = dropout          # identity in eval mode (see TODO above)
        self.hid_pad = _round_up(hid_dim, 128)   # each gate -> its own 128-lane group
        self.emb_pad = _round_up(emb_dim, 128)

        keys = jax.random.split(key, 1 + 4 * n_layers)
        # nn.Embedding default init: N(0, 1)
        self.embedding = jax.random.normal(keys[0], (input_dim, emb_dim),
                                           dtype=jnp.float32)

        # nn.LSTM default init: U(-1/sqrt(H), 1/sqrt(H)) for all params.
        k = 1.0 / (hid_dim ** 0.5)
        self.raw_params = []        # (w_ih, w_hh, b_ih, b_hh) in PyTorch layout
        wih_rest, whh_list, bias_list = [], [], []
        w_ih0_t = None
        for layer in range(n_layers):
            in_size = emb_dim if layer == 0 else hid_dim
            k0, k1, k2, k3 = keys[1 + 4 * layer: 1 + 4 * (layer + 1)]
            w_ih = jax.random.uniform(k0, (4 * hid_dim, in_size),
                                      minval=-k, maxval=k, dtype=jnp.float32)
            w_hh = jax.random.uniform(k1, (4 * hid_dim, hid_dim),
                                      minval=-k, maxval=k, dtype=jnp.float32)
            b_ih = jax.random.uniform(k2, (4 * hid_dim,),
                                      minval=-k, maxval=k, dtype=jnp.float32)
            b_hh = jax.random.uniform(k3, (4 * hid_dim,),
                                      minval=-k, maxval=k, dtype=jnp.float32)
            self.raw_params.append((w_ih, w_hh, b_ih, b_hh))

            # Pre-transpose + pad so padded hidden lanes stay exactly zero:
            # zero weight rows/cols + zero bias in the padding => padded gates give
            # i=f=o=0.5, g=0 => padded h/c remain 0 and never contaminate real lanes.
            w_ih_t = _pad_gate_cols(jnp.asarray(w_ih.T), hid_dim, self.hid_pad)
            if layer == 0:
                w_ih0_t = jnp.pad(w_ih_t, ((0, self.emb_pad - emb_dim), (0, 0)))
                wih_rest.append(jnp.zeros((self.hid_pad, 4 * self.hid_pad),
                                          jnp.float32))     # slot 0 unused in kernel
            else:
                wih_rest.append(jnp.pad(w_ih_t,
                                        ((0, self.hid_pad - hid_dim), (0, 0))))
            w_hh_t = _pad_gate_cols(jnp.asarray(w_hh.T), hid_dim, self.hid_pad)
            whh_list.append(jnp.pad(w_hh_t, ((0, self.hid_pad - hid_dim), (0, 0))))
            bias_list.append(_pad_gate_cols((b_ih + b_hh).reshape(1, -1),
                                            hid_dim, self.hid_pad))

        self.w_ih0_t_pad = w_ih0_t                         # (E_pad, 4*H_pad)
        self.w_ih_t_pad = jnp.stack(wih_rest, axis=0)      # (n_layers, H_pad, 4*H_pad)
        self.w_hh_t_pad = jnp.stack(whh_list, axis=0)      # (n_layers, H_pad, 4*H_pad)
        self.bias_pad = jnp.stack(bias_list, axis=0)       # (n_layers, 1, 4*H_pad)

    def __call__(self, src):
        # src: (seq_len, batch) int32
        L, B = src.shape
        B_pad = _round_up(max(B, 8), 8)           # fill the 8 sublanes

        embedded = jnp.take(self.embedding, src, axis=0)   # (L, B, emb_dim)
        # Dropout: identity in eval mode.
        x = jnp.pad(embedded, ((0, 0), (0, B_pad - B),
                               (0, self.emb_pad - self.emb_dim)))

        call = _build_fused_call(self.n_layers, L, B_pad, self.emb_pad,
                                 self.hid_pad)
        out, h_all, c_all = call(x, self.w_ih0_t_pad, self.w_ih_t_pad,
                                 self.w_hh_t_pad, self.bias_pad)

        output = out[:, :B, :self.hid_dim]                  # (L, B, hid_dim)
        hidden = (h_all[:, :B, :self.hid_dim],              # (n_layers, B, hid_dim)
                  c_all[:, :B, :self.hid_dim])
        return output, hidden


def _lstm_reference(x, w_ih, w_hh, b_ih, b_hh):
    """Pure-JAX reference for one LSTM layer using raw PyTorch-layout params."""
    H = w_hh.shape[1]
    B = x.shape[1]

    def step(carry, xt):
        h, c = carry
        gates = xt @ w_ih.T + h @ w_hh.T + b_ih + b_hh
        i = jax.nn.sigmoid(gates[:, 0 * H:1 * H])
        f = jax.nn.sigmoid(gates[:, 1 * H:2 * H])
        g = jnp.tanh(gates[:, 2 * H:3 * H])
        o = jax.nn.sigmoid(gates[:, 3 * H:4 * H])
        c_new = f * c + i * g
        h_new = o * jnp.tanh(c_new)
        return (h_new, c_new), h_new

    init = (jnp.zeros((B, H), jnp.float32), jnp.zeros((B, H), jnp.float32))
    (h_n, c_n), outs = lax.scan(step, init, x)
    return outs, h_n, c_n


if __name__ == "__main__":
    INPUT_DIM = 50    # vocab size
    EMB_DIM = 16
    HID_DIM = 32
    N_LAYERS = 2
    DROPOUT = 0.5
    SEQ_LEN = 8
    BATCH = 4

    key = jax.random.PRNGKey(0)
    k_params, k_src = jax.random.split(key)

    enc = EncoderPallas(INPUT_DIM, EMB_DIM, HID_DIM, N_LAYERS, DROPOUT, k_params)
    src = jax.random.randint(k_src, (SEQ_LEN, BATCH), 0, INPUT_DIM, dtype=jnp.int32)

    output, (h_n, c_n) = enc(src)
    output = jax.block_until_ready(output)
    h_n = jax.block_until_ready(h_n)
    c_n = jax.block_until_ready(c_n)

    assert output.shape == (SEQ_LEN, BATCH, HID_DIM)
    assert h_n.shape == (N_LAYERS, BATCH, HID_DIM)
    assert c_n.shape == (N_LAYERS, BATCH, HID_DIM)

    # Cross-check against a pure-JAX scan reference on the raw (unpadded) params.
    x_ref = jnp.take(enc.embedding, src, axis=0)
    for layer in range(N_LAYERS):
        w_ih, w_hh, b_ih, b_hh = enc.raw_params[layer]
        x_ref, h_ref, c_ref = _lstm_reference(x_ref, w_ih, w_hh, b_ih, b_hh)
        assert jnp.allclose(h_n[layer], h_ref, atol=1e-5, rtol=1e-5)
        assert jnp.allclose(c_n[layer], c_ref, atol=1e-5, rtol=1e-5)
    assert jnp.allclose(output, x_ref, atol=1e-5, rtol=1e-5)

    print("KERNEL_OK")
</pallas_src>

<mosaic_0001>
module attributes {stable_mosaic.version = 11 : i64} {
  func.func @_fused_lstm_kernel(%arg0: i32, %arg1: memref<8x8x128xf32, #tpu.memory_space<vmem>>, %arg2: memref<128x512xf32, #tpu.memory_space<vmem>>, %arg3: memref<1x128x512xf32, #tpu.memory_space<vmem>>, %arg4: memref<1x128x512xf32, #tpu.memory_space<vmem>>, %arg5: memref<1x1x512xf32, #tpu.memory_space<vmem>>, %arg6: memref<8x8x128xf32, #tpu.memory_space<vmem>>, %arg7: memref<1x8x128xf32, #tpu.memory_space<vmem>>, %arg8: memref<1x8x128xf32, #tpu.memory_space<vmem>>, %arg9: memref<64x512xf32, #tpu.memory_space<vmem>>) attributes {dimension_semantics = [#tpu.dimension_semantics<arbitrary>], iteration_bounds = array<i64: 2>, scalar_prefetch = 0 : i64, scratch_operands = 1 : i64, tpu.core_type = #tpu.core_type<tc>, window_params = [{pipeline_mode = #tpu.pipeline_mode<synchronous>, transform_indices = @transform_0, window_bounds = array<i64: 8, 8, 128>}, {pipeline_mode = #tpu.pipeline_mode<synchronous>, transform_indices = @transform_1, window_bounds = array<i64: 128, 512>}, {transform_indices = @transform_2, window_bounds = array<i64: 1, 128, 512>}, {transform_indices = @transform_3, window_bounds = array<i64: 1, 128, 512>}, {transform_indices = @transform_4, window_bounds = array<i64: 1, 1, 512>}, {pipeline_mode = #tpu.pipeline_mode<synchronous>, transform_indices = @transform_5, window_bounds = array<i64: 8, 8, 128>}, {transform_indices = @transform_6, window_bounds = array<i64: 1, 8, 128>}, {transform_indices = @transform_7, window_bounds = array<i64: 1, 8, 128>}]} {
    %c0 = arith.constant 0 : index
    %c0_0 = arith.constant 0 : index
    %c0_1 = arith.constant 0 : index
    %0 = vector.load %arg5[%c0, %c0_0, %c0_1] : memref<1x1x512xf32, #tpu.memory_space<vmem>>, vector<1x1x512xf32>
    %1 = vector.shape_cast %0 : vector<1x1x512xf32> to vector<512xf32>
    %c0_i32 = arith.constant 0 : i32
    %2 = arith.cmpi eq, %arg0, %c0_i32 : i32
    %3 = arith.extui %2 : i1 to i32
    %c0_i32_2 = arith.constant 0 : i32
    %4 = arith.cmpi ne, %3, %c0_i32_2 : i32
    scf.if %4 {
      %c0_80 = arith.constant 0 : index
      %c0_81 = arith.constant 0 : index
      %c0_82 = arith.constant 0 : index
      %298 = vector.load %arg1[%c0_80, %c0_81, %c0_82] : memref<8x8x128xf32, #tpu.memory_space<vmem>>, vector<8x8x128xf32>
      %299 = vector.shape_cast %298 : vector<8x8x128xf32> to vector<64x128xf32>
      %c0_83 = arith.constant 0 : index
      %c0_84 = arith.constant 0 : index
      %300 = vector.load %arg2[%c0_83, %c0_84] : memref<128x512xf32, #tpu.memory_space<vmem>>, vector<128x512xf32>
      %cst_85 = arith.constant dense<0.000000e+00> : vector<64x512xf32>
      %301 = tpu.matmul %299, %300, %cst_85 {dimension_numbers = #tpu.dot_dimension_numbers<[1], [0], [0], [1], [0, 0, 1, 1], [], []>} : vector<64x128xf32>, vector<128x512xf32>, vector<64x512xf32> -> vector<64x512xf32>
      %302 = vector.shape_cast %1 : vector<512xf32> to vector<1x512xf32>
      %303 = vector.broadcast %302 : vector<1x512xf32> to vector<64x512xf32>
      %304 = arith.addf %301, %303 : vector<64x512xf32>
      %c0_86 = arith.constant 0 : index
      %c0_87 = arith.constant 0 : index
      %305 = vector.load %arg9[%c0_86, %c0_87] : memref<64x512xf32, #tpu.memory_space<vmem>>, vector<64x512xf32>
      tpu.vector_store %arg9[%c0_86, %c0_87], %304 {strides = array<i32>} : memref<64x512xf32, #tpu.memory_space<vmem>>, vector<64x512xf32>,
    } else {
    }
    %c0_i32_3 = arith.constant 0 : i32
    %5 = arith.cmpi sgt, %arg0, %c0_i32_3 : i32
    %6 = arith.extui %5 : i1 to i32
    %c0_i32_4 = arith.constant 0 : i32
    %7 = arith.cmpi ne, %6, %c0_i32_4 : i32
    scf.if %7 {
      %c0_80 = arith.constant 0 : index
      %c0_81 = arith.constant 0 : index
      %c0_82 = arith.constant 0 : index
      %298 = vector.load %arg6[%c0_80, %c0_81, %c0_82] : memref<8x8x128xf32, #tpu.memory_space<vmem>>, vector<8x8x128xf32>
      %299 = vector.shape_cast %298 : vector<8x8x128xf32> to vector<64x128xf32>
      %c0_83 = arith.constant 0 : index
      %c0_84 = arith.constant 0 : index
      %c0_85 = arith.constant 0 : index
      %300 = vector.load %arg3[%c0_83, %c0_84, %c0_85] : memref<1x128x512xf32, #tpu.memory_space<vmem>>, vector<1x128x512xf32>
      %301 = vector.shape_cast %300 : vector<1x128x512xf32> to vector<128x512xf32>
      %cst_86 = arith.constant dense<0.000000e+00> : vector<64x512xf32>
      %302 = tpu.matmul %299, %301, %cst_86 {dimension_numbers = #tpu.dot_dimension_numbers<[1], [0], [0], [1], [0, 0, 1, 1], [], []>} : vector<64x128xf32>, vector<128x512xf32>, vector<64x512xf32> -> vector<64x512xf32>
      %303 = vector.shape_cast %1 : vector<512xf32> to vector<1x512xf32>
      %304 = vector.broadcast %303 : vector<1x512xf32> to vector<64x512xf32>
      %305 = arith.addf %302, %304 : vector<64x512xf32>
      %c0_87 = arith.constant 0 : index
      %c0_88 = arith.constant 0 : index
      %306 = vector.load %arg9[%c0_87, %c0_88] : memref<64x512xf32, #tpu.memory_space<vmem>>, vector<64x512xf32>
      tpu.vector_store %arg9[%c0_87, %c0_88], %305 {strides = array<i32>} : memref<64x512xf32, #tpu.memory_space<vmem>>, vector<64x512xf32>,
    } else {
    }
    %c0_5 = arith.constant 0 : index
    %c0_6 = arith.constant 0 : index
    %c0_7 = arith.constant 0 : index
    %8 = vector.load %arg4[%c0_5, %c0_6, %c0_7] : memref<1x128x512xf32, #tpu.memory_space<vmem>>, vector<1x128x512xf32>
    %9 = vector.shape_cast %8 : vector<1x128x512xf32> to vector<128x512xf32>
    %cst = arith.constant 0.000000e+00 : f32
    %10 = vector.broadcast %cst : f32 to vector<8x128xf32>
    %cst_8 = arith.constant 0.000000e+00 : f32
    %11 = vector.broadcast %cst_8 : f32 to vector<8x128xf32>
    %c0_i32_9 = arith.constant 0 : i32
    %c8_i32 = arith.constant 8 : i32
    %12 = arith.muli %c0_i32_9, %c8_i32 : i32
    %13 = tpu.assume_multiple %12, 8 : i32
    %14 = arith.index_cast %13 : i32 to index
    %c0_10 = arith.constant 0 : index
    %15 = vector.load %arg9[%14, %c0_10] : memref<64x512xf32, #tpu.memory_space<vmem>>, vector<8x512xf32>
    %cst_11 = arith.constant dense<0.000000e+00> : vector<8x512xf32>
    %16 = tpu.matmul %10, %9, %cst_11 {dimension_numbers = #tpu.dot_dimension_numbers<[1], [0], [0], [1], [0, 0, 1, 1], [], []>} : vector<8x128xf32>, vector<128x512xf32>, vector<8x512xf32> -> vector<8x512xf32>
    %17 = arith.addf %15, %16 : vector<8x512xf32>
    %18 = vector.extract_strided_slice %17 {offsets = [0, 0], sizes = [8, 128], strides = [1, 1]} : vector<8x512xf32> to vector<8x128xf32>
    %19 = arith.negf %18 : vector<8x128xf32>
    %20 = math.exp %19 : vector<8x128xf32>
    %cst_12 = arith.constant 1.000000e+00 : f32
    %21 = vector.broadcast %cst_12 : f32 to vector<8x128xf32>
    %22 = arith.addf %21, %20 : vector<8x128xf32>
    %23 = arith.divf %21, %22 : vector<8x128xf32>
    %24 = vector.extract_strided_slice %17 {offsets = [0, 128], sizes = [8, 128], strides = [1, 1]} : vector<8x512xf32> to vector<8x128xf32>
    %25 = arith.negf %24 : vector<8x128xf32>
    %26 = math.exp %25 : vector<8x128xf32>
    %cst_13 = arith.constant 1.000000e+00 : f32
    %27 = vector.broadcast %cst_13 : f32 to vector<8x128xf32>
    %28 = arith.addf %27, %26 : vector<8x128xf32>
    %29 = arith.divf %27, %28 : vector<8x128xf32>
    %30 = vector.extract_strided_slice %17 {offsets = [0, 256], sizes = [8, 128], strides = [1, 1]} : vector<8x512xf32> to vector<8x128xf32>
    %31 = math.tanh %30 : vector<8x128xf32>
    %32 = vector.extract_strided_slice %17 {offsets = [0, 384], sizes = [8, 128], strides = [1, 1]} : vector<8x512xf32> to vector<8x128xf32>
    %33 = arith.negf %32 : vector<8x128xf32>
    %34 = math.exp %33 : vector<8x128xf32>
    %cst_14 = arith.constant 1.000000e+00 : f32
    %35 = vector.broadcast %cst_14 : f32 to vector<8x128xf32>
    %36 = arith.addf %35, %34 : vector<8x128xf32>
    %37 = arith.divf %35, %36 : vector<8x128xf32>
    %38 = arith.mulf %29, %11 : vector<8x128xf32>
    %39 = arith.mulf %23, %31 : vector<8x128xf32>
    %40 = arith.addf %38, %39 : vector<8x128xf32>
    %41 = math.tanh %40 : vector<8x128xf32>
    %42 = arith.mulf %37, %41 : vector<8x128xf32>
    %43 = arith.index_cast %c0_i32_9 : i32 to index
    %c0_15 = arith.constant 0 : index
    %c0_16 = arith.constant 0 : index
    %44 = vector.load %arg6[%43, %c0_15, %c0_16] : memref<8x8x128xf32, #tpu.memory_space<vmem>>, vector<1x8x128xf32>
    %45 = vector.shape_cast %44 : vector<1x8x128xf32> to vector<8x128xf32>
    %46 = vector.shape_cast %42 : vector<8x128xf32> to vector<1x8x128xf32>
    tpu.vector_store %arg6[%43, %c0_15, %c0_16], %46 {strides = array<i32>} : memref<8x8x128xf32, #tpu.memory_space<vmem>>, vector<1x8x128xf32>,
    %c1_i32 = arith.constant 1 : i32
    %c8_i32_17 = arith.constant 8 : i32
    %47 = arith.muli %c1_i32, %c8_i32_17 : i32
    %48 = tpu.assume_multiple %47, 8 : i32
    %49 = arith.index_cast %48 : i32 to index
    %c0_18 = arith.constant 0 : index
    %50 = vector.load %arg9[%49, %c0_18] : memref<64x512xf32, #tpu.memory_space<vmem>>, vector<8x512xf32>
    %cst_19 = arith.constant dense<0.000000e+00> : vector<8x512xf32>
    %51 = tpu.matmul %42, %9, %cst_19 {dimension_numbers = #tpu.dot_dimension_numbers<[1], [0], [0], [1], [0, 0, 1, 1], [], []>} : vector<8x128xf32>, vector<128x512xf32>, vector<8x512xf32> -> vector<8x512xf32>
    %52 = arith.addf %50, %51 : vector<8x512xf32>
    %53 = vector.extract_strided_slice %52 {offsets = [0, 0], sizes = [8, 128], strides = [1, 1]} : vector<8x512xf32> to vector<8x128xf32>
    %54 = arith.negf %53 : vector<8x128xf32>
    %55 = math.exp %54 : vector<8x128xf32>
    %cst_20 = arith.constant 1.000000e+00 : f32
    %56 = vector.broadcast %cst_20 : f32 to vector<8x128xf32>
    %57 = arith.addf %56, %55 : vector<8x128xf32>
    %58 = arith.divf %56, %57 : vector<8x128xf32>
    %59 = vector.extract_strided_slice %52 {offsets = [0, 128], sizes = [8, 128], strides = [1, 1]} : vector<8x512xf32> to vector<8x128xf32>
    %60 = arith.negf %59 : vector<8x128xf32>
    %61 = math.exp %60 : vector<8x128xf32>
    %cst_21 = arith.constant 1.000000e+00 : f32
    %62 = vector.broadcast %cst_21 : f32 to vector<8x128xf32>
    %63 = arith.addf %62, %61 : vector<8x128xf32>
    %64 = arith.divf %62, %63 : vector<8x128xf32>
    %65 = vector.extract_strided_slice %52 {offsets = [0, 256], sizes = [8, 128], strides = [1, 1]} : vector<8x512xf32> to vector<8x128xf32>
    %66 = math.tanh %65 : vector<8x128xf32>
    %67 = vector.extract_strided_slice %52 {offsets = [0, 384], sizes = [8, 128], strides = [1, 1]} : vector<8x512xf32> to vector<8x128xf32>
    %68 = arith.negf %67 : vector<8x128xf32>
    %69 = math.exp %68 : vector<8x128xf32>
    %cst_22 = arith.constant 1.000000e+00 : f32
    %70 = vector.broadcast %cst_22 : f32 to vector<8x128xf32>
    %71 = arith.addf %70, %69 : vector<8x128xf32>
    %72 = arith.divf %70, %71 : vector<8x128xf32>
    %73 = arith.mulf %64, %40 : vector<8x128xf32>
    %74 = arith.mulf %58, %66 : vector<8x128xf32>
    %75 = arith.addf %73, %74 : vector<8x128xf32>
    %76 = math.tanh %75 : vector<8x128xf32>
    %77 = arith.mulf %72, %76 : vector<8x128xf32>
    %78 = arith.index_cast %c1_i32 : i32 to index
    %c0_23 = arith.constant 0 : index
    %c0_24 = arith.constant 0 : index
    %79 = vector.load %arg6[%78, %c0_23, %c0_24] : memref<8x8x128xf32, #tpu.memory_space<vmem>>, vector<1x8x128xf32>
    %80 = vector.shape_cast %79 : vector<1x8x128xf32> to vector<8x128xf32>
    %81 = vector.shape_cast %77 : vector<8x128xf32> to vector<1x8x128xf32>
    tpu.vector_store %arg6[%78, %c0_23, %c0_24], %81 {strides = array<i32>} : memref<8x8x128xf32, #tpu.memory_space<vmem>>, vector<1x8x128xf32>,
    %c2_i32 = arith.constant 2 : i32
    %c8_i32_25 = arith.constant 8 : i32
    %82 = arith.muli %c2_i32, %c8_i32_25 : i32
    %83 = tpu.assume_multiple %82, 8 : i32
    %84 = arith.index_cast %83 : i32 to index
    %c0_26 = arith.constant 0 : index
    %85 = vector.load %arg9[%84, %c0_26] : memref<64x512xf32, #tpu.memory_space<vmem>>, vector<8x512xf32>
    %cst_27 = arith.constant dense<0.000000e+00> : vector<8x512xf32>
    %86 = tpu.matmul %77, %9, %cst_27 {dimension_numbers = #tpu.dot_dimension_numbers<[1], [0], [0], [1], [0, 0, 1, 1], [], []>} : vector<8x128xf32>, vector<128x512xf32>, vector<8x512xf32> -> vector<8x512xf32>
    %87 = arith.addf %85, %86 : vector<8x512xf32>
    %88 = vector.extract_strided_slice %87 {offsets = [0, 0], sizes = [8, 128], strides = [1, 1]} : vector<8x512xf32> to vector<8x128xf32>
    %89 = arith.negf %88 : vector<8x128xf32>
    %90 = math.exp %89 : vector<8x128xf32>
    %cst_28 = arith.constant 1.000000e+00 : f32
    %91 = vector.broadcast %cst_28 : f32 to vector<8x128xf32>
    %92 = arith.addf %91, %90 : vector<8x128xf32>
    %93 = arith.divf %91, %92 : vector<8x128xf32>
    %94 = vector.extract_strided_slice %87 {offsets = [0, 128], sizes = [8, 128], strides = [1, 1]} : vector<8x512xf32> to vector<8x128xf32>
    %95 = arith.negf %94 : vector<8x128xf32>
    %96 = math.exp %95 : vector<8x128xf32>
    %cst_29 = arith.constant 1.000000e+00 : f32
    %97 = vector.broadcast %cst_29 : f32 to vector<8x128xf32>
    %98 = arith.addf %97, %96 : vector<8x128xf32>
    %99 = arith.divf %97, %98 : vector<8x128xf32>
    %100 = vector.extract_strided_slice %87 {offsets = [0, 256], sizes = [8, 128], strides = [1, 1]} : vector<8x512xf32> to vector<8x128xf32>
    %101 = math.tanh %100 : vector<8x128xf32>
    %102 = vector.extract_strided_slice %87 {offsets = [0, 384], sizes = [8, 128], strides = [1, 1]} : vector<8x512xf32> to vector<8x128xf32>
    %103 = arith.negf %102 : vector<8x128xf32>
    %104 = math.exp %103 : vector<8x128xf32>
    %cst_30 = arith.constant 1.000000e+00 : f32
    %105 = vector.broadcast %cst_30 : f32 to vector<8x128xf32>
    %106 = arith.addf %105, %104 : vector<8x128xf32>
    %107 = arith.divf %105, %106 : vector<8x128xf32>
    %108 = arith.mulf %99, %75 : vector<8x128xf32>
    %109 = arith.mulf %93, %101 : vector<8x128xf32>
    %110 = arith.addf %108, %109 : vector<8x128xf32>
    %111 = math.tanh %110 : vector<8x128xf32>
    %112 = arith.mulf %107, %111 : vector<8x128xf32>
    %113 = arith.index_cast %c2_i32 : i32 to index
    %c0_31 = arith.constant 0 : index
    %c0_32 = arith.constant 0 : index
    %114 = vector.load %arg6[%113, %c0_31, %c0_32] : memref<8x8x128xf32, #tpu.memory_space<vmem>>, vector<1x8x128xf32>
    %115 = vector.shape_cast %114 : vector<1x8x128xf32> to vector<8x128xf32>
    %116 = vector.shape_cast %112 : vector<8x128xf32> to vector<1x8x128xf32>
    tpu.vector_store %arg6[%113, %c0_31, %c0_32], %116 {strides = array<i32>} : memref<8x8x128xf32, #tpu.memory_space<vmem>>, vector<1x8x128xf32>,
    %c3_i32 = arith.constant 3 : i32
    %c8_i32_33 = arith.constant 8 : i32
    %117 = arith.muli %c3_i32, %c8_i32_33 : i32
    %118 = tpu.assume_multiple %117, 8 : i32
    %119 = arith.index_cast %118 : i32 to index
    %c0_34 = arith.constant 0 : index
    %120 = vector.load %arg9[%119, %c0_34] : memref<64x512xf32, #tpu.memory_space<vmem>>, vector<8x512xf32>
    %cst_35 = arith.constant dense<0.000000e+00> : vector<8x512xf32>
    %121 = tpu.matmul %112, %9, %cst_35 {dimension_numbers = #tpu.dot_dimension_numbers<[1], [0], [0], [1], [0, 0, 1, 1], [], []>} : vector<8x128xf32>, vector<128x512xf32>, vector<8x512xf32> -> vector<8x512xf32>
    %122 = arith.addf %120, %121 : vector<8x512xf32>
    %123 = vector.extract_strided_slice %122 {offsets = [0, 0], sizes = [8, 128], strides = [1, 1]} : vector<8x512xf32> to vector<8x128xf32>
    %124 = arith.negf %123 : vector<8x128xf32>
    %125 = math.exp %124 : vector<8x128xf32>
    %cst_36 = arith.constant 1.000000e+00 : f32
    %126 = vector.broadcast %cst_36 : f32 to vector<8x128xf32>
    %127 = arith.addf %126, %125 : vector<8x128xf32>
    %128 = arith.divf %126, %127 : vector<8x128xf32>
    %129 = vector.extract_strided_slice %122 {offsets = [0, 128], sizes = [8, 128], strides = [1, 1]} : vector<8x512xf32> to vector<8x128xf32>
    %130 = arith.negf %129 : vector<8x128xf32>
    %131 = math.exp %130 : vector<8x128xf32>
    %cst_37 = arith.constant 1.000000e+00 : f32
    %132 = vector.broadcast %cst_37 : f32 to vector<8x128xf32>
    %133 = arith.addf %132, %131 : vector<8x128xf32>
    %134 = arith.divf %132, %133 : vector<8x128xf32>
    %135 = vector.extract_strided_slice %122 {offsets = [0, 256], sizes = [8, 128], strides = [1, 1]} : vector<8x512xf32> to vector<8x128xf32>
    %136 = math.tanh %135 : vector<8x128xf32>
    %137 = vector.extract_strided_slice %122 {offsets = [0, 384], sizes = [8, 128], strides = [1, 1]} : vector<8x512xf32> to vector<8x128xf32>
    %138 = arith.negf %137 : vector<8x128xf32>
    %139 = math.exp %138 : vector<8x128xf32>
    %cst_38 = arith.constant 1.000000e+00 : f32
    %140 = vector.broadcast %cst_38 : f32 to vector<8x128xf32>
    %141 = arith.addf %140, %139 : vector<8x128xf32>
    %142 = arith.divf %140, %141 : vector<8x128xf32>
    %143 = arith.mulf %134, %110 : vector<8x128xf32>
    %144 = arith.mulf %128, %136 : vector<8x128xf32>
    %145 = arith.addf %143, %144 : vector<8x128xf32>
    %146 = math.tanh %145 : vector<8x128xf32>
    %147 = arith.mulf %142, %146 : vector<8x128xf32>
    %148 = arith.index_cast %c3_i32 : i32 to index
    %c0_39 = arith.constant 0 : index
    %c0_40 = arith.constant 0 : index
    %149 = vector.load %arg6[%148, %c0_39, %c0_40] : memref<8x8x128xf32, #tpu.memory_space<vmem>>, vector<1x8x128xf32>
    %150 = vector.shape_cast %149 : vector<1x8x128xf32> to vector<8x128xf32>
    %151 = vector.shape_cast %147 : vector<8x128xf32> to vector<1x8x128xf32>
    tpu.vector_store %arg6[%148, %c0_39, %c0_40], %151 {strides = array<i32>} : memref<8x8x128xf32, #tpu.memory_space<vmem>>, vector<1x8x128xf32>,
    %c4_i32 = arith.constant 4 : i32
    %c8_i32_41 = arith.constant 8 : i32
    %152 = arith.muli %c4_i32, %c8_i32_41 : i32
    %153 = tpu.assume_multiple %152, 8 : i32
    %154 = arith.index_cast %153 : i32 to index
    %c0_42 = arith.constant 0 : index
    %155 = vector.load %arg9[%154, %c0_42] : memref<64x512xf32, #tpu.memory_space<vmem>>, vector<8x512xf32>
    %cst_43 = arith.constant dense<0.000000e+00> : vector<8x512xf32>
    %156 = tpu.matmul %147, %9, %cst_43 {dimension_numbers = #tpu.dot_dimension_numbers<[1], [0], [0], [1], [0, 0, 1, 1], [], []>} : vector<8x128xf32>, vector<128x512xf32>, vector<8x512xf32> -> vector<8x512xf32>
    %157 = arith.addf %155, %156 : vector<8x512xf32>
    %158 = vector.extract_strided_slice %157 {offsets = [0, 0], sizes = [8, 128], strides = [1, 1]} : vector<8x512xf32> to vector<8x128xf32>
    %159 = arith.negf %158 : vector<8x128xf32>
    %160 = math.exp %159 : vector<8x128xf32>
    %cst_44 = arith.constant 1.000000e+00 : f32
    %161 = vector.broadcast %cst_44 : f32 to vector<8x128xf32>
    %162 = arith.addf %161, %160 : vector<8x128xf32>
    %163 = arith.divf %161, %162 : vector<8x128xf32>
    %164 = vector.extract_strided_slice %157 {offsets = [0, 128], sizes = [8, 128], strides = [1, 1]} : vector<8x512xf32> to vector<8x128xf32>
    %165 = arith.negf %164 : vector<8x128xf32>
    %166 = math.exp %165 : vector<8x128xf32>
    %cst_45 = arith.constant 1.000000e+00 : f32
    %167 = vector.broadcast %cst_45 : f32 to vector<8x128xf32>
    %168 = arith.addf %167, %166 : vector<8x128xf32>
    %169 = arith.divf %167, %168 : vector<8x128xf32>
    %170 = vector.extract_strided_slice %157 {offsets = [0, 256], sizes = [8, 128], strides = [1, 1]} : vector<8x512xf32> to vector<8x128xf32>
    %171 = math.tanh %170 : vector<8x128xf32>
    %172 = vector.extract_strided_slice %157 {offsets = [0, 384], sizes = [8, 128], strides = [1, 1]} : vector<8x512xf32> to vector<8x128xf32>
    %173 = arith.negf %172 : vector<8x128xf32>
    %174 = math.exp %173 : vector<8x128xf32>
    %cst_46 = arith.constant 1.000000e+00 : f32
    %175 = vector.broadcast %cst_46 : f32 to vector<8x128xf32>
    %176 = arith.addf %175, %174 : vector<8x128xf32>
    %177 = arith.divf %175, %176 : vector<8x128xf32>
    %178 = arith.mulf %169, %145 : vector<8x128xf32>
    %179 = arith.mulf %163, %171 : vector<8x128xf32>
    %180 = arith.addf %178, %179 : vector<8x128xf32>
    %181 = math.tanh %180 : vector<8x128xf32>
    %182 = arith.mulf %177, %181 : vector<8x128xf32>
    %183 = arith.index_cast %c4_i32 : i32 to index
    %c0_47 = arith.constant 0 : index
    %c0_48 = arith.constant 0 : index
    %184 = vector.load %arg6[%183, %c0_47, %c0_48] : memref<8x8x128xf32, #tpu.memory_space<vmem>>, vector<1x8x128xf32>
    %185 = vector.shape_cast %184 : vector<1x8x128xf32> to vector<8x128xf32>
    %186 = vector.shape_cast %182 : vector<8x128xf32> to vector<1x8x128xf32>
    tpu.vector_store %arg6[%183, %c0_47, %c0_48], %186 {strides = array<i32>} : memref<8x8x128xf32, #tpu.memory_space<vmem>>, vector<1x8x128xf32>,
    %c5_i32 = arith.constant 5 : i32
    %c8_i32_49 = arith.constant 8 : i32
    %187 = arith.muli %c5_i32, %c8_i32_49 : i32
    %188 = tpu.assume_multiple %187, 8 : i32
    %189 = arith.index_cast %188 : i32 to index
    %c0_50 = arith.constant 0 : index
    %190 = vector.load %arg9[%189, %c0_50] : memref<64x512xf32, #tpu.memory_space<vmem>>, vector<8x512xf32>
    %cst_51 = arith.constant dense<0.000000e+00> : vector<8x512xf32>
    %191 = tpu.matmul %182, %9, %cst_51 {dimension_numbers = #tpu.dot_dimension_numbers<[1], [0], [0], [1], [0, 0, 1, 1], [], []>} : vector<8x128xf32>, vector<128x512xf32>, vector<8x512xf32> -> vector<8x512xf32>
    %192 = arith.addf %190, %191 : vector<8x512xf32>
    %193 = vector.extract_strided_slice %192 {offsets = [0, 0], sizes = [8, 128], strides = [1, 1]} : vector<8x512xf32> to vector<8x128xf32>
    %194 = arith.negf %193 : vector<8x128xf32>
    %195 = math.exp %194 : vector<8x128xf32>
    %cst_52 = arith.constant 1.000000e+00 : f32
    %196 = vector.broadcast %cst_52 : f32 to vector<8x128xf32>
    %197 = arith.addf %196, %195 : vector<8x128xf32>
    %198 = arith.divf %196, %197 : vector<8x128xf32>
    %199 = vector.extract_strided_slice %192 {offsets = [0, 128], sizes = [8, 128], strides = [1, 1]} : vector<8x512xf32> to vector<8x128xf32>
    %200 = arith.negf %199 : vector<8x128xf32>
    %201 = math.exp %200 : vector<8x128xf32>
    %cst_53 = arith.constant 1.000000e+00 : f32
    %202 = vector.broadcast %cst_53 : f32 to vector<8x128xf32>
    %203 = arith.addf %202, %201 : vector<8x128xf32>
    %204 = arith.divf %202, %203 : vector<8x128xf32>
    %205 = vector.extract_strided_slice %192 {offsets = [0, 256], sizes = [8, 128], strides = [1, 1]} : vector<8x512xf32> to vector<8x128xf32>
    %206 = math.tanh %205 : vector<8x128xf32>
    %207 = vector.extract_strided_slice %192 {offsets = [0, 384], sizes = [8, 128], strides = [1, 1]} : vector<8x512xf32> to vector<8x128xf32>
    %208 = arith.negf %207 : vector<8x128xf32>
    %209 = math.exp %208 : vector<8x128xf32>
    %cst_54 = arith.constant 1.000000e+00 : f32
    %210 = vector.broadcast %cst_54 : f32 to vector<8x128xf32>
    %211 = arith.addf %210, %209 : vector<8x128xf32>
    %212 = arith.divf %210, %211 : vector<8x128xf32>
    %213 = arith.mulf %204, %180 : vector<8x128xf32>
    %214 = arith.mulf %198, %206 : vector<8x128xf32>
    %215 = arith.addf %213, %214 : vector<8x128xf32>
    %216 = math.tanh %215 : vector<8x128xf32>
    %217 = arith.mulf %212, %216 : vector<8x128xf32>
    %218 = arith.index_cast %c5_i32 : i32 to index
    %c0_55 = arith.constant 0 : index
    %c0_56 = arith.constant 0 : index
    %219 = vector.load %arg6[%218, %c0_55, %c0_56] : memref<8x8x128xf32, #tpu.memory_space<vmem>>, vector<1x8x128xf32>
    %220 = vector.shape_cast %219 : vector<1x8x128xf32> to vector<8x128xf32>
    %221 = vector.shape_cast %217 : vector<8x128xf32> to vector<1x8x128xf32>
    tpu.vector_store %arg6[%218, %c0_55, %c0_56], %221 {strides = array<i32>} : memref<8x8x128xf32, #tpu.memory_space<vmem>>, vector<1x8x128xf32>,
    %c6_i32 = arith.constant 6 : i32
    %c8_i32_57 = arith.constant 8 : i32
    %222 = arith.muli %c6_i32, %c8_i32_57 : i32
    %223 = tpu.assume_multiple %222, 8 : i32
    %224 = arith.index_cast %223 : i32 to index
    %c0_58 = arith.constant 0 : index
    %225 = vector.load %arg9[%224, %c0_58] : memref<64x512xf32, #tpu.memory_space<vmem>>, vector<8x512xf32>
    %cst_59 = arith.constant dense<0.000000e+00> : vector<8x512xf32>
    %226 = tpu.matmul %217, %9, %cst_59 {dimension_numbers = #tpu.dot_dimension_numbers<[1], [0], [0], [1], [0, 0, 1, 1], [], []>} : vector<8x128xf32>, vector<128x512xf32>, vector<8x512xf32> -> vector<8x512xf32>
    %227 = arith.addf %225, %226 : vector<8x512xf32>
    %228 = vector.extract_strided_slice %227 {offsets = [0, 0], sizes = [8, 128], strides = [1, 1]} : vector<8x512xf32> to vector<8x128xf32>
    %229 = arith.negf %228 : vector<8x128xf32>
    %230 = math.exp %229 : vector<8x128xf32>
    %cst_60 = arith.constant 1.000000e+00 : f32
    %231 = vector.broadcast %cst_60 : f32 to vector<8x128xf32>
    %232 = arith.addf %231, %230 : vector<8x128xf32>
    %233 = arith.divf %231, %232 : vector<8x128xf32>
    %234 = vector.extract_strided_slice %227 {offsets = [0, 128], sizes = [8, 128], strides = [1, 1]} : vector<8x512xf32> to vector<8x128xf32>
    %235 = arith.negf %234 : vector<8x128xf32>
    %236 = math.exp %235 : vector<8x128xf32>
    %cst_61 = arith.constant 1.000000e+00 : f32
    %237 = vector.broadcast %cst_61 : f32 to vector<8x128xf32>
    %238 = arith.addf %237, %236 : vector<8x128xf32>
    %239 = arith.divf %237, %238 : vector<8x128xf32>
    %240 = vector.extract_strided_slice %227 {offsets = [0, 256], sizes = [8, 128], strides = [1, 1]} : vector<8x512xf32> to vector<8x128xf32>
    %241 = math.tanh %240 : vector<8x128xf32>
    %242 = vector.extract_strided_slice %227 {offsets = [0, 384], sizes = [8, 128], strides = [1, 1]} : vector<8x512xf32> to vector<8x128xf32>
    %243 = arith.negf %242 : vector<8x128xf32>
    %244 = math.exp %243 : vector<8x128xf32>
    %cst_62 = arith.constant 1.000000e+00 : f32
    %245 = vector.broadcast %cst_62 : f32 to vector<8x128xf32>
    %246 = arith.addf %245, %244 : vector<8x128xf32>
    %247 = arith.divf %245, %246 : vector<8x128xf32>
    %248 = arith.mulf %239, %215 : vector<8x128xf32>
    %249 = arith.mulf %233, %241 : vector<8x128xf32>
    %250 = arith.addf %248, %249 : vector<8x128xf32>
    %251 = math.tanh %250 : vector<8x128xf32>
    %252 = arith.mulf %247, %251 : vector<8x128xf32>
    %253 = arith.index_cast %c6_i32 : i32 to index
    %c0_63 = arith.constant 0 : index
    %c0_64 = arith.constant 0 : index
    %254 = vector.load %arg6[%253, %c0_63, %c0_64] : memref<8x8x128xf32, #tpu.memory_space<vmem>>, vector<1x8x128xf32>
    %255 = vector.shape_cast %254 : vector<1x8x128xf32> to vector<8x128xf32>
    %256 = vector.shape_cast %252 : vector<8x128xf32> to vector<1x8x128xf32>
    tpu.vector_store %arg6[%253, %c0_63, %c0_64], %256 {strides = array<i32>} : memref<8x8x128xf32, #tpu.memory_space<vmem>>, vector<1x8x128xf32>,
    %c7_i32 = arith.constant 7 : i32
    %c8_i32_65 = arith.constant 8 : i32
    %257 = arith.muli %c7_i32, %c8_i32_65 : i32
    %258 = tpu.assume_multiple %257, 8 : i32
    %259 = arith.index_cast %258 : i32 to index
    %c0_66 = arith.constant 0 : index
    %260 = vector.load %arg9[%259, %c0_66] : memref<64x512xf32, #tpu.memory_space<vmem>>, vector<8x512xf32>
    %cst_67 = arith.constant dense<0.000000e+00> : vector<8x512xf32>
    %261 = tpu.matmul %252, %9, %cst_67 {dimension_numbers = #tpu.dot_dimension_numbers<[1], [0], [0], [1], [0, 0, 1, 1], [], []>} : vector<8x128xf32>, vector<128x512xf32>, vector<8x512xf32> -> vector<8x512xf32>
    %262 = arith.addf %260, %261 : vector<8x512xf32>
    %263 = vector.extract_strided_slice %262 {offsets = [0, 0], sizes = [8, 128], strides = [1, 1]} : vector<8x512xf32> to vector<8x128xf32>
    %264 = arith.negf %263 : vector<8x128xf32>
    %265 = math.exp %264 : vector<8x128xf32>
    %cst_68 = arith.constant 1.000000e+00 : f32
    %266 = vector.broadcast %cst_68 : f32 to vector<8x128xf32>
    %267 = arith.addf %266, %265 : vector<8x128xf32>
    %268 = arith.divf %266, %267 : vector<8x128xf32>
    %269 = vector.extract_strided_slice %262 {offsets = [0, 128], sizes = [8, 128], strides = [1, 1]} : vector<8x512xf32> to vector<8x128xf32>
    %270 = arith.negf %269 : vector<8x128xf32>
    %271 = math.exp %270 : vector<8x128xf32>
    %cst_69 = arith.constant 1.000000e+00 : f32
    %272 = vector.broadcast %cst_69 : f32 to vector<8x128xf32>
    %273 = arith.addf %272, %271 : vector<8x128xf32>
    %274 = arith.divf %272, %273 : vector<8x128xf32>
    %275 = vector.extract_strided_slice %262 {offsets = [0, 256], sizes = [8, 128], strides = [1, 1]} : vector<8x512xf32> to vector<8x128xf32>
    %276 = math.tanh %275 : vector<8x128xf32>
    %277 = vector.extract_strided_slice %262 {offsets = [0, 384], sizes = [8, 128], strides = [1, 1]} : vector<8x512xf32> to vector<8x128xf32>
    %278 = arith.negf %277 : vector<8x128xf32>
    %279 = math.exp %278 : vector<8x128xf32>
    %cst_70 = arith.constant 1.000000e+00 : f32
    %280 = vector.broadcast %cst_70 : f32 to vector<8x128xf32>
    %281 = arith.addf %280, %279 : vector<8x128xf32>
    %282 = arith.divf %280, %281 : vector<8x128xf32>
    %283 = arith.mulf %274, %250 : vector<8x128xf32>
    %284 = arith.mulf %268, %276 : vector<8x128xf32>
    %285 = arith.addf %283, %284 : vector<8x128xf32>
    %286 = math.tanh %285 : vector<8x128xf32>
    %287 = arith.mulf %282, %286 : vector<8x128xf32>
    %288 = arith.index_cast %c7_i32 : i32 to index
    %c0_71 = arith.constant 0 : index
    %c0_72 = arith.constant 0 : index
    %289 = vector.load %arg6[%288, %c0_71, %c0_72] : memref<8x8x128xf32, #tpu.memory_space<vmem>>, vector<1x8x128xf32>
    %290 = vector.shape_cast %289 : vector<1x8x128xf32> to vector<8x128xf32>
    %291 = vector.shape_cast %287 : vector<8x128xf32> to vector<1x8x128xf32>
    tpu.vector_store %arg6[%288, %c0_71, %c0_72], %291 {strides = array<i32>} : memref<8x8x128xf32, #tpu.memory_space<vmem>>, vector<1x8x128xf32>,
    %c8_i32_73 = arith.constant 8 : i32
    %c0_74 = arith.constant 0 : index
    %c0_75 = arith.constant 0 : index
    %c0_76 = arith.constant 0 : index
    %292 = vector.load %arg7[%c0_74, %c0_75, %c0_76] : memref<1x8x128xf32, #tpu.memory_space<vmem>>, vector<1x8x128xf32>
    %293 = vector.shape_cast %292 : vector<1x8x128xf32> to vector<8x128xf32>
    %294 = vector.shape_cast %287 : vector<8x128xf32> to vector<1x8x128xf32>
    tpu.vector_store %arg7[%c0_74, %c0_75, %c0_76], %294 {strides = array<i32>} : memref<1x8x128xf32, #tpu.memory_space<vmem>>, vector<1x8x128xf32>,
    %c0_77 = arith.constant 0 : index
    %c0_78 = arith.constant 0 : index
    %c0_79 = arith.constant 0 : index
    %295 = vector.load %arg8[%c0_77, %c0_78, %c0_79] : memref<1x8x128xf32, #tpu.memory_space<vmem>>, vector<1x8x128xf32>
    %296 = vector.shape_cast %295 : vector<1x8x128xf32> to vector<8x128xf32>
    %297 = vector.shape_cast %285 : vector<8x128xf32> to vector<1x8x128xf32>
    tpu.vector_store %arg8[%c0_77, %c0_78, %c0_79], %297 {strides = array<i32>} : memref<1x8x128xf32, #tpu.memory_space<vmem>>, vector<1x8x128xf32>,
    return
  }
  func.func @transform_0(%arg0: i32) -> (i32, i32, i32) {
    %c0_i32 = arith.constant 0 : i32
    %c0_i32_0 = arith.constant 0 : i32
    %c0_i32_1 = arith.constant 0 : i32
    %c0_i32_2 = arith.constant 0 : i32
    return %c0_i32, %c0_i32_0, %c0_i32_1 : i32, i32, i32
  }
  func.func @transform_1(%arg0: i32) -> (i32, i32) {
    %c0_i32 = arith.constant 0 : i32
    %c0_i32_0 = arith.constant 0 : i32
    %c0_i32_1 = arith.constant 0 : i32
    return %c0_i32, %c0_i32_0 : i32, i32
  }
  func.func @transform_2(%arg0: i32) -> (i32, i32, i32) {
    %c0_i32 = arith.constant 0 : i32
    %c0_i32_0 = arith.constant 0 : i32
    %c0_i32_1 = arith.constant 0 : i32
    return %arg0, %c0_i32, %c0_i32_0 : i32, i32, i32
  }
  func.func @transform_3(%arg0: i32) -> (i32, i32, i32) {
    %c0_i32 = arith.constant 0 : i32
    %c0_i32_0 = arith.constant 0 : i32
    %c0_i32_1 = arith.constant 0 : i32
    return %arg0, %c0_i32, %c0_i32_0 : i32, i32, i32
  }
  func.func @transform_4(%arg0: i32) -> (i32, i32, i32) {
    %c0_i32 = arith.constant 0 : i32
    %c0_i32_0 = arith.constant 0 : i32
    %c0_i32_1 = arith.constant 0 : i32
    return %arg0, %c0_i32, %c0_i32_0 : i32, i32, i32
  }
  func.func @transform_5(%arg0: i32) -> (i32, i32, i32) {
    %c0_i32 = arith.constant 0 : i32
    %c0_i32_0 = arith.constant 0 : i32
    %c0_i32_1 = arith.constant 0 : i32
    %c0_i32_2 = arith.constant 0 : i32
    return %c0_i32, %c0_i32_0, %c0_i32_1 : i32, i32, i32
  }
  func.func @transform_6(%arg0: i32) -> (i32, i32, i32) {
    %c0_i32 = arith.constant 0 : i32
    %c0_i32_0 = arith.constant 0 : i32
    %c0_i32_1 = arith.constant 0 : i32
    return %arg0, %c0_i32, %c0_i32_0 : i32, i32, i32
  }
  func.func @transform_7(%arg0: i32) -> (i32, i32, i32) {
    %c0_i32 = arith.constant 0 : i32
    %c0_i32_0 = arith.constant 0 : i32
    %c0_i32_1 = arith.constant 0 : i32
    return %arg0, %c0_i32, %c0_i32_0 : i32, i32, i32
  }
}

</mosaic_0001>

<llo_original>
// kernel: tpu_custom_call.1
$region0: #{tpu_custom_call.1}
  #allocation0 [shape = 'u32[]', space=smem, size = 0x4, offset = 0x4, fixed_abs, tag = 'smem constant byte address 0x4 - core index']
  #allocation1 [shape = 'u32[144,128]{1,0:T(1,128)}', space=vmem, size = 0x12000, scoped, tag = 'internal scratch']
  #allocation2 [shape = 'f32[64,512]{1,0:T(8,128)}', space=vmem, size = 0x20000, scoped, tag = 'scratch operand']
  %s0 = inlined_call_operand.hbm [shape: f32[8,8,128], index: 0, kind: input, shape index: {}]
  %s1 = inlined_call_operand.hbm [shape: f32[128,512], index: 1, kind: input, shape index: {}]
  %s2 = inlined_call_operand.hbm [shape: f32[2,128,512], index: 2, kind: input, shape index: {}]
  %s3 = inlined_call_operand.hbm [shape: f32[2,128,512], index: 3, kind: input, shape index: {}]
  %s4 = inlined_call_operand.vmem [shape: f32[2,1,512], index: 4, kind: input, shape index: {}]
  %s5 = inlined_call_operand.hbm [shape: f32[8,8,128], index: 5, kind: output, shape index: {0}]
  %s6 = inlined_call_operand.hbm [shape: f32[2,8,128], index: 6, kind: output, shape index: {1}]
  %s7 = inlined_call_operand.hbm [shape: f32[2,8,128], index: 7, kind: output, shape index: {2}]
  %8 = xla_tuple %s5, %s6, %s7
  %s9 = sld [smem:[#allocation0]]
  $region93: #{tpu_custom_call.1} parent=0
    _
  %s11 = ssub.s32 1, %s9
  %s12 = scalar_select 0, %s11, %s9
  $region1: #{tpu_custom_call.1} parent=0
    #allocation3 [shape = 'u8[32768]{0}', space=vmem, size = 0x8000, scoped, tag = 'input window, operand 0, single buffered']
    #allocation4 [shape = 's32[2]{0}', space=sflag, size = 0x8, scoped, tag = 'scoped memory for tpu_custom_call.1']
    #allocation5 [shape = 's32[2]{0}', space=sflag, size = 0x8, scoped, tag = 'scoped memory for tpu_custom_call.1']
    #allocation6 [shape = 'u8[262144]{0}', space=vmem, size = 0x40000, scoped, tag = 'input window, operand 1, single buffered']
    #allocation7 [shape = 's32[1]{0}', space=sflag, size = 0x4, scoped, tag = 'scoped memory for tpu_custom_call.1']
    #allocation8 [shape = 'u8[524288]{0}', space=vmem, size = 0x80000, scoped, tag = 'input window, operand 2']
    #allocation9 [shape = 'u8[524288]{0}', space=vmem, size = 0x80000, scoped, tag = 'input window, operand 3']
    #allocation10 [shape = 'u8[32768]{0}', space=vmem, size = 0x8000, scoped, tag = 'output window, operand 0, single buffered']
    #allocation11 [shape = 'u8[8192]{0}', space=vmem, size = 0x2000, scoped, tag = 'output window, operand 1']
    #allocation12 [shape = 's32[2]{0}', space=sflag, size = 0x8, scoped, tag = 'scoped memory for tpu_custom_call.1']
    #allocation13 [shape = 'u8[8192]{0}', space=vmem, size = 0x2000, scoped, tag = 'output window, operand 2']
    %13 = vsyncpa [#allocation4], 0
    %14 = vsyncpa [#allocation7], 0
    %15 = vsyncpa [#allocation5], 0
    %16 = vsyncpa [#allocation12], 0
    %s17 = scalar_lea.sflag [#allocation12], 1
    %18 = vsyncpa %s17, 0
    loop: start=0, step=1, limit=4
    $region2: #{tpu_custom_call.1} parent=1 // loop_pre_header
      _
    $region3: #{tpu_custom_call.1} parent=1 // loop_header
      %s20 = sphi 0, %s24
      %p21 = scmp.ge.s32.totalorder %s20, 4
      %s28 = sphi 0, %s28
      %s30 = sphi 0, %s28
      %s31 = sphi 0, %s30
      %s45 = sphi 0, %s31
      %s49 = sphi 0, %s49
      %s51 = sphi 0, %s49
      %s52 = sphi 0, %s51
      %s66 = sphi 0, %s52
      %s72 = sphi 0, %s74
      %s75 = sphi 0, %s72
      %s76 = sphi 0, %s75
      %s92 = sphi 0, %s76
      %s98 = sphi 0, %s100
      %s101 = sphi 0, %s98
      %s102 = sphi 0, %s101
      %s118 = sphi 0, %s102
      %s124 = sphi 0, %s126
      %s127 = sphi 0, %s124
      %s128 = sphi 0, %s127
      %s144 = sphi 0, %s128
      %s148 = sphi 0, %s148
      %s150 = sphi 0, %s148
      %s151 = sphi 0, %s150
      %s165 = sphi 0, %s151
      %s171 = sphi 0, %s173
      %s174 = sphi 0, %s171
      %s175 = sphi 0, %s174
      %s191 = sphi 0, %s175
      %s197 = sphi 0, %s199
      %s200 = sphi 0, %s197
      %s201 = sphi 0, %s200
      %s217 = sphi 0, %s201
    $region4: #{tpu_custom_call.1} parent=1 // loop_header_branch
      %23 = sbr.rel (%p21) target = $region8
    $region5: #{tpu_custom_call.1} parent=1 // loop_body
      %s25 = ssub.s32 %s20, 1
      %s26 = ssub.s32 %s20, 2
      %s27 = sadd.s32 %s20, 1
      %s29 = sadd.s32 %s28, 1
      %p32 = scmp.eq.s32.totalorder %s20, 1
      %p33 = scmp.ne.s32.totalorder %s28, %s30
      %p34 = scmp.eq.s32.totalorder %s20, 0
      %p35 = por %p33, %p34
      %p36 = scmp.ne.s32.totalorder %s28, %s30
      %p37 = scmp.eq.s32.totalorder %s25, 1
      %p38 = por %p36, %p37
      %p39 = scmp.ne.s32.totalorder %s30, %s31
      %p40 = scmp.eq.s32.totalorder %s25, 0
      %p41 = por %p39, %p40
      %p42 = scmp.ne.s32.totalorder %s30, %s31
      %p43 = scmp.eq.s32.totalorder %s26, 1
      %p44 = por %p42, %p43
      %p46 = scmp.ne.s32.totalorder %s31, %s45
      %p47 = scmp.eq.s32.totalorder %s26, 0
      %p48 = por %p46, %p47
      %s50 = sadd.s32 %s49, 1
      %p53 = scmp.eq.s32.totalorder %s20, 1
      %p54 = scmp.ne.s32.totalorder %s49, %s51
      %p55 = scmp.eq.s32.totalorder %s20, 0
      %p56 = por %p54, %p55
      %p57 = scmp.ne.s32.totalorder %s49, %s51
      %p58 = scmp.eq.s32.totalorder %s25, 1
      %p59 = por %p57, %p58
      %p60 = scmp.ne.s32.totalorder %s51, %s52
      %p61 = scmp.eq.s32.totalorder %s25, 0
      %p62 = por %p60, %p61
      %p63 = scmp.ne.s32.totalorder %s51, %s52
      %p64 = scmp.eq.s32.totalorder %s26, 1
      %p65 = por %p63, %p64
      %p67 = scmp.ne.s32.totalorder %s52, %s66
      %p68 = scmp.eq.s32.totalorder %s26, 0
      %p69 = por %p67, %p68
      %s70 = ssub.s32 %s20, %s27
      %p71 = scmp.eq.s32.totalorder %s70, 0
      %s73 = sadd.s32 %s72, 1
      %s74 = scalar_select %p71, %s72, %s73
      %p77 = pneg %p71
      %p78 = scmp.eq.s32.totalorder %s20, 1
      %p79 = por %p77, %p78
      %p80 = scmp.ne.s32.totalorder %s72, %s75
      %p81 = scmp.eq.s32.totalorder %s20, 0
      %p82 = por %p80, %p81
      %p83 = scmp.ne.s32.totalorder %s72, %s75
      %p84 = scmp.eq.s32.totalorder %s25, 1
      %p85 = por %p83, %p84
      %p86 = scmp.ne.s32.totalorder %s75, %s76
      %p87 = scmp.eq.s32.totalorder %s25, 0
      %p88 = por %p86, %p87
      %p89 = scmp.ne.s32.totalorder %s75, %s76
      %p90 = scmp.eq.s32.totalorder %s26, 1
      %p91 = por %p89, %p90
      %p93 = scmp.ne.s32.totalorder %s76, %s92
      %p94 = scmp.eq.s32.totalorder %s26, 0
      %p95 = por %p93, %p94
      %s96 = ssub.s32 %s20, %s27
      %p97 = scmp.eq.s32.totalorder %s96, 0
      %s99 = sadd.s32 %s98, 1
      %s100 = scalar_select %p97, %s98, %s99
      %p103 = pneg %p97
      %p104 = scmp.eq.s32.totalorder %s20, 1
      %p105 = por %p103, %p104
      %p106 = scmp.ne.s32.totalorder %s98, %s101
      %p107 = scmp.eq.s32.totalorder %s20, 0
      %p108 = por %p106, %p107
      %p109 = scmp.ne.s32.totalorder %s98, %s101
      %p110 = scmp.eq.s32.totalorder %s25, 1
      %p111 = por %p109, %p110
      %p112 = scmp.ne.s32.totalorder %s101, %s102
      %p113 = scmp.eq.s32.totalorder %s25, 0
      %p114 = por %p112, %p113
      %p115 = scmp.ne.s32.totalorder %s101, %s102
      %p116 = scmp.eq.s32.totalorder %s26, 1
      %p117 = por %p115, %p116
      %p119 = scmp.ne.s32.totalorder %s102, %s118
      %p120 = scmp.eq.s32.totalorder %s26, 0
      %p121 = por %p119, %p120
      %s122 = ssub.s32 %s20, %s27
      %p123 = scmp.eq.s32.totalorder %s122, 0
      %s125 = sadd.s32 %s124, 1
      %s126 = scalar_select %p123, %s124, %s125
      %p129 = pneg %p123
      %p130 = scmp.eq.s32.totalorder %s20, 1
      %p131 = por %p129, %p130
      %p132 = scmp.ne.s32.totalorder %s124, %s127
      %p133 = scmp.eq.s32.totalorder %s20, 0
      %p134 = por %p132, %p133
      %p135 = scmp.ne.s32.totalorder %s124, %s127
      %p136 = scmp.eq.s32.totalorder %s25, 1
      %p137 = por %p135, %p136
      %p138 = scmp.ne.s32.totalorder %s127, %s128
      %p139 = scmp.eq.s32.totalorder %s25, 0
      %p140 = por %p138, %p139
      %p141 = scmp.ne.s32.totalorder %s127, %s128
      %p142 = scmp.eq.s32.totalorder %s26, 1
      %p143 = por %p141, %p142
      %p145 = scmp.ne.s32.totalorder %s128, %s144
      %p146 = scmp.eq.s32.totalorder %s26, 0
      %p147 = por %p145, %p146
      %s149 = sadd.s32 %s148, 1
      %p152 = scmp.eq.s32.totalorder %s20, 1
      %p153 = scmp.ne.s32.totalorder %s148, %s150
      %p154 = scmp.eq.s32.totalorder %s20, 0
      %p155 = por %p153, %p154
      %p156 = scmp.ne.s32.totalorder %s148, %s150
      %p157 = scmp.eq.s32.totalorder %s25, 1
      %p158 = por %p156, %p157
      %p159 = scmp.ne.s32.totalorder %s150, %s151
      %p160 = scmp.eq.s32.totalorder %s25, 0
      %p161 = por %p159, %p160
      %p162 = scmp.ne.s32.totalorder %s150, %s151
      %p163 = scmp.eq.s32.totalorder %s26, 1
      %p164 = por %p162, %p163
      %p166 = scmp.ne.s32.totalorder %s151, %s165
      %p167 = scmp.eq.s32.totalorder %s26, 0
      %p168 = por %p166, %p167
      %s169 = ssub.s32 %s20, %s27
      %p170 = scmp.eq.s32.totalorder %s169, 0
      %s172 = sadd.s32 %s171, 1
      %s173 = scalar_select %p170, %s171, %s172
      %p176 = pneg %p170
      %p177 = scmp.eq.s32.totalorder %s20, 1
      %p178 = por %p176, %p177
      %p179 = scmp.ne.s32.totalorder %s171, %s174
      %p180 = scmp.eq.s32.totalorder %s20, 0
      %p181 = por %p179, %p180
      %p182 = scmp.ne.s32.totalorder %s171, %s174
      %p183 = scmp.eq.s32.totalorder %s25, 1
      %p184 = por %p182, %p183
      %p185 = scmp.ne.s32.totalorder %s174, %s175
      %p186 = scmp.eq.s32.totalorder %s25, 0
      %p187 = por %p185, %p186
      %p188 = scmp.ne.s32.totalorder %s174, %s175
      %p189 = scmp.eq.s32.totalorder %s26, 1
      %p190 = por %p188, %p189
      %p192 = scmp.ne.s32.totalorder %s175, %s191
      %p193 = scmp.eq.s32.totalorder %s26, 0
      %p194 = por %p192, %p193
      %s195 = ssub.s32 %s20, %s27
      %p196 = scmp.eq.s32.totalorder %s195, 0
      %s198 = sadd.s32 %s197, 1
      %s199 = scalar_select %p196, %s197, %s198
      %p202 = pneg %p196
      %p203 = scmp.eq.s32.totalorder %s20, 1
      %p204 = por %p202, %p203
      %p205 = scmp.ne.s32.totalorder %s197, %s200
      %p206 = scmp.eq.s32.totalorder %s20, 0
      %p207 = por %p205, %p206
      %p208 = scmp.ne.s32.totalorder %s197, %s200
      %p209 = scmp.eq.s32.totalorder %s25, 1
      %p210 = por %p208, %p209
      %p211 = scmp.ne.s32.totalorder %s200, %s201
      %p212 = scmp.eq.s32.totalorder %s25, 0
      %p213 = por %p211, %p212
      %p214 = scmp.ne.s32.totalorder %s200, %s201
      %p215 = scmp.eq.s32.totalorder %s26, 1
      %p216 = por %p214, %p215
      %p218 = scmp.ne.s32.totalorder %s201, %s217
      %p219 = scmp.eq.s32.totalorder %s26, 0
      %p220 = por %p218, %p219
      %p221 = scmp.le.s32.totalorder 1, %s20
      %p222 = scmp.lt.s32.totalorder %s20, 3
      %p223 = pnand %p221, %p222
      %p224 = pneg %p223
      // Predicated region
      $region9: #{tpu_custom_call.1} parent=5 // pred_check
        _
      $region10: #{tpu_custom_call.1} parent=5 // pred_check_branch
        %226 = sbr.rel (%p223) target = $region12
      $region11: #{tpu_custom_call.1} parent=5 // pred_region
        %s227 = ssub.s32 %s20, 1
        // Predicated region
        $region13: #{tpu_custom_call.1} parent=11 // pred_check
          %p228 = pneg %p41
        $region14: #{tpu_custom_call.1} parent=11 // pred_check_branch
          %230 = sbr.rel (%p228) target = $region16
        $region15: #{tpu_custom_call.1} parent=11 // pred_region
          %s232 = ssub.s32 1024, 1024
          %233 = vsyncadd [#allocation4], %s232
          %s234 = sshll.u32 [#allocation3], 4
          %s235 = int_to_ptr.vmem [resolvable:$true] %s234
          %240 = dma.hbm_to_vmem [thread:$0]  %s0, 1024, %s235, [#allocation4], 128, 128, 8
        $region16: #{tpu_custom_call.1} parent=11 // pred_fallthru
          _
        // Predicated region
        $region17: #{tpu_custom_call.1} parent=11 // pred_check
          %p241 = pneg %p62
        $region18: #{tpu_custom_call.1} parent=11 // pred_check_branch
          %243 = sbr.rel (%p241) target = $region20
        $region19: #{tpu_custom_call.1} parent=11 // pred_region
          %s245 = ssub.s32 8192, 8192
          %246 = vsyncadd [#allocation7], %s245
          %s247 = sshll.u32 [#allocation6], 4
          %s248 = int_to_ptr.vmem [resolvable:$true] %s247
          %253 = dma.hbm_to_vmem [thread:$0]  %s1, 8192, %s248, [#allocation7], 512, 512, 32
        $region20: #{tpu_custom_call.1} parent=11 // pred_fallthru
          _
      $region12: #{tpu_custom_call.1} parent=5 // pred_fallthru
        _
      %p254 = scmp.lt.s32.totalorder %s20, 2
      // Predicated region
      $region21: #{tpu_custom_call.1} parent=5 // pred_check
        %p255 = pneg %p254
      $region22: #{tpu_custom_call.1} parent=5 // pred_check_branch
        %257 = sbr.rel (%p255) target = $region24
      $region23: #{tpu_custom_call.1} parent=5 // pred_region
        // Predicated region
        $region25: #{tpu_custom_call.1} parent=23 // pred_check
          %p258 = pneg %p82
        $region26: #{tpu_custom_call.1} parent=23 // pred_check_branch
          %260 = sbr.rel (%p258) target = $region28
        $region27: #{tpu_custom_call.1} parent=23 // pred_region
          %s261 = sand.u32 %s20, 1
          %s262 = scalar_lea.sflag [#allocation4], %s261
          %s263 = sand.u32 %s72, 1
          %s264 = smul.addr %s263, 512
          %s265 = scalar_lea.vmem [#allocation8], %s264
          %s267 = ssub.s32 8192, 8192
          %268 = vsyncadd %s262, %s267
          %s269 = smul.addr %s20, 64
          %s270 = smul.addr %s269, 128
          %s271 = scalar_lea.hbm %s2, %s270
          %s272 = sshll.u32 %s265, 4
          %s273 = int_to_ptr.vmem [resolvable:$true] %s272
          %278 = dma.hbm_to_vmem [thread:$0]  %s271, 8192, %s273, %s262, 512, 512, 32
        $region28: #{tpu_custom_call.1} parent=23 // pred_fallthru
          _
        // Predicated region
        $region29: #{tpu_custom_call.1} parent=23 // pred_check
          %p279 = pneg %p108
        $region30: #{tpu_custom_call.1} parent=23 // pred_check_branch
          %281 = sbr.rel (%p279) target = $region32
        $region31: #{tpu_custom_call.1} parent=23 // pred_region
          %s282 = sand.u32 %s20, 1
          %s283 = scalar_lea.sflag [#allocation4], %s282
          %s284 = sand.u32 %s98, 1
          %s285 = smul.addr %s284, 512
          %s286 = scalar_lea.vmem [#allocation9], %s285
          %s288 = ssub.s32 8192, 8192
          %289 = vsyncadd %s283, %s288
          %s290 = smul.addr %s20, 64
          %s291 = smul.addr %s290, 128
          %s292 = scalar_lea.hbm %s3, %s291
          %s293 = sshll.u32 %s286, 4
          %s294 = int_to_ptr.vmem [resolvable:$true] %s293
          %299 = dma.hbm_to_vmem [thread:$0]  %s292, 8192, %s294, %s283, 512, 512, 32
        $region32: #{tpu_custom_call.1} parent=23 // pred_fallthru
          _
        // Predicated region
        $region33: #{tpu_custom_call.1} parent=23 // pred_check
          %p300 = pneg %p134
        $region34: #{tpu_custom_call.1} parent=23 // pred_check_branch
          %302 = sbr.rel (%p300) target = $region36
        $region35: #{tpu_custom_call.1} parent=23 // pred_region
          %p303 = scmp.lt.s32.totalorder %s20, 1
          %s304 = scalar_select %p303, %s20, 1
          %s305 = smul.addr %s304, 4
          %s306 = scalar_lea.vmem %s4, %s305
        $region36: #{tpu_custom_call.1} parent=23 // pred_fallthru
          _
      $region24: #{tpu_custom_call.1} parent=5 // pred_fallthru
        _
      %p307 = scmp.le.s32.totalorder 1, %s20
      %p308 = scmp.lt.s32.totalorder %s20, 3
      %p309 = pnand %p307, %p308
      %p310 = pneg %p309
      // Predicated region
      $region37: #{tpu_custom_call.1} parent=5 // pred_check
        _
      $region38: #{tpu_custom_call.1} parent=5 // pred_check_branch
        %312 = sbr.rel (%p309) target = $region40
      $region39: #{tpu_custom_call.1} parent=5 // pred_region
        %s313 = ssub.s32 %s20, 1
        // Predicated region
        $region41: #{tpu_custom_call.1} parent=39 // pred_check
          %p314 = pneg %p41
        $region42: #{tpu_custom_call.1} parent=39 // pred_check_branch
          %316 = sbr.rel (%p314) target = $region44
        $region43: #{tpu_custom_call.1} parent=39 // pred_region
          %317 = dma.done [#allocation4], 1024
        $region44: #{tpu_custom_call.1} parent=39 // pred_fallthru
          _
        // Predicated region
        $region45: #{tpu_custom_call.1} parent=39 // pred_check
          %p318 = pneg %p62
        $region46: #{tpu_custom_call.1} parent=39 // pred_check_branch
          %320 = sbr.rel (%p318) target = $region48
        $region47: #{tpu_custom_call.1} parent=39 // pred_region
          %321 = dma.done [#allocation7], 8192
        $region48: #{tpu_custom_call.1} parent=39 // pred_fallthru
          _
        %s322 = sand.u32 %s25, 1
        %s323 = scalar_lea.sflag [#allocation4], %s322
        %s324 = sand.u32 %s75, 1
        %s325 = smul.addr %s324, 512
        %s326 = scalar_lea.vmem [#allocation8], %s325
        // Predicated region
        $region49: #{tpu_custom_call.1} parent=39 // pred_check
          %p327 = pneg %p88
        $region50: #{tpu_custom_call.1} parent=39 // pred_check_branch
          %329 = sbr.rel (%p327) target = $region52
        $region51: #{tpu_custom_call.1} parent=39 // pred_region
          %330 = dma.done %s323, 8192
        $region52: #{tpu_custom_call.1} parent=39 // pred_fallthru
          _
        %s331 = sand.u32 %s25, 1
        %s332 = scalar_lea.sflag [#allocation4], %s331
        %s333 = sand.u32 %s101, 1
        %s334 = smul.addr %s333, 512
        %s335 = scalar_lea.vmem [#allocation9], %s334
        // Predicated region
        $region53: #{tpu_custom_call.1} parent=39 // pred_check
          %p336 = pneg %p114
        $region54: #{tpu_custom_call.1} parent=39 // pred_check_branch
          %338 = sbr.rel (%p336) target = $region56
        $region55: #{tpu_custom_call.1} parent=39 // pred_region
          %339 = dma.done %s332, 8192
        $region56: #{tpu_custom_call.1} parent=39 // pred_fallthru
          _
        %p340 = pneg %p41
        %p341 = pneg %p38
        %p342 = pneg %p62
        %p343 = pneg %p59
        %s344 = sand.u32 %s25, 1
        %s345 = scalar_lea.sflag [#allocation4], %s344
        %s346 = sand.u32 %s75, 1
        %s347 = smul.addr %s346, 512
        %s348 = scalar_lea.vmem [#allocation8], %s347
        %p349 = pneg %p88
        %p350 = pneg %p85
        %s351 = sand.u32 %s25, 1
        %s352 = scalar_lea.sflag [#allocation4], %s351
        %s353 = sand.u32 %s101, 1
        %s354 = smul.addr %s353, 512
        %s355 = scalar_lea.vmem [#allocation9], %s354
        %p356 = pneg %p114
        %p357 = pneg %p111
        %p358 = scmp.lt.s32.totalorder %s25, 1
        %s359 = scalar_select %p358, %s25, 1
        %s360 = smul.addr %s359, 4
        %s361 = scalar_lea.vmem %s4, %s360
        %p362 = pneg %p140
        %p363 = pneg %p137
        %p364 = pneg %p161
        %p365 = pneg %p158
        %p366 = pneg %p187
        %p367 = pneg %p184
        %s368 = sand.u32 %s25, 1
        %s369 = scalar_lea.sflag [#allocation12], %s368
        %s370 = sand.u32 %s174, 1
        %s371 = smul.addr %s370, 8
        %s372 = scalar_lea.vmem [#allocation11], %s371
        %p373 = pneg %p213
        %p374 = pneg %p210
        %s375 = sand.u32 %s25, 1
        %s376 = scalar_lea.sflag [#allocation12], %s375
        %s377 = sand.u32 %s200, 1
        %s378 = smul.addr %s377, 8
        %s379 = scalar_lea.vmem [#allocation13], %s378
        %p380 = scmp.lt.s32.totalorder %s25, 1
        %s381 = scalar_select %p380, %s25, 1
        %s382 = smul.addr %s381, 4
        %s383 = scalar_lea.vmem %s4, %s382
        %v384 = vld [vmem:[%s383] sm:$0xf]
        %p385 = scmp.eq.s32.totalorder %s25, 0
        // Predicated region
        $region57: #{tpu_custom_call.1} parent=39 // pred_check
          %p386 = pneg %p385
        $region58: #{tpu_custom_call.1} parent=39 // pred_check_branch
          %388 = sbr.rel (%p386) target = $region60
        $region59: #{tpu_custom_call.1} parent=39 // pred_region
          %v389 = vld [vmem:[#allocation3] sm:$0xff]
          %v390 = vld [vmem:[#allocation3 + $0x8] sm:$0xff]
          %v391 = vld [vmem:[#allocation3 + $0x10] sm:$0xff]
          %v392 = vld [vmem:[#allocation3 + $0x18] sm:$0xff]
          %v393 = vld [vmem:[#allocation3 + $0x20] sm:$0xff]
          %v394 = vld [vmem:[#allocation3 + $0x28] sm:$0xff]
          %v395 = vld [vmem:[#allocation3 + $0x30] sm:$0xff]
          %v396 = vld [vmem:[#allocation3 + $0x38] sm:$0xff]
          %v397 = vld [vmem:[#allocation6] sm:$0xff]
          %v398 = vld [vmem:[#allocation6 + $0x8] sm:$0xff]
          %v399 = vld [vmem:[#allocation6 + $0x10] sm:$0xff]
          %v400 = vld [vmem:[#allocation6 + $0x18] sm:$0xff]
          %v401 = vld [vmem:[#allocation6 + $0x20] sm:$0xff]
          %v402 = vld [vmem:[#allocation6 + $0x28] sm:$0xff]
          %v403 = vld [vmem:[#allocation6 + $0x30] sm:$0xff]
          %v404 = vld [vmem:[#allocation6 + $0x38] sm:$0xff]
          %v405 = vld [vmem:[#allocation6 + $0x40] sm:$0xff]
          %v406 = vld [vmem:[#allocation6 + $0x48] sm:$0xff]
          %v407 = vld [vmem:[#allocation6 + $0x50] sm:$0xff]
          %v408 = vld [vmem:[#allocation6 + $0x58] sm:$0xff]
          %v409 = vld [vmem:[#allocation6 + $0x60] sm:$0xff]
          %v410 = vld [vmem:[#allocation6 + $0x68] sm:$0xff]
          %v411 = vld [vmem:[#allocation6 + $0x70] sm:$0xff]
          %v412 = vld [vmem:[#allocation6 + $0x78] sm:$0xff]
          %v413 = vld [vmem:[#allocation6 + $0x80] sm:$0xff]
          %v414 = vld [vmem:[#allocation6 + $0x88] sm:$0xff]
          %v415 = vld [vmem:[#allocation6 + $0x90] sm:$0xff]
          %v416 = vld [vmem:[#allocation6 + $0x98] sm:$0xff]
          %v417 = vld [vmem:[#allocation6 + $0xa0] sm:$0xff]
          %v418 = vld [vmem:[#allocation6 + $0xa8] sm:$0xff]
          %v419 = vld [vmem:[#allocation6 + $0xb0] sm:$0xff]
          %v420 = vld [vmem:[#allocation6 + $0xb8] sm:$0xff]
          %v421 = vld [vmem:[#allocation6 + $0xc0] sm:$0xff]
          %v422 = vld [vmem:[#allocation6 + $0xc8] sm:$0xff]
          %v423 = vld [vmem:[#allocation6 + $0xd0] sm:$0xff]
          %v424 = vld [vmem:[#allocation6 + $0xd8] sm:$0xff]
          %v425 = vld [vmem:[#allocation6 + $0xe0] sm:$0xff]
          %v426 = vld [vmem:[#allocation6 + $0xe8] sm:$0xff]
          %v427 = vld [vmem:[#allocation6 + $0xf0] sm:$0xff]
          %v428 = vld [vmem:[#allocation6 + $0xf8] sm:$0xff]
          %v429 = vld [vmem:[#allocation6 + $0x100] sm:$0xff]
          %v430 = vld [vmem:[#allocation6 + $0x108] sm:$0xff]
          %v431 = vld [vmem:[#allocation6 + $0x110] sm:$0xff]
          %v432 = vld [vmem:[#allocation6 + $0x118] sm:$0xff]
          %v433 = vld [vmem:[#allocation6 + $0x120] sm:$0xff]
          %v434 = vld [vmem:[#allocation6 + $0x128] sm:$0xff]
          %v435 = vld [vmem:[#allocation6 + $0x130] sm:$0xff]
          %v436 = vld [vmem:[#allocation6 + $0x138] sm:$0xff]
          %v437 = vld [vmem:[#allocation6 + $0x140] sm:$0xff]
          %v438 = vld [vmem:[#allocation6 + $0x148] sm:$0xff]
          %v439 = vld [vmem:[#allocation6 + $0x150] sm:$0xff]
          %v440 = vld [vmem:[#allocation6 + $0x158] sm:$0xff]
          %v441 = vld [vmem:[#allocation6 + $0x160] sm:$0xff]
          %v442 = vld [vmem:[#allocation6 + $0x168] sm:$0xff]
          %v443 = vld [vmem:[#allocation6 + $0x170] sm:$0xff]
          %v444 = vld [vmem:[#allocation6 + $0x178] sm:$0xff]
          %v445 = vld [vmem:[#allocation6 + $0x180] sm:$0xff]
          %v446 = vld [vmem:[#allocation6 + $0x188] sm:$0xff]
          %v447 = vld [vmem:[#allocation6 + $0x190] sm:$0xff]
          %v448 = vld [vmem:[#allocation6 + $0x198] sm:$0xff]
          %v449 = vld [vmem:[#allocation6 + $0x1a0] sm:$0xff]
          %v450 = vld [vmem:[#allocation6 + $0x1a8] sm:$0xff]
          %v451 = vld [vmem:[#allocation6 + $0x1b0] sm:$0xff]
          %v452 = vld [vmem:[#allocation6 + $0x1b8] sm:$0xff]
          %v453 = vld [vmem:[#allocation6 + $0x1c0] sm:$0xff]
          %v454 = vld [vmem:[#allocation6 + $0x1c8] sm:$0xff]
          %v455 = vld [vmem:[#allocation6 + $0x1d0] sm:$0xff]
          %v456 = vld [vmem:[#allocation6 + $0x1d8] sm:$0xff]
          %v457 = vld [vmem:[#allocation6 + $0x1e0] sm:$0xff]
          %v458 = vld [vmem:[#allocation6 + $0x1e8] sm:$0xff]
          %v459 = vld [vmem:[#allocation6 + $0x1f0] sm:$0xff]
          %v460 = vld [vmem:[#allocation6 + $0x1f8] sm:$0xff]
          %v462 = vlaneseq
          %v463 = vshrl.u32 %v462, 7
          %v464 = vsub.s32 0, %v463
          %v465 = vrot.slane %v384, %v464
          %v466 = vlaneseq
          %v467 = vshrl.u32 %v466, 7
          %v468 = vsub.s32 1, %v467
          %v469 = vrot.slane %v384, %v468
          %v470 = vlaneseq
          %v471 = vshrl.u32 %v470, 7
          %v472 = vsub.s32 2, %v471
          %v473 = vrot.slane %v384, %v472
          %v474 = vlaneseq
          %v475 = vshrl.u32 %v474, 7
          %v476 = vsub.s32 3, %v475
          %v477 = vrot.slane %v384, %v476
          %482 = vmatprep.subr.mxu0 %v398
          %483 = vmatpush1.msra.mxu0 %v397
          %484 = vmatprep.subr.mxu0 %v402
          %485 = vmatpush1.msra.mxu0 %v401
          %486 = vmatprep.subr.mxu0 %v406
          %487 = vmatpush1.msra.mxu0 %v405
          %488 = vmatprep.subr.mxu0 %v410
          %489 = vmatpush1.msra.mxu0 %v409
          %490 = vmatprep.subr.mxu0 %v414
          %491 = vmatpush1.msra.mxu0 %v413
          %492 = vmatprep.subr.mxu0 %v418
          %493 = vmatpush1.msra.mxu0 %v417
          %494 = vmatprep.subr.mxu0 %v422
          %495 = vmatpush1.msra.mxu0 %v421
          %496 = vmatprep.subr.mxu0 %v426
          %497 = vmatpush1.msra.mxu0 %v425
          %498 = vmatprep.subr.mxu0 %v430
          %499 = vmatpush1.msra.mxu0 %v429
          %500 = vmatprep.subr.mxu0 %v434
          %501 = vmatpush1.msra.mxu0 %v433
          %502 = vmatprep.subr.mxu0 %v438
          %503 = vmatpush1.msra.mxu0 %v437
          %504 = vmatprep.subr.mxu0 %v442
          %505 = vmatpush1.msra.mxu0 %v441
          %506 = vmatprep.subr.mxu0 %v446
          %507 = vmatpush1.msra.mxu0 %v445
          %508 = vmatprep.subr.mxu0 %v450
          %509 = vmatpush1.msra.mxu0 %v449
          %510 = vmatprep.subr.mxu0 %v454
          %511 = vmatpush1.msra.mxu0 %v453
          %512 = vmatprep.subr.mxu0 %v458
          %513 = vmatpush1.msra.mxu0 %v457
          %514 = vmatprep.subr.mxu0 0.0
          %515 = vmatpush1.msra.mxu0 0.0
          %516 = vmatprep.subr.mxu0 0.0
          %517 = vmatpush1.msra.mxu0 0.0
          %518 = vmatprep.subr.mxu0 0.0
          %519 = vmatpush1.msra.mxu0 0.0
          %520 = vmatprep.subr.mxu0 0.0
          %521 = vmatpush1.msra.mxu0 0.0
          %522 = vmatprep.subr.mxu0 0.0
          %523 = vmatpush1.msra.mxu0 0.0
          %524 = vmatprep.subr.mxu0 0.0
          %525 = vmatpush1.msra.mxu0 0.0
          %526 = vmatprep.subr.mxu0 0.0
          %527 = vmatpush1.msra.mxu0 0.0
          %528 = vmatprep.subr.mxu0 0.0
          %529 = vmatpush1.msra.mxu0 0.0
          %530 = vmatprep.subr.mxu0 0.0
          %531 = vmatpush1.msra.mxu0 0.0
          %532 = vmatprep.subr.mxu0 0.0
          %533 = vmatpush1.msra.mxu0 0.0
          %534 = vmatprep.subr.mxu0 0.0
          %535 = vmatpush1.msra.mxu0 0.0
          %536 = vmatprep.subr.mxu0 0.0
          %537 = vmatpush1.msra.mxu0 0.0
          %538 = vmatprep.subr.mxu0 0.0
          %539 = vmatpush1.msra.mxu0 0.0
          %540 = vmatprep.subr.mxu0 0.0
          %541 = vmatpush1.msra.mxu0 0.0
          %542 = vmatprep.subr.mxu0 0.0
          %543 = vmatpush1.msra.mxu0 0.0
          %544 = vmatprep.subr.mxu0 0.0
          %545 = vmatpush1.msra.mxu0 0.0
          %546 = vmatprep.mubr.f32.mxu0 0.0
          %547 = vmatmul.mubr.f32.gmra.mrb[0].mxu0 %v389
          %v548 = vpop.f32.mrb[0].mxu0
          %v549 = vadd.f32 %v465, %v548
          %v550 = vpop.f32.mrb[0].mxu0
          %v551 = vadd.f32 %v469, %v550
          %552 = vmatprep.mubr.f32.mxu0 0.0
          %553 = vmatmul.mubr.f32.gmra.mrb[0].mxu0 %v390
          %v554 = vpop.f32.mrb[0].mxu0
          %v555 = vadd.f32 %v465, %v554
          %v556 = vpop.f32.mrb[0].mxu0
          %v557 = vadd.f32 %v469, %v556
          %558 = vmatprep.mubr.f32.mxu0 0.0
          %559 = vmatmul.mubr.f32.gmra.mrb[0].mxu0 %v391
          %v560 = vpop.f32.mrb[0].mxu0
          %v561 = vadd.f32 %v465, %v560
          %v562 = vpop.f32.mrb[0].mxu0
          %v563 = vadd.f32 %v469, %v562
          %564 = vmatprep.mubr.f32.mxu0 0.0
          %565 = vmatmul.mubr.f32.gmra.mrb[0].mxu0 %v392
          %v566 = vpop.f32.mrb[0].mxu0
          %v567 = vadd.f32 %v465, %v566
          %v568 = vpop.f32.mrb[0].mxu0
          %v569 = vadd.f32 %v469, %v568
          %570 = vmatprep.mubr.f32.mxu0 0.0
          %571 = vmatmul.mubr.f32.gmra.mrb[0].mxu0 %v393
          %v572 = vpop.f32.mrb[0].mxu0
          %v573 = vadd.f32 %v465, %v572
          %v574 = vpop.f32.mrb[0].mxu0
          %v575 = vadd.f32 %v469, %v574
          %576 = vmatprep.mubr.f32.mxu0 0.0
          %577 = vmatmul.mubr.f32.gmra.mrb[0].mxu0 %v394
          %v578 = vpop.f32.mrb[0].mxu0
          %v579 = vadd.f32 %v465, %v578
          %v580 = vpop.f32.mrb[0].mxu0
          %v581 = vadd.f32 %v469, %v580
          %582 = vmatprep.mubr.f32.mxu0 0.0
          %583 = vmatmul.mubr.f32.gmra.mrb[0].mxu0 %v395
          %v584 = vpop.f32.mrb[0].mxu0
          %v585 = vadd.f32 %v465, %v584
          %v586 = vpop.f32.mrb[0].mxu0
          %v587 = vadd.f32 %v469, %v586
          %588 = vmatprep.mubr.f32.mxu0 0.0
          %589 = vmatmul.mubr.f32.gmra.mrb[0].mxu0 %v396
          %v590 = vpop.f32.mrb[0].mxu0
          %v591 = vadd.f32 %v465, %v590
          %v592 = vpop.f32.mrb[0].mxu0
          %v593 = vadd.f32 %v469, %v592
          %594 = vdwg.mxu0
          %595 = vmatprep.subr.mxu0 %v400
          %596 = vmatpush1.msra.mxu0 %v399
          %597 = vmatprep.subr.mxu0 %v404
          %598 = vmatpush1.msra.mxu0 %v403
          %599 = vmatprep.subr.mxu0 %v408
          %600 = vmatpush1.msra.mxu0 %v407
          %601 = vmatprep.subr.mxu0 %v412
          %602 = vmatpush1.msra.mxu0 %v411
          %603 = vmatprep.subr.mxu0 %v416
          %604 = vmatpush1.msra.mxu0 %v415
          %605 = vmatprep.subr.mxu0 %v420
          %606 = vmatpush1.msra.mxu0 %v419
          %607 = vmatprep.subr.mxu0 %v424
          %608 = vmatpush1.msra.mxu0 %v423
          %609 = vmatprep.subr.mxu0 %v428
          %610 = vmatpush1.msra.mxu0 %v427
          %611 = vmatprep.subr.mxu0 %v432
          %612 = vmatpush1.msra.mxu0 %v431
          %613 = vmatprep.subr.mxu0 %v436
          %614 = vmatpush1.msra.mxu0 %v435
          %615 = vmatprep.subr.mxu0 %v440
          %616 = vmatpush1.msra.mxu0 %v439
          %617 = vmatprep.subr.mxu0 %v444
          %618 = vmatpush1.msra.mxu0 %v443
          %619 = vmatprep.subr.mxu0 %v448
          %620 = vmatpush1.msra.mxu0 %v447
          %621 = vmatprep.subr.mxu0 %v452
          %622 = vmatpush1.msra.mxu0 %v451
          %623 = vmatprep.subr.mxu0 %v456
          %624 = vmatpush1.msra.mxu0 %v455
          %625 = vmatprep.subr.mxu0 %v460
          %626 = vmatpush1.msra.mxu0 %v459
          %627 = vmatprep.subr.mxu0 0.0
          %628 = vmatpush1.msra.mxu0 0.0
          %629 = vmatprep.subr.mxu0 0.0
          %630 = vmatpush1.msra.mxu0 0.0
          %631 = vmatprep.subr.mxu0 0.0
          %632 = vmatpush1.msra.mxu0 0.0
          %633 = vmatprep.subr.mxu0 0.0
          %634 = vmatpush1.msra.mxu0 0.0
          %635 = vmatprep.subr.mxu0 0.0
          %636 = vmatpush1.msra.mxu0 0.0
          %637 = vmatprep.subr.mxu0 0.0
          %638 = vmatpush1.msra.mxu0 0.0
          %639 = vmatprep.subr.mxu0 0.0
          %640 = vmatpush1.msra.mxu0 0.0
          %641 = vmatprep.subr.mxu0 0.0
          %642 = vmatpush1.msra.mxu0 0.0
          %643 = vmatprep.subr.mxu0 0.0
          %644 = vmatpush1.msra.mxu0 0.0
          %645 = vmatprep.subr.mxu0 0.0
          %646 = vmatpush1.msra.mxu0 0.0
          %647 = vmatprep.subr.mxu0 0.0
          %648 = vmatpush1.msra.mxu0 0.0
          %649 = vmatprep.subr.mxu0 0.0
          %650 = vmatpush1.msra.mxu0 0.0
          %651 = vmatprep.subr.mxu0 0.0
          %652 = vmatpush1.msra.mxu0 0.0
          %653 = vmatprep.subr.mxu0 0.0
          %654 = vmatpush1.msra.mxu0 0.0
          %655 = vmatprep.subr.mxu0 0.0
          %656 = vmatpush1.msra.mxu0 0.0
          %657 = vmatprep.subr.mxu0 0.0
          %658 = vmatpush1.msra.mxu0 0.0
          %659 = vmatprep.mubr.f32.mxu0 0.0
          %660 = vmatmul.mubr.f32.gmra.mrb[0].mxu0 %v389
          %v661 = vpop.f32.mrb[0].mxu0
          %v662 = vadd.f32 %v473, %v661
          %v663 = vpop.f32.mrb[0].mxu0
          %v664 = vadd.f32 %v477, %v663
          %665 = vmatprep.mubr.f32.mxu0 0.0
          %666 = vmatmul.mubr.f32.gmra.mrb[0].mxu0 %v390
          %v667 = vpop.f32.mrb[0].mxu0
          %v668 = vadd.f32 %v473, %v667
          %v669 = vpop.f32.mrb[0].mxu0
          %v670 = vadd.f32 %v477, %v669
          %671 = vmatprep.mubr.f32.mxu0 0.0
          %672 = vmatmul.mubr.f32.gmra.mrb[0].mxu0 %v391
          %v673 = vpop.f32.mrb[0].mxu0
          %v674 = vadd.f32 %v473, %v673
          %v675 = vpop.f32.mrb[0].mxu0
          %v676 = vadd.f32 %v477, %v675
          %677 = vmatprep.mubr.f32.mxu0 0.0
          %678 = vmatmul.mubr.f32.gmra.mrb[0].mxu0 %v392
          %v679 = vpop.f32.mrb[0].mxu0
          %v680 = vadd.f32 %v473, %v679
          %v681 = vpop.f32.mrb[0].mxu0
          %v682 = vadd.f32 %v477, %v681
          %683 = vmatprep.mubr.f32.mxu0 0.0
          %684 = vmatmul.mubr.f32.gmra.mrb[0].mxu0 %v393
          %v685 = vpop.f32.mrb[0].mxu0
          %v686 = vadd.f32 %v473, %v685
          %v687 = vpop.f32.mrb[0].mxu0
          %v688 = vadd.f32 %v477, %v687
          %689 = vmatprep.mubr.f32.mxu0 0.0
          %690 = vmatmul.mubr.f32.gmra.mrb[0].mxu0 %v394
          %v691 = vpop.f32.mrb[0].mxu0
          %v692 = vadd.f32 %v473, %v691
          %v693 = vpop.f32.mrb[0].mxu0
          %v694 = vadd.f32 %v477, %v693
          %695 = vmatprep.mubr.f32.mxu0 0.0
          %696 = vmatmul.mubr.f32.gmra.mrb[0].mxu0 %v395
          %v697 = vpop.f32.mrb[0].mxu0
          %v698 = vadd.f32 %v473, %v697
          %v699 = vpop.f32.mrb[0].mxu0
          %v700 = vadd.f32 %v477, %v699
          %701 = vmatprep.mubr.f32.mxu0 0.0
          %702 = vmatmul.mubr.f32.gmra.mrb[0].mxu0 %v396
          %v703 = vpop.f32.mrb[0].mxu0
          %v704 = vadd.f32 %v473, %v703
          %v705 = vpop.f32.mrb[0].mxu0
          %v706 = vadd.f32 %v477, %v705
          %707 = vdwg.mxu0
          %708 = vst [vmem:[#allocation2] sm:$0xff] %v549
          %709 = vst [vmem:[#allocation2 + $0x8] sm:$0xff] %v551
          %710 = vst [vmem:[#allocation2 + $0x10] sm:$0xff] %v662
          %711 = vst [vmem:[#allocation2 + $0x18] sm:$0xff] %v664
          %712 = vst [vmem:[#allocation2 + $0x20] sm:$0xff] %v555
          %713 = vst [vmem:[#allocation2 + $0x28] sm:$0xff] %v557
          %714 = vst [vmem:[#allocation2 + $0x30] sm:$0xff] %v668
          %715 = vst [vmem:[#allocation2 + $0x38] sm:$0xff] %v670
          %716 = vst [vmem:[#allocation2 + $0x40] sm:$0xff] %v561
          %717 = vst [vmem:[#allocation2 + $0x48] sm:$0xff] %v563
          %718 = vst [vmem:[#allocation2 + $0x50] sm:$0xff] %v674
          %719 = vst [vmem:[#allocation2 + $0x58] sm:$0xff] %v676
          %720 = vst [vmem:[#allocation2 + $0x60] sm:$0xff] %v567
          %721 = vst [vmem:[#allocation2 + $0x68] sm:$0xff] %v569
          %722 = vst [vmem:[#allocation2 + $0x70] sm:$0xff] %v680
          %723 = vst [vmem:[#allocation2 + $0x78] sm:$0xff] %v682
          %724 = vst [vmem:[#allocation2 + $0x80] sm:$0xff] %v573
          %725 = vst [vmem:[#allocation2 + $0x88] sm:$0xff] %v575
          %726 = vst [vmem:[#allocation2 + $0x90] sm:$0xff] %v686
          %727 = vst [vmem:[#allocation2 + $0x98] sm:$0xff] %v688
          %728 = vst [vmem:[#allocation2 + $0xa0] sm:$0xff] %v579
          %729 = vst [vmem:[#allocation2 + $0xa8] sm:$0xff] %v581
          %730 = vst [vmem:[#allocation2 + $0xb0] sm:$0xff] %v692
          %731 = vst [vmem:[#allocation2 + $0xb8] sm:$0xff] %v694
          %732 = vst [vmem:[#allocation2 + $0xc0] sm:$0xff] %v585
          %733 = vst [vmem:[#allocation2 + $0xc8] sm:$0xff] %v587
          %734 = vst [vmem:[#allocation2 + $0xd0] sm:$0xff] %v698
          %735 = vst [vmem:[#allocation2 + $0xd8] sm:$0xff] %v700
          %736 = vst [vmem:[#allocation2 + $0xe0] sm:$0xff] %v591
          %737 = vst [vmem:[#allocation2 + $0xe8] sm:$0xff] %v593
          %738 = vst [vmem:[#allocation2 + $0xf0] sm:$0xff] %v704
          %739 = vst [vmem:[#allocation2 + $0xf8] sm:$0xff] %v706
        $region60: #{tpu_custom_call.1} parent=39 // pred_fallthru
          _
        %p740 = scmp.gt.s32.totalorder %s25, 0
        // Predicated region
        $region61: #{tpu_custom_call.1} parent=39 // pred_check
          %p741 = pneg %p740
        $region62: #{tpu_custom_call.1} parent=39 // pred_check_branch
          %743 = sbr.rel (%p741) target = $region64
        $region63: #{tpu_custom_call.1} parent=39 // pred_region
          %v744 = vld [vmem:[#allocation10] sm:$0xff]
          %v745 = vld [vmem:[#allocation10 + $0x8] sm:$0xff]
          %v746 = vld [vmem:[#allocation10 + $0x10] sm:$0xff]
          %v747 = vld [vmem:[#allocation10 + $0x18] sm:$0xff]
          %v748 = vld [vmem:[#allocation10 + $0x20] sm:$0xff]
          %v749 = vld [vmem:[#allocation10 + $0x28] sm:$0xff]
          %v750 = vld [vmem:[#allocation10 + $0x30] sm:$0xff]
          %v751 = vld [vmem:[#allocation10 + $0x38] sm:$0xff]
          %v752 = vld [vmem:[%s326] sm:$0xff]
          %v753 = vld [vmem:[%s326 + $0x8] sm:$0xff]
          %v754 = vld [vmem:[%s326 + $0x10] sm:$0xff]
          %v755 = vld [vmem:[%s326 + $0x18] sm:$0xff]
          %v756 = vld [vmem:[%s326 + $0x20] sm:$0xff]
          %v757 = vld [vmem:[%s326 + $0x28] sm:$0xff]
          %v758 = vld [vmem:[%s326 + $0x30] sm:$0xff]
          %v759 = vld [vmem:[%s326 + $0x38] sm:$0xff]
          %v760 = vld [vmem:[%s326 + $0x40] sm:$0xff]
          %v761 = vld [vmem:[%s326 + $0x48] sm:$0xff]
          %v762 = vld [vmem:[%s326 + $0x50] sm:$0xff]
          %v763 = vld [vmem:[%s326 + $0x58] sm:$0xff]
          %v764 = vld [vmem:[%s326 + $0x60] sm:$0xff]
          %v765 = vld [vmem:[%s326 + $0x68] sm:$0xff]
          %v766 = vld [vmem:[%s326 + $0x70] sm:$0xff]
          %v767 = vld [vmem:[%s326 + $0x78] sm:$0xff]
          %v768 = vld [vmem:[%s326 + $0x80] sm:$0xff]
          %v769 = vld [vmem:[%s326 + $0x88] sm:$0xff]
          %v770 = vld [vmem:[%s326 + $0x90] sm:$0xff]
          %v771 = vld [vmem:[%s326 + $0x98] sm:$0xff]
          %v772 = vld [vmem:[%s326 + $0xa0] sm:$0xff]
          %v773 = vld [vmem:[%s326 + $0xa8] sm:$0xff]
          %v774 = vld [vmem:[%s326 + $0xb0] sm:$0xff]
          %v775 = vld [vmem:[%s326 + $0xb8] sm:$0xff]
          %v776 = vld [vmem:[%s326 + $0xc0] sm:$0xff]
          %v777 = vld [vmem:[%s326 + $0xc8] sm:$0xff]
          %v778 = vld [vmem:[%s326 + $0xd0] sm:$0xff]
          %v779 = vld [vmem:[%s326 + $0xd8] sm:$0xff]
          %v780 = vld [vmem:[%s326 + $0xe0] sm:$0xff]
          %v781 = vld [vmem:[%s326 + $0xe8] sm:$0xff]
          %v782 = vld [vmem:[%s326 + $0xf0] sm:$0xff]
          %v783 = vld [vmem:[%s326 + $0xf8] sm:$0xff]
          %v784 = vld [vmem:[%s326 + $0x100] sm:$0xff]
          %v785 = vld [vmem:[%s326 + $0x108] sm:$0xff]
          %v786 = vld [vmem:[%s326 + $0x110] sm:$0xff]
          %v787 = vld [vmem:[%s326 + $0x118] sm:$0xff]
          %v788 = vld [vmem:[%s326 + $0x120] sm:$0xff]
          %v789 = vld [vmem:[%s326 + $0x128] sm:$0xff]
          %v790 = vld [vmem:[%s326 + $0x130] sm:$0xff]
          %v791 = vld [vmem:[%s326 + $0x138] sm:$0xff]
          %v792 = vld [vmem:[%s326 + $0x140] sm:$0xff]
          %v793 = vld [vmem:[%s326 + $0x148] sm:$0xff]
          %v794 = vld [vmem:[%s326 + $0x150] sm:$0xff]
          %v795 = vld [vmem:[%s326 + $0x158] sm:$0xff]
          %v796 = vld [vmem:[%s326 + $0x160] sm:$0xff]
          %v797 = vld [vmem:[%s326 + $0x168] sm:$0xff]
          %v798 = vld [vmem:[%s326 + $0x170] sm:$0xff]
          %v799 = vld [vmem:[%s326 + $0x178] sm:$0xff]
          %v800 = vld [vmem:[%s326 + $0x180] sm:$0xff]
          %v801 = vld [vmem:[%s326 + $0x188] sm:$0xff]
          %v802 = vld [vmem:[%s326 + $0x190] sm:$0xff]
          %v803 = vld [vmem:[%s326 + $0x198] sm:$0xff]
          %v804 = vld [vmem:[%s326 + $0x1a0] sm:$0xff]
          %v805 = vld [vmem:[%s326 + $0x1a8] sm:$0xff]
          %v806 = vld [vmem:[%s326 + $0x1b0] sm:$0xff]
          %v807 = vld [vmem:[%s326 + $0x1b8] sm:$0xff]
          %v808 = vld [vmem:[%s326 + $0x1c0] sm:$0xff]
          %v809 = vld [vmem:[%s326 + $0x1c8] sm:$0xff]
          %v810 = vld [vmem:[%s326 + $0x1d0] sm:$0xff]
          %v811 = vld [vmem:[%s326 + $0x1d8] sm:$0xff]
          %v812 = vld [vmem:[%s326 + $0x1e0] sm:$0xff]
          %v813 = vld [vmem:[%s326 + $0x1e8] sm:$0xff]
          %v814 = vld [vmem:[%s326 + $0x1f0] sm:$0xff]
          %v815 = vld [vmem:[%s326 + $0x1f8] sm:$0xff]
          %v817 = vlaneseq
          %v818 = vshrl.u32 %v817, 7
          %v819 = vsub.s32 0, %v818
          %v820 = vrot.slane %v384, %v819
          %v821 = vlaneseq
          %v822 = vshrl.u32 %v821, 7
          %v823 = vsub.s32 1, %v822
          %v824 = vrot.slane %v384, %v823
          %v825 = vlaneseq
          %v826 = vshrl.u32 %v825, 7
          %v827 = vsub.s32 2, %v826
          %v828 = vrot.slane %v384, %v827
          %v829 = vlaneseq
          %v830 = vshrl.u32 %v829, 7
          %v831 = vsub.s32 3, %v830
          %v832 = vrot.slane %v384, %v831
          %837 = vmatprep.subr.mxu0 %v753
          %838 = vmatpush1.msra.mxu0 %v752
          %839 = vmatprep.subr.mxu0 %v757
          %840 = vmatpush1.msra.mxu0 %v756
          %841 = vmatprep.subr.mxu0 %v761
          %842 = vmatpush1.msra.mxu0 %v760
          %843 = vmatprep.subr.mxu0 %v765
          %844 = vmatpush1.msra.mxu0 %v764
          %845 = vmatprep.subr.mxu0 %v769
          %846 = vmatpush1.msra.mxu0 %v768
          %847 = vmatprep.subr.mxu0 %v773
          %848 = vmatpush1.msra.mxu0 %v772
          %849 = vmatprep.subr.mxu0 %v777
          %850 = vmatpush1.msra.mxu0 %v776
          %851 = vmatprep.subr.mxu0 %v781
          %852 = vmatpush1.msra.mxu0 %v780
          %853 = vmatprep.subr.mxu0 %v785
          %854 = vmatpush1.msra.mxu0 %v784
          %855 = vmatprep.subr.mxu0 %v789
          %856 = vmatpush1.msra.mxu0 %v788
          %857 = vmatprep.subr.mxu0 %v793
          %858 = vmatpush1.msra.mxu0 %v792
          %859 = vmatprep.subr.mxu0 %v797
          %860 = vmatpush1.msra.mxu0 %v796
          %861 = vmatprep.subr.mxu0 %v801
          %862 = vmatpush1.msra.mxu0 %v800
          %863 = vmatprep.subr.mxu0 %v805
          %864 = vmatpush1.msra.mxu0 %v804
          %865 = vmatprep.subr.mxu0 %v809
          %866 = vmatpush1.msra.mxu0 %v808
          %867 = vmatprep.subr.mxu0 %v813
          %868 = vmatpush1.msra.mxu0 %v812
          %869 = vmatprep.subr.mxu0 0.0
          %870 = vmatpush1.msra.mxu0 0.0
          %871 = vmatprep.subr.mxu0 0.0
          %872 = vmatpush1.msra.mxu0 0.0
          %873 = vmatprep.subr.mxu0 0.0
          %874 = vmatpush1.msra.mxu0 0.0
          %875 = vmatprep.subr.mxu0 0.0
          %876 = vmatpush1.msra.mxu0 0.0
          %877 = vmatprep.subr.mxu0 0.0
          %878 = vmatpush1.msra.mxu0 0.0
          %879 = vmatprep.subr.mxu0 0.0
          %880 = vmatpush1.msra.mxu0 0.0
          %881 = vmatprep.subr.mxu0 0.0
          %882 = vmatpush1.msra.mxu0 0.0
          %883 = vmatprep.subr.mxu0 0.0
          %884 = vmatpush1.msra.mxu0 0.0
          %885 = vmatprep.subr.mxu0 0.0
          %886 = vmatpush1.msra.mxu0 0.0
          %887 = vmatprep.subr.mxu0 0.0
          %888 = vmatpush1.msra.mxu0 0.0
          %889 = vmatprep.subr.mxu0 0.0
          %890 = vmatpush1.msra.mxu0 0.0
          %891 = vmatprep.subr.mxu0 0.0
          %892 = vmatpush1.msra.mxu0 0.0
          %893 = vmatprep.subr.mxu0 0.0
          %894 = vmatpush1.msra.mxu0 0.0
          %895 = vmatprep.subr.mxu0 0.0
          %896 = vmatpush1.msra.mxu0 0.0
          %897 = vmatprep.subr.mxu0 0.0
          %898 = vmatpush1.msra.mxu0 0.0
          %899 = vmatprep.subr.mxu0 0.0
          %900 = vmatpush1.msra.mxu0 0.0
          %901 = vmatprep.mubr.f32.mxu0 0.0
          %902 = vmatmul.mubr.f32.gmra.mrb[0].mxu0 %v744
          %v903 = vpop.f32.mrb[0].mxu0
          %v904 = vadd.f32 %v820, %v903
          %v905 = vpop.f32.mrb[0].mxu0
          %v906 = vadd.f32 %v824, %v905
          %907 = vmatprep.mubr.f32.mxu0 0.0
          %908 = vmatmul.mubr.f32.gmra.mrb[0].mxu0 %v745
          %v909 = vpop.f32.mrb[0].mxu0
          %v910 = vadd.f32 %v820, %v909
          %v911 = vpop.f32.mrb[0].mxu0
          %v912 = vadd.f32 %v824, %v911
          %913 = vmatprep.mubr.f32.mxu0 0.0
          %914 = vmatmul.mubr.f32.gmra.mrb[0].mxu0 %v746
          %v915 = vpop.f32.mrb[0].mxu0
          %v916 = vadd.f32 %v820, %v915
          %v917 = vpop.f32.mrb[0].mxu0
          %v918 = vadd.f32 %v824, %v917
          %919 = vmatprep.mubr.f32.mxu0 0.0
          %920 = vmatmul.mubr.f32.gmra.mrb[0].mxu0 %v747
          %v921 = vpop.f32.mrb[0].mxu0
          %v922 = vadd.f32 %v820, %v921
          %v923 = vpop.f32.mrb[0].mxu0
          %v924 = vadd.f32 %v824, %v923
          %925 = vmatprep.mubr.f32.mxu0 0.0
          %926 = vmatmul.mubr.f32.gmra.mrb[0].mxu0 %v748
          %v927 = vpop.f32.mrb[0].mxu0
          %v928 = vadd.f32 %v820, %v927
          %v929 = vpop.f32.mrb[0].mxu0
          %v930 = vadd.f32 %v824, %v929
          %931 = vmatprep.mubr.f32.mxu0 0.0
          %932 = vmatmul.mubr.f32.gmra.mrb[0].mxu0 %v749
          %v933 = vpop.f32.mrb[0].mxu0
          %v934 = vadd.f32 %v820, %v933
          %v935 = vpop.f32.mrb[0].mxu0
          %v936 = vadd.f32 %v824, %v935
          %937 = vmatprep.mubr.f32.mxu0 0.0
          %938 = vmatmul.mubr.f32.gmra.mrb[0].mxu0 %v750
          %v939 = vpop.f32.mrb[0].mxu0
          %v940 = vadd.f32 %v820, %v939
          %v941 = vpop.f32.mrb[0].mxu0
          %v942 = vadd.f32 %v824, %v941
          %943 = vmatprep.mubr.f32.mxu0 0.0
          %944 = vmatmul.mubr.f32.gmra.mrb[0].mxu0 %v751
          %v945 = vpop.f32.mrb[0].mxu0
          %v946 = vadd.f32 %v820, %v945
          %v947 = vpop.f32.mrb[0].mxu0
          %v948 = vadd.f32 %v824, %v947
          %949 = vdwg.mxu0
          %950 = vmatprep.subr.mxu0 %v755
          %951 = vmatpush1.msra.mxu0 %v754
          %952 = vmatprep.subr.mxu0 %v759
          %953 = vmatpush1.msra.mxu0 %v758
          %954 = vmatprep.subr.mxu0 %v763
          %955 = vmatpush1.msra.mxu0 %v762
          %956 = vmatprep.subr.mxu0 %v767
          %957 = vmatpush1.msra.mxu0 %v766
          %958 = vmatprep.subr.mxu0 %v771
          %959 = vmatpush1.msra.mxu0 %v770
          %960 = vmatprep.subr.mxu0 %v775
          %961 = vmatpush1.msra.mxu0 %v774
          %962 = vmatprep.subr.mxu0 %v779
          %963 = vmatpush1.msra.mxu0 %v778
          %964 = vmatprep.subr.mxu0 %v783
          %965 = vmatpush1.msra.mxu0 %v782
          %966 = vmatprep.subr.mxu0 %v787
          %967 = vmatpush1.msra.mxu0 %v786
          %968 = vmatprep.subr.mxu0 %v791
          %969 = vmatpush1.msra.mxu0 %v790
          %970 = vmatprep.subr.mxu0 %v795
          %971 = vmatpush1.msra.mxu0 %v794
          %972 = vmatprep.subr.mxu0 %v799
          %973 = vmatpush1.msra.mxu0 %v798
          %974 = vmatprep.subr.mxu0 %v803
          %975 = vmatpush1.msra.mxu0 %v802
          %976 = vmatprep.subr.mxu0 %v807
          %977 = vmatpush1.msra.mxu0 %v806
          %978 = vmatprep.subr.mxu0 %v811
          %979 = vmatpush1.msra.mxu0 %v810
          %980 = vmatprep.subr.mxu0 %v815
          %981 = vmatpush1.msra.mxu0 %v814
          %982 = vmatprep.subr.mxu0 0.0
          %983 = vmatpush1.msra.mxu0 0.0
          %984 = vmatprep.subr.mxu0 0.0
          %985 = vmatpush1.msra.mxu0 0.0
          %986 = vmatprep.subr.mxu0 0.0
          %987 = vmatpush1.msra.mxu0 0.0
          %988 = vmatprep.subr.mxu0 0.0
          %989 = vmatpush1.msra.mxu0 0.0
          %990 = vmatprep.subr.mxu0 0.0
          %991 = vmatpush1.msra.mxu0 0.0
          %992 = vmatprep.subr.mxu0 0.0
          %993 = vmatpush1.msra.mxu0 0.0
          %994 = vmatprep.subr.mxu0 0.0
          %995 = vmatpush1.msra.mxu0 0.0
          %996 = vmatprep.subr.mxu0 0.0
          %997 = vmatpush1.msra.mxu0 0.0
          %998 = vmatprep.subr.mxu0 0.0
          %999 = vmatpush1.msra.mxu0 0.0
          %1000 = vmatprep.subr.mxu0 0.0
          %1001 = vmatpush1.msra.mxu0 0.0
          %1002 = vmatprep.subr.mxu0 0.0
          %1003 = vmatpush1.msra.mxu0 0.0
          %1004 = vmatprep.subr.mxu0 0.0
          %1005 = vmatpush1.msra.mxu0 0.0
          %1006 = vmatprep.subr.mxu0 0.0
          %1007 = vmatpush1.msra.mxu0 0.0
          %1008 = vmatprep.subr.mxu0 0.0
          %1009 = vmatpush1.msra.mxu0 0.0
          %1010 = vmatprep.subr.mxu0 0.0
          %1011 = vmatpush1.msra.mxu0 0.0
          %1012 = vmatprep.subr.mxu0 0.0
          %1013 = vmatpush1.msra.mxu0 0.0
          %1014 = vmatprep.mubr.f32.mxu0 0.0
          %1015 = vmatmul.mubr.f32.gmra.mrb[0].mxu0 %v744
          %v1016 = vpop.f32.mrb[0].mxu0
          %v1017 = vadd.f32 %v828, %v1016
          %v1018 = vpop.f32.mrb[0].mxu0
          %v1019 = vadd.f32 %v832, %v1018
          %1020 = vmatprep.mubr.f32.mxu0 0.0
          %1021 = vmatmul.mubr.f32.gmra.mrb[0].mxu0 %v745
          %v1022 = vpop.f32.mrb[0].mxu0
          %v1023 = vadd.f32 %v828, %v1022
          %v1024 = vpop.f32.mrb[0].mxu0
          %v1025 = vadd.f32 %v832, %v1024
          %1026 = vmatprep.mubr.f32.mxu0 0.0
          %1027 = vmatmul.mubr.f32.gmra.mrb[0].mxu0 %v746
          %v1028 = vpop.f32.mrb[0].mxu0
          %v1029 = vadd.f32 %v828, %v1028
          %v1030 = vpop.f32.mrb[0].mxu0
          %v1031 = vadd.f32 %v832, %v1030
          %1032 = vmatprep.mubr.f32.mxu0 0.0
          %1033 = vmatmul.mubr.f32.gmra.mrb[0].mxu0 %v747
          %v1034 = vpop.f32.mrb[0].mxu0
          %v1035 = vadd.f32 %v828, %v1034
          %v1036 = vpop.f32.mrb[0].mxu0
          %v1037 = vadd.f32 %v832, %v1036
          %1038 = vmatprep.mubr.f32.mxu0 0.0
          %1039 = vmatmul.mubr.f32.gmra.mrb[0].mxu0 %v748
          %v1040 = vpop.f32.mrb[0].mxu0
          %v1041 = vadd.f32 %v828, %v1040
          %v1042 = vpop.f32.mrb[0].mxu0
          %v1043 = vadd.f32 %v832, %v1042
          %1044 = vmatprep.mubr.f32.mxu0 0.0
          %1045 = vmatmul.mubr.f32.gmra.mrb[0].mxu0 %v749
          %v1046 = vpop.f32.mrb[0].mxu0
          %v1047 = vadd.f32 %v828, %v1046
          %v1048 = vpop.f32.mrb[0].mxu0
          %v1049 = vadd.f32 %v832, %v1048
          %1050 = vmatprep.mubr.f32.mxu0 0.0
          %1051 = vmatmul.mubr.f32.gmra.mrb[0].mxu0 %v750
          %v1052 = vpop.f32.mrb[0].mxu0
          %v1053 = vadd.f32 %v828, %v1052
          %v1054 = vpop.f32.mrb[0].mxu0
          %v1055 = vadd.f32 %v832, %v1054
          %1056 = vmatprep.mubr.f32.mxu0 0.0
          %1057 = vmatmul.mubr.f32.gmra.mrb[0].mxu0 %v751
          %v1058 = vpop.f32.mrb[0].mxu0
          %v1059 = vadd.f32 %v828, %v1058
          %v1060 = vpop.f32.mrb[0].mxu0
          %v1061 = vadd.f32 %v832, %v1060
          %1062 = vdwg.mxu0
          %1063 = vst [vmem:[#allocation2] sm:$0xff] %v904
          %1064 = vst [vmem:[#allocation2 + $0x8] sm:$0xff] %v906
          %1065 = vst [vmem:[#allocation2 + $0x10] sm:$0xff] %v1017
          %1066 = vst [vmem:[#allocation2 + $0x18] sm:$0xff] %v1019
          %1067 = vst [vmem:[#allocation2 + $0x20] sm:$0xff] %v910
          %1068 = vst [vmem:[#allocation2 + $0x28] sm:$0xff] %v912
          %1069 = vst [vmem:[#allocation2 + $0x30] sm:$0xff] %v1023
          %1070 = vst [vmem:[#allocation2 + $0x38] sm:$0xff] %v1025
          %1071 = vst [vmem:[#allocation2 + $0x40] sm:$0xff] %v916
          %1072 = vst [vmem:[#allocation2 + $0x48] sm:$0xff] %v918
          %1073 = vst [vmem:[#allocation2 + $0x50] sm:$0xff] %v1029
          %1074 = vst [vmem:[#allocation2 + $0x58] sm:$0xff] %v1031
          %1075 = vst [vmem:[#allocation2 + $0x60] sm:$0xff] %v922
          %1076 = vst [vmem:[#allocation2 + $0x68] sm:$0xff] %v924
          %1077 = vst [vmem:[#allocation2 + $0x70] sm:$0xff] %v1035
          %1078 = vst [vmem:[#allocation2 + $0x78] sm:$0xff] %v1037
          %1079 = vst [vmem:[#allocation2 + $0x80] sm:$0xff] %v928
          %1080 = vst [vmem:[#allocation2 + $0x88] sm:$0xff] %v930
          %1081 = vst [vmem:[#allocation2 + $0x90] sm:$0xff] %v1041
          %1082 = vst [vmem:[#allocation2 + $0x98] sm:$0xff] %v1043
          %1083 = vst [vmem:[#allocation2 + $0xa0] sm:$0xff] %v934
          %1084 = vst [vmem:[#allocation2 + $0xa8] sm:$0xff] %v936
          %1085 = vst [vmem:[#allocation2 + $0xb0] sm:$0xff] %v1047
          %1086 = vst [vmem:[#allocation2 + $0xb8] sm:$0xff] %v1049
          %1087 = vst [vmem:[#allocation2 + $0xc0] sm:$0xff] %v940
          %1088 = vst [vmem:[#allocation2 + $0xc8] sm:$0xff] %v942
          %1089 = vst [vmem:[#allocation2 + $0xd0] sm:$0xff] %v1053
          %1090 = vst [vmem:[#allocation2 + $0xd8] sm:$0xff] %v1055
          %1091 = vst [vmem:[#allocation2 + $0xe0] sm:$0xff] %v946
          %1092 = vst [vmem:[#allocation2 + $0xe8] sm:$0xff] %v948
          %1093 = vst [vmem:[#allocation2 + $0xf0] sm:$0xff] %v1059
          %1094 = vst [vmem:[#allocation2 + $0xf8] sm:$0xff] %v1061
        $region64: #{tpu_custom_call.1} parent=39 // pred_fallthru
          _
        %v1095 = vld [vmem:[%s335] sm:$0xff]
        %v1096 = vld [vmem:[%s335 + $0x8] sm:$0xff]
        %v1097 = vld [vmem:[%s335 + $0x10] sm:$0xff]
        %v1098 = vld [vmem:[%s335 + $0x18] sm:$0xff]
        %v1099 = vld [vmem:[%s335 + $0x20] sm:$0xff]
        %v1100 = vld [vmem:[%s335 + $0x28] sm:$0xff]
        %v1101 = vld [vmem:[%s335 + $0x30] sm:$0xff]
        %v1102 = vld [vmem:[%s335 + $0x38] sm:$0xff]
        %v1103 = vld [vmem:[%s335 + $0x40] sm:$0xff]
        %v1104 = vld [vmem:[%s335 + $0x48] sm:$0xff]
        %v1105 = vld [vmem:[%s335 + $0x50] sm:$0xff]
        %v1106 = vld [vmem:[%s335 + $0x58] sm:$0xff]
        %v1107 = vld [vmem:[%s335 + $0x60] sm:$0xff]
        %v1108 = vld [vmem:[%s335 + $0x68] sm:$0xff]
        %v1109 = vld [vmem:[%s335 + $0x70] sm:$0xff]
        %v1110 = vld [vmem:[%s335 + $0x78] sm:$0xff]
        %v1111 = vld [vmem:[%s335 + $0x80] sm:$0xff]
        %v1112 = vld [vmem:[%s335 + $0x88] sm:$0xff]
        %v1113 = vld [vmem:[%s335 + $0x90] sm:$0xff]
        %v1114 = vld [vmem:[%s335 + $0x98] sm:$0xff]
        %v1115 = vld [vmem:[%s335 + $0xa0] sm:$0xff]
        %v1116 = vld [vmem:[%s335 + $0xa8] sm:$0xff]
        %v1117 = vld [vmem:[%s335 + $0xb0] sm:$0xff]
        %v1118 = vld [vmem:[%s335 + $0xb8] sm:$0xff]
        %v1119 = vld [vmem:[%s335 + $0xc0] sm:$0xff]
        %v1120 = vld [vmem:[%s335 + $0xc8] sm:$0xff]
        %v1121 = vld [vmem:[%s335 + $0xd0] sm:$0xff]
        %v1122 = vld [vmem:[%s335 + $0xd8] sm:$0xff]
        %v1123 = vld [vmem:[%s335 + $0xe0] sm:$0xff]
        %v1124 = vld [vmem:[%s335 + $0xe8] sm:$0xff]
        %v1125 = vld [vmem:[%s335 + $0xf0] sm:$0xff]
        %v1126 = vld [vmem:[%s335 + $0xf8] sm:$0xff]
        %v1127 = vld [vmem:[%s335 + $0x100] sm:$0xff]
        %v1128 = vld [vmem:[%s335 + $0x108] sm:$0xff]
        %v1129 = vld [vmem:[%s335 + $0x110] sm:$0xff]
        %v1130 = vld [vmem:[%s335 + $0x118] sm:$0xff]
        %v1131 = vld [vmem:[%s335 + $0x120] sm:$0xff]
        %v1132 = vld [vmem:[%s335 + $0x128] sm:$0xff]
        %v1133 = vld [vmem:[%s335 + $0x130] sm:$0xff]
        %v1134 = vld [vmem:[%s335 + $0x138] sm:$0xff]
        %v1135 = vld [vmem:[%s335 + $0x140] sm:$0xff]
        %v1136 = vld [vmem:[%s335 + $0x148] sm:$0xff]
        %v1137 = vld [vmem:[%s335 + $0x150] sm:$0xff]
        %v1138 = vld [vmem:[%s335 + $0x158] sm:$0xff]
        %v1139 = vld [vmem:[%s335 + $0x160] sm:$0xff]
        %v1140 = vld [vmem:[%s335 + $0x168] sm:$0xff]
        %v1141 = vld [vmem:[%s335 + $0x170] sm:$0xff]
        %v1142 = vld [vmem:[%s335 + $0x178] sm:$0xff]
        %v1143 = vld [vmem:[%s335 + $0x180] sm:$0xff]
        %v1144 = vld [vmem:[%s335 + $0x188] sm:$0xff]
        %v1145 = vld [vmem:[%s335 + $0x190] sm:$0xff]
        %v1146 = vld [vmem:[%s335 + $0x198] sm:$0xff]
        %v1147 = vld [vmem:[%s335 + $0x1a0] sm:$0xff]
        %v1148 = vld [vmem:[%s335 + $0x1a8] sm:$0xff]
        %v1149 = vld [vmem:[%s335 + $0x1b0] sm:$0xff]
        %v1150 = vld [vmem:[%s335 + $0x1b8] sm:$0xff]
        %v1151 = vld [vmem:[%s335 + $0x1c0] sm:$0xff]
        %v1152 = vld [vmem:[%s335 + $0x1c8] sm:$0xff]
        %v1153 = vld [vmem:[%s335 + $0x1d0] sm:$0xff]
        %v1154 = vld [vmem:[%s335 + $0x1d8] sm:$0xff]
        %v1155 = vld [vmem:[%s335 + $0x1e0] sm:$0xff]
        %v1156 = vld [vmem:[%s335 + $0x1e8] sm:$0xff]
        %v1157 = vld [vmem:[%s335 + $0x1f0] sm:$0xff]
        %v1158 = vld [vmem:[%s335 + $0x1f8] sm:$0xff]
        %s1159 = smul.u32 0, 4
        %s1160 = smul.addr %s1159, 8
        %s1161 = scalar_lea.vmem [#allocation2], %s1160
        %v1162 = vld [vmem:[%s1161] sm:$0xff]
        %v1163 = vld [vmem:[%s1161 + $0x8] sm:$0xff]
        %v1164 = vld [vmem:[%s1161 + $0x10] sm:$0xff]
        %v1165 = vld [vmem:[%s1161 + $0x18] sm:$0xff]
        %1166 = vmatprep.subr.mxu0 %v1096
        %1167 = vmatpush1.msra.mxu0 %v1095
        %1168 = vmatprep.subr.mxu0 %v1100
        %1169 = vmatpush1.msra.mxu0 %v1099
        %1170 = vmatprep.subr.mxu0 %v1104
        %1171 = vmatpush1.msra.mxu0 %v1103
        %1172 = vmatprep.subr.mxu0 %v1108
        %1173 = vmatpush1.msra.mxu0 %v1107
        %1174 = vmatprep.subr.mxu0 %v1112
        %1175 = vmatpush1.msra.mxu0 %v1111
        %1176 = vmatprep.subr.mxu0 %v1116
        %1177 = vmatpush1.msra.mxu0 %v1115
        %1178 = vmatprep.subr.mxu0 %v1120
        %1179 = vmatpush1.msra.mxu0 %v1119
        %1180 = vmatprep.subr.mxu0 %v1124
        %1181 = vmatpush1.msra.mxu0 %v1123
        %1182 = vmatprep.subr.mxu0 %v1128
        %1183 = vmatpush1.msra.mxu0 %v1127
        %1184 = vmatprep.subr.mxu0 %v1132
        %1185 = vmatpush1.msra.mxu0 %v1131
        %1186 = vmatprep.subr.mxu0 %v1136
        %1187 = vmatpush1.msra.mxu0 %v1135
        %1188 = vmatprep.subr.mxu0 %v1140
        %1189 = vmatpush1.msra.mxu0 %v1139
        %1190 = vmatprep.subr.mxu0 %v1144
        %1191 = vmatpush1.msra.mxu0 %v1143
        %1192 = vmatprep.subr.mxu0 %v1148
        %1193 = vmatpush1.msra.mxu0 %v1147
        %1194 = vmatprep.subr.mxu0 %v1152
        %1195 = vmatpush1.msra.mxu0 %v1151
        %1196 = vmatprep.subr.mxu0 %v1156
        %1197 = vmatpush1.msra.mxu0 %v1155
        %1198 = vmatprep.subr.mxu0 0.0
        %1199 = vmatpush1.msra.mxu0 0.0
        %1200 = vmatprep.subr.mxu0 0.0
        %1201 = vmatpush1.msra.mxu0 0.0
        %1202 = vmatprep.subr.mxu0 0.0
        %1203 = vmatpush1.msra.mxu0 0.0
        %1204 = vmatprep.subr.mxu0 0.0
        %1205 = vmatpush1.msra.mxu0 0.0
        %1206 = vmatprep.subr.mxu0 0.0
        %1207 = vmatpush1.msra.mxu0 0.0
        %1208 = vmatprep.subr.mxu0 0.0
        %1209 = vmatpush1.msra.mxu0 0.0
        %1210 = vmatprep.subr.mxu0 0.0
        %1211 = vmatpush1.msra.mxu0 0.0
        %1212 = vmatprep.subr.mxu0 0.0
        %1213 = vmatpush1.msra.mxu0 0.0
        %1214 = vmatprep.subr.mxu0 0.0
        %1215 = vmatpush1.msra.mxu0 0.0
        %1216 = vmatprep.subr.mxu0 0.0
        %1217 = vmatpush1.msra.mxu0 0.0
        %1218 = vmatprep.subr.mxu0 0.0
        %1219 = vmatpush1.msra.mxu0 0.0
        %1220 = vmatprep.subr.mxu0 0.0
        %1221 = vmatpush1.msra.mxu0 0.0
        %1222 = vmatprep.subr.mxu0 0.0
        %1223 = vmatpush1.msra.mxu0 0.0
        %1224 = vmatprep.subr.mxu0 0.0
        %1225 = vmatpush1.msra.mxu0 0.0
        %1226 = vmatprep.subr.mxu0 0.0
        %1227 = vmatpush1.msra.mxu0 0.0
        %1228 = vmatprep.subr.mxu0 0.0
        %1229 = vmatpush1.msra.mxu0 0.0
        %1230 = vmatprep.mubr.f32.mxu0 0.0
        %1231 = vmatmul.mubr.f32.gmra.mrb[0].mxu0 0.0
        %v1232 = vpop.f32.mrb[0].mxu0
        %v1233 = vadd.f32 0.0, %v1232
        %v1234 = vpop.f32.mrb[0].mxu0
        %v1235 = vadd.f32 0.0, %v1234
        %1236 = vdwg.mxu0
        %1237 = vmatprep.subr.mxu0 %v1098
        %1238 = vmatpush1.msra.mxu0 %v1097
        %1239 = vmatprep.subr.mxu0 %v1102
        %1240 = vmatpush1.msra.mxu0 %v1101
        %1241 = vmatprep.subr.mxu0 %v1106
        %1242 = vmatpush1.msra.mxu0 %v1105
        %1243 = vmatprep.subr.mxu0 %v1110
        %1244 = vmatpush1.msra.mxu0 %v1109
        %1245 = vmatprep.subr.mxu0 %v1114
        %1246 = vmatpush1.msra.mxu0 %v1113
        %1247 = vmatprep.subr.mxu0 %v1118
        %1248 = vmatpush1.msra.mxu0 %v1117
        %1249 = vmatprep.subr.mxu0 %v1122
        %1250 = vmatpush1.msra.mxu0 %v1121
        %1251 = vmatprep.subr.mxu0 %v1126
        %1252 = vmatpush1.msra.mxu0 %v1125
        %1253 = vmatprep.subr.mxu0 %v1130
        %1254 = vmatpush1.msra.mxu0 %v1129
        %1255 = vmatprep.subr.mxu0 %v1134
        %1256 = vmatpush1.msra.mxu0 %v1133
        %1257 = vmatprep.subr.mxu0 %v1138
        %1258 = vmatpush1.msra.mxu0 %v1137
        %1259 = vmatprep.subr.mxu0 %v1142
        %1260 = vmatpush1.msra.mxu0 %v1141
        %1261 = vmatprep.subr.mxu0 %v1146
        %1262 = vmatpush1.msra.mxu0 %v1145
        %1263 = vmatprep.subr.mxu0 %v1150
        %1264 = vmatpush1.msra.mxu0 %v1149
        %1265 = vmatprep.subr.mxu0 %v1154
        %1266 = vmatpush1.msra.mxu0 %v1153
        %1267 = vmatprep.subr.mxu0 %v1158
        %1268 = vmatpush1.msra.mxu0 %v1157
        %1269 = vmatprep.subr.mxu0 0.0
        %1270 = vmatpush1.msra.mxu0 0.0
        %1271 = vmatprep.subr.mxu0 0.0
        %1272 = vmatpush1.msra.mxu0 0.0
        %1273 = vmatprep.subr.mxu0 0.0
        %1274 = vmatpush1.msra.mxu0 0.0
        %1275 = vmatprep.subr.mxu0 0.0
        %1276 = vmatpush1.msra.mxu0 0.0
        %1277 = vmatprep.subr.mxu0 0.0
        %1278 = vmatpush1.msra.mxu0 0.0
        %1279 = vmatprep.subr.mxu0 0.0
        %1280 = vmatpush1.msra.mxu0 0.0
        %1281 = vmatprep.subr.mxu0 0.0
        %1282 = vmatpush1.msra.mxu0 0.0
        %1283 = vmatprep.subr.mxu0 0.0
        %1284 = vmatpush1.msra.mxu0 0.0
        %1285 = vmatprep.subr.mxu0 0.0
        %1286 = vmatpush1.msra.mxu0 0.0
        %1287 = vmatprep.subr.mxu0 0.0
        %1288 = vmatpush1.msra.mxu0 0.0
        %1289 = vmatprep.subr.mxu0 0.0
        %1290 = vmatpush1.msra.mxu0 0.0
        %1291 = vmatprep.subr.mxu0 0.0
        %1292 = vmatpush1.msra.mxu0 0.0
        %1293 = vmatprep.subr.mxu0 0.0
        %1294 = vmatpush1.msra.mxu0 0.0
        %1295 = vmatprep.subr.mxu0 0.0
        %1296 = vmatpush1.msra.mxu0 0.0
        %1297 = vmatprep.subr.mxu0 0.0
        %1298 = vmatpush1.msra.mxu0 0.0
        %1299 = vmatprep.subr.mxu0 0.0
        %1300 = vmatpush1.msra.mxu0 0.0
        %1301 = vmatprep.mubr.f32.mxu0 0.0
        %1302 = vmatmul.mubr.f32.gmra.mrb[0].mxu0 0.0
        %v1303 = vpop.f32.mrb[0].mxu0
        %v1304 = vadd.f32 0.0, %v1303
        %v1305 = vpop.f32.mrb[0].mxu0
        %v1306 = vadd.f32 0.0, %v1305
        %1307 = vdwg.mxu0
        %v1308 = vadd.f32 %v1162, %v1233
        %v1309 = vadd.f32 %v1163, %v1235
        %v1310 = vadd.f32 %v1164, %v1304
        %v1311 = vadd.f32 %v1165, %v1306
        %v1312 = vxor.u32 %v1308, 2147483648
        %v1313 = vmul.f32 %v1312, 1.442695
        %v1314 = vpow.pop %v1313
        %v1315 = vadd.f32 %v1314, 1.0
        %v1316 = vrcp.pop %v1315
        %v1317 = vmul.f32 1.0, %v1316
        %v1318 = vxor.u32 %v1309, 2147483648
        %v1319 = vmul.f32 %v1318, 1.442695
        %v1320 = vpow.pop %v1319
        %v1321 = vadd.f32 %v1320, 1.0
        %v1322 = vrcp.pop %v1321
        %v1323 = vmul.f32 1.0, %v1322
        %v1324 = vtanh.pop %v1310
        %v1325 = vxor.u32 %v1311, 2147483648
        %v1326 = vmul.f32 %v1325, 1.442695
        %v1327 = vpow.pop %v1326
        %v1328 = vadd.f32 %v1327, 1.0
        %v1329 = vrcp.pop %v1328
        %v1330 = vmul.f32 1.0, %v1329
        %v1331 = vmul.f32 %v1323, 0.0
        %v1332 = vmul.f32 %v1317, %v1324
        %v1333 = vadd.f32 %v1331, %v1332
        %v1334 = vtanh.pop %v1333
        %v1335 = vmul.f32 %v1330, %v1334
        %1336 = vst [vmem:[#allocation10] sm:$0xff] %v1335
        %s1337 = smul.u32 1, 4
        %s1338 = smul.addr %s1337, 8
        %s1339 = scalar_lea.vmem [#allocation2], %s1338
        %v1340 = vld [vmem:[%s1339] sm:$0xff]
        %v1341 = vld [vmem:[%s1339 + $0x8] sm:$0xff]
        %v1342 = vld [vmem:[%s1339 + $0x10] sm:$0xff]
        %v1343 = vld [vmem:[%s1339 + $0x18] sm:$0xff]
        %1344 = vmatprep.subr.mxu0 %v1096
        %1345 = vmatpush1.msra.mxu0 %v1095
        %1346 = vmatprep.subr.mxu0 %v1100
        %1347 = vmatpush1.msra.mxu0 %v1099
        %1348 = vmatprep.subr.mxu0 %v1104
        %1349 = vmatpush1.msra.mxu0 %v1103
        %1350 = vmatprep.subr.mxu0 %v1108
        %1351 = vmatpush1.msra.mxu0 %v1107
        %1352 = vmatprep.subr.mxu0 %v1112
        %1353 = vmatpush1.msra.mxu0 %v1111
        %1354 = vmatprep.subr.mxu0 %v1116
        %1355 = vmatpush1.msra.mxu0 %v1115
        %1356 = vmatprep.subr.mxu0 %v1120
        %1357 = vmatpush1.msra.mxu0 %v1119
        %1358 = vmatprep.subr.mxu0 %v1124
        %1359 = vmatpush1.msra.mxu0 %v1123
        %1360 = vmatprep.subr.mxu0 %v1128
        %1361 = vmatpush1.msra.mxu0 %v1127
        %1362 = vmatprep.subr.mxu0 %v1132
        %1363 = vmatpush1.msra.mxu0 %v1131
        %1364 = vmatprep.subr.mxu0 %v1136
        %1365 = vmatpush1.msra.mxu0 %v1135
        %1366 = vmatprep.subr.mxu0 %v1140
        %1367 = vmatpush1.msra.mxu0 %v1139
        %1368 = vmatprep.subr.mxu0 %v1144
        %1369 = vmatpush1.msra.mxu0 %v1143
        %1370 = vmatprep.subr.mxu0 %v1148
        %1371 = vmatpush1.msra.mxu0 %v1147
        %1372 = vmatprep.subr.mxu0 %v1152
        %1373 = vmatpush1.msra.mxu0 %v1151
        %1374 = vmatprep.subr.mxu0 %v1156
        %1375 = vmatpush1.msra.mxu0 %v1155
        %1376 = vmatprep.subr.mxu0 0.0
        %1377 = vmatpush1.msra.mxu0 0.0
        %1378 = vmatprep.subr.mxu0 0.0
        %1379 = vmatpush1.msra.mxu0 0.0
        %1380 = vmatprep.subr.mxu0 0.0
        %1381 = vmatpush1.msra.mxu0 0.0
        %1382 = vmatprep.subr.mxu0 0.0
        %1383 = vmatpush1.msra.mxu0 0.0
        %1384 = vmatprep.subr.mxu0 0.0
        %1385 = vmatpush1.msra.mxu0 0.0
        %1386 = vmatprep.subr.mxu0 0.0
        %1387 = vmatpush1.msra.mxu0 0.0
        %1388 = vmatprep.subr.mxu0 0.0
        %1389 = vmatpush1.msra.mxu0 0.0
        %1390 = vmatprep.subr.mxu0 0.0
        %1391 = vmatpush1.msra.mxu0 0.0
        %1392 = vmatprep.subr.mxu0 0.0
        %1393 = vmatpush1.msra.mxu0 0.0
        %1394 = vmatprep.subr.mxu0 0.0
        %1395 = vmatpush1.msra.mxu0 0.0
        %1396 = vmatprep.subr.mxu0 0.0
        %1397 = vmatpush1.msra.mxu0 0.0
        %1398 = vmatprep.subr.mxu0 0.0
        %1399 = vmatpush1.msra.mxu0 0.0
        %1400 = vmatprep.subr.mxu0 0.0
        %1401 = vmatpush1.msra.mxu0 0.0
        %1402 = vmatprep.subr.mxu0 0.0
        %1403 = vmatpush1.msra.mxu0 0.0
        %1404 = vmatprep.subr.mxu0 0.0
        %1405 = vmatpush1.msra.mxu0 0.0
        %1406 = vmatprep.subr.mxu0 0.0
        %1407 = vmatpush1.msra.mxu0 0.0
        %1408 = vmatprep.mubr.f32.mxu0 0.0
        %1409 = vmatmul.mubr.f32.gmra.mrb[0].mxu0 %v1335
        %v1410 = vpop.f32.mrb[0].mxu0
        %v1411 = vadd.f32 0.0, %v1410
        %v1412 = vpop.f32.mrb[0].mxu0
        %v1413 = vadd.f32 0.0, %v1412
        %1414 = vdwg.mxu0
        %1415 = vmatprep.subr.mxu0 %v1098
        %1416 = vmatpush1.msra.mxu0 %v1097
        %1417 = vmatprep.subr.mxu0 %v1102
        %1418 = vmatpush1.msra.mxu0 %v1101
        %1419 = vmatprep.subr.mxu0 %v1106
        %1420 = vmatpush1.msra.mxu0 %v1105
        %1421 = vmatprep.subr.mxu0 %v1110
        %1422 = vmatpush1.msra.mxu0 %v1109
        %1423 = vmatprep.subr.mxu0 %v1114
        %1424 = vmatpush1.msra.mxu0 %v1113
        %1425 = vmatprep.subr.mxu0 %v1118
        %1426 = vmatpush1.msra.mxu0 %v1117
        %1427 = vmatprep.subr.mxu0 %v1122
        %1428 = vmatpush1.msra.mxu0 %v1121
        %1429 = vmatprep.subr.mxu0 %v1126
        %1430 = vmatpush1.msra.mxu0 %v1125
        %1431 = vmatprep.subr.mxu0 %v1130
        %1432 = vmatpush1.msra.mxu0 %v1129
        %1433 = vmatprep.subr.mxu0 %v1134
        %1434 = vmatpush1.msra.mxu0 %v1133
        %1435 = vmatprep.subr.mxu0 %v1138
        %1436 = vmatpush1.msra.mxu0 %v1137
        %1437 = vmatprep.subr.mxu0 %v1142
        %1438 = vmatpush1.msra.mxu0 %v1141
        %1439 = vmatprep.subr.mxu0 %v1146
        %1440 = vmatpush1.msra.mxu0 %v1145
        %1441 = vmatprep.subr.mxu0 %v1150
        %1442 = vmatpush1.msra.mxu0 %v1149
        %1443 = vmatprep.subr.mxu0 %v1154
        %1444 = vmatpush1.msra.mxu0 %v1153
        %1445 = vmatprep.subr.mxu0 %v1158
        %1446 = vmatpush1.msra.mxu0 %v1157
        %1447 = vmatprep.subr.mxu0 0.0
        %1448 = vmatpush1.msra.mxu0 0.0
        %1449 = vmatprep.subr.mxu0 0.0
        %1450 = vmatpush1.msra.mxu0 0.0
        %1451 = vmatprep.subr.mxu0 0.0
        %1452 = vmatpush1.msra.mxu0 0.0
        %1453 = vmatprep.subr.mxu0 0.0
        %1454 = vmatpush1.msra.mxu0 0.0
        %1455 = vmatprep.subr.mxu0 0.0
        %1456 = vmatpush1.msra.mxu0 0.0
        %1457 = vmatprep.subr.mxu0 0.0
        %1458 = vmatpush1.msra.mxu0 0.0
        %1459 = vmatprep.subr.mxu0 0.0
        %1460 = vmatpush1.msra.mxu0 0.0
        %1461 = vmatprep.subr.mxu0 0.0
        %1462 = vmatpush1.msra.mxu0 0.0
        %1463 = vmatprep.subr.mxu0 0.0
        %1464 = vmatpush1.msra.mxu0 0.0
        %1465 = vmatprep.subr.mxu0 0.0
        %1466 = vmatpush1.msra.mxu0 0.0
        %1467 = vmatprep.subr.mxu0 0.0
        %1468 = vmatpush1.msra.mxu0 0.0
        %1469 = vmatprep.subr.mxu0 0.0
        %1470 = vmatpush1.msra.mxu0 0.0
        %1471 = vmatprep.subr.mxu0 0.0
        %1472 = vmatpush1.msra.mxu0 0.0
        %1473 = vmatprep.subr.mxu0 0.0
        %1474 = vmatpush1.msra.mxu0 0.0
        %1475 = vmatprep.subr.mxu0 0.0
        %1476 = vmatpush1.msra.mxu0 0.0
        %1477 = vmatprep.subr.mxu0 0.0
        %1478 = vmatpush1.msra.mxu0 0.0
        %1479 = vmatprep.mubr.f32.mxu0 0.0
        %1480 = vmatmul.mubr.f32.gmra.mrb[0].mxu0 %v1335
        %v1481 = vpop.f32.mrb[0].mxu0
        %v1482 = vadd.f32 0.0, %v1481
        %v1483 = vpop.f32.mrb[0].mxu0
        %v1484 = vadd.f32 0.0, %v1483
        %1485 = vdwg.mxu0
        %v1486 = vadd.f32 %v1340, %v1411
        %v1487 = vadd.f32 %v1341, %v1413
        %v1488 = vadd.f32 %v1342, %v1482
        %v1489 = vadd.f32 %v1343, %v1484
        %v1490 = vxor.u32 %v1486, 2147483648
        %v1491 = vmul.f32 %v1490, 1.442695
        %v1492 = vpow.pop %v1491
        %v1493 = vadd.f32 %v1492, 1.0
        %v1494 = vrcp.pop %v1493
        %v1495 = vmul.f32 1.0, %v1494
        %v1496 = vxor.u32 %v1487, 2147483648
        %v1497 = vmul.f32 %v1496, 1.442695
        %v1498 = vpow.pop %v1497
        %v1499 = vadd.f32 %v1498, 1.0
        %v1500 = vrcp.pop %v1499
        %v1501 = vmul.f32 1.0, %v1500
        %v1502 = vtanh.pop %v1488
        %v1503 = vxor.u32 %v1489, 2147483648
        %v1504 = vmul.f32 %v1503, 1.442695
        %v1505 = vpow.pop %v1504
        %v1506 = vadd.f32 %v1505, 1.0
        %v1507 = vrcp.pop %v1506
        %v1508 = vmul.f32 1.0, %v1507
        %v1509 = vmul.f32 %v1501, %v1333
        %v1510 = vmul.f32 %v1495, %v1502
        %v1511 = vadd.f32 %v1509, %v1510
        %v1512 = vtanh.pop %v1511
        %v1513 = vmul.f32 %v1508, %v1512
        %s1514 = scalar_lea.vmem [#allocation10], 8
        %1515 = vst [vmem:[%s1514] sm:$0xff] %v1513
        %s1516 = smul.u32 2, 4
        %s1517 = smul.addr %s1516, 8
        %s1518 = scalar_lea.vmem [#allocation2], %s1517
        %v1519 = vld [vmem:[%s1518] sm:$0xff]
        %v1520 = vld [vmem:[%s1518 + $0x8] sm:$0xff]
        %v1521 = vld [vmem:[%s1518 + $0x10] sm:$0xff]
        %v1522 = vld [vmem:[%s1518 + $0x18] sm:$0xff]
        %1523 = vmatprep.subr.mxu0 %v1096
        %1524 = vmatpush1.msra.mxu0 %v1095
        %1525 = vmatprep.subr.mxu0 %v1100
        %1526 = vmatpush1.msra.mxu0 %v1099
        %1527 = vmatprep.subr.mxu0 %v1104
        %1528 = vmatpush1.msra.mxu0 %v1103
        %1529 = vmatprep.subr.mxu0 %v1108
        %1530 = vmatpush1.msra.mxu0 %v1107
        %1531 = vmatprep.subr.mxu0 %v1112
        %1532 = vmatpush1.msra.mxu0 %v1111
        %1533 = vmatprep.subr.mxu0 %v1116
        %1534 = vmatpush1.msra.mxu0 %v1115
        %1535 = vmatprep.subr.mxu0 %v1120
        %1536 = vmatpush1.msra.mxu0 %v1119
        %1537 = vmatprep.subr.mxu0 %v1124
        %1538 = vmatpush1.msra.mxu0 %v1123
        %1539 = vmatprep.subr.mxu0 %v1128
        %1540 = vmatpush1.msra.mxu0 %v1127
        %1541 = vmatprep.subr.mxu0 %v1132
        %1542 = vmatpush1.msra.mxu0 %v1131
        %1543 = vmatprep.subr.mxu0 %v1136
        %1544 = vmatpush1.msra.mxu0 %v1135
        %1545 = vmatprep.subr.mxu0 %v1140
        %1546 = vmatpush1.msra.mxu0 %v1139
        %1547 = vmatprep.subr.mxu0 %v1144
        %1548 = vmatpush1.msra.mxu0 %v1143
        %1549 = vmatprep.subr.mxu0 %v1148
        %1550 = vmatpush1.msra.mxu0 %v1147
        %1551 = vmatprep.subr.mxu0 %v1152
        %1552 = vmatpush1.msra.mxu0 %v1151
        %1553 = vmatprep.subr.mxu0 %v1156
        %1554 = vmatpush1.msra.mxu0 %v1155
        %1555 = vmatprep.subr.mxu0 0.0
        %1556 = vmatpush1.msra.mxu0 0.0
        %1557 = vmatprep.subr.mxu0 0.0
        %1558 = vmatpush1.msra.mxu0 0.0
        %1559 = vmatprep.subr.mxu0 0.0
        %1560 = vmatpush1.msra.mxu0 0.0
        %1561 = vmatprep.subr.mxu0 0.0
        %1562 = vmatpush1.msra.mxu0 0.0
        %1563 = vmatprep.subr.mxu0 0.0
        %1564 = vmatpush1.msra.mxu0 0.0
        %1565 = vmatprep.subr.mxu0 0.0
        %1566 = vmatpush1.msra.mxu0 0.0
        %1567 = vmatprep.subr.mxu0 0.0
        %1568 = vmatpush1.msra.mxu0 0.0
        %1569 = vmatprep.subr.mxu0 0.0
        %1570 = vmatpush1.msra.mxu0 0.0
        %1571 = vmatprep.subr.mxu0 0.0
        %1572 = vmatpush1.msra.mxu0 0.0
        %1573 = vmatprep.subr.mxu0 0.0
        %1574 = vmatpush1.msra.mxu0 0.0
        %1575 = vmatprep.subr.mxu0 0.0
        %1576 = vmatpush1.msra.mxu0 0.0
        %1577 = vmatprep.subr.mxu0 0.0
        %1578 = vmatpush1.msra.mxu0 0.0
        %1579 = vmatprep.subr.mxu0 0.0
        %1580 = vmatpush1.msra.mxu0 0.0
        %1581 = vmatprep.subr.mxu0 0.0
        %1582 = vmatpush1.msra.mxu0 0.0
        %1583 = vmatprep.subr.mxu0 0.0
        %1584 = vmatpush1.msra.mxu0 0.0
        %1585 = vmatprep.subr.mxu0 0.0
        %1586 = vmatpush1.msra.mxu0 0.0
        %1587 = vmatprep.mubr.f32.mxu0 0.0
        %1588 = vmatmul.mubr.f32.gmra.mrb[0].mxu0 %v1513
        %v1589 = vpop.f32.mrb[0].mxu0
        %v1590 = vadd.f32 0.0, %v1589
        %v1591 = vpop.f32.mrb[0].mxu0
        %v1592 = vadd.f32 0.0, %v1591
        %1593 = vdwg.mxu0
        %1594 = vmatprep.subr.mxu0 %v1098
        %1595 = vmatpush1.msra.mxu0 %v1097
        %1596 = vmatprep.subr.mxu0 %v1102
        %1597 = vmatpush1.msra.mxu0 %v1101
        %1598 = vmatprep.subr.mxu0 %v1106
        %1599 = vmatpush1.msra.mxu0 %v1105
        %1600 = vmatprep.subr.mxu0 %v1110
        %1601 = vmatpush1.msra.mxu0 %v1109
        %1602 = vmatprep.subr.mxu0 %v1114
        %1603 = vmatpush1.msra.mxu0 %v1113
        %1604 = vmatprep.subr.mxu0 %v1118
        %1605 = vmatpush1.msra.mxu0 %v1117
        %1606 = vmatprep.subr.mxu0 %v1122
        %1607 = vmatpush1.msra.mxu0 %v1121
        %1608 = vmatprep.subr.mxu0 %v1126
        %1609 = vmatpush1.msra.mxu0 %v1125
        %1610 = vmatprep.subr.mxu0 %v1130
        %1611 = vmatpush1.msra.mxu0 %v1129
        %1612 = vmatprep.subr.mxu0 %v1134
        %1613 = vmatpush1.msra.mxu0 %v1133
        %1614 = vmatprep.subr.mxu0 %v1138
        %1615 = vmatpush1.msra.mxu0 %v1137
        %1616 = vmatprep.subr.mxu0 %v1142
        %1617 = vmatpush1.msra.mxu0 %v1141
        %1618 = vmatprep.subr.mxu0 %v1146
        %1619 = vmatpush1.msra.mxu0 %v1145
        %1620 = vmatprep.subr.mxu0 %v1150
        %1621 = vmatpush1.msra.mxu0 %v1149
        %1622 = vmatprep.subr.mxu0 %v1154
        %1623 = vmatpush1.msra.mxu0 %v1153
        %1624 = vmatprep.subr.mxu0 %v1158
        %1625 = vmatpush1.msra.mxu0 %v1157
        %1626 = vmatprep.subr.mxu0 0.0
        %1627 = vmatpush1.msra.mxu0 0.0
        %1628 = vmatprep.subr.mxu0 0.0
        %1629 = vmatpush1.msra.mxu0 0.0
        %1630 = vmatprep.subr.mxu0 0.0
        %1631 = vmatpush1.msra.mxu0 0.0
        %1632 = vmatprep.subr.mxu0 0.0
        %1633 = vmatpush1.msra.mxu0 0.0
        %1634 = vmatprep.subr.mxu0 0.0
        %1635 = vmatpush1.msra.mxu0 0.0
        %1636 = vmatprep.subr.mxu0 0.0
        %1637 = vmatpush1.msra.mxu0 0.0
        %1638 = vmatprep.subr.mxu0 0.0
        %1639 = vmatpush1.msra.mxu0 0.0
        %1640 = vmatprep.subr.mxu0 0.0
        %1641 = vmatpush1.msra.mxu0 0.0
        %1642 = vmatprep.subr.mxu0 0.0
        %1643 = vmatpush1.msra.mxu0 0.0
        %1644 = vmatprep.subr.mxu0 0.0
        %1645 = vmatpush1.msra.mxu0 0.0
        %1646 = vmatprep.subr.mxu0 0.0
        %1647 = vmatpush1.msra.mxu0 0.0
        %1648 = vmatprep.subr.mxu0 0.0
        %1649 = vmatpush1.msra.mxu0 0.0
        %1650 = vmatprep.subr.mxu0 0.0
        %1651 = vmatpush1.msra.mxu0 0.0
        %1652 = vmatprep.subr.mxu0 0.0
        %1653 = vmatpush1.msra.mxu0 0.0
        %1654 = vmatprep.subr.mxu0 0.0
        %1655 = vmatpush1.msra.mxu0 0.0
        %1656 = vmatprep.subr.mxu0 0.0
        %1657 = vmatpush1.msra.mxu0 0.0
        %1658 = vmatprep.mubr.f32.mxu0 0.0
        %1659 = vmatmul.mubr.f32.gmra.mrb[0].mxu0 %v1513
        %v1660 = vpop.f32.mrb[0].mxu0
        %v1661 = vadd.f32 0.0, %v1660
        %v1662 = vpop.f32.mrb[0].mxu0
        %v1663 = vadd.f32 0.0, %v1662
        %1664 = vdwg.mxu0
        %v1665 = vadd.f32 %v1519, %v1590
        %v1666 = vadd.f32 %v1520, %v1592
        %v1667 = vadd.f32 %v1521, %v1661
        %v1668 = vadd.f32 %v1522, %v1663
        %v1669 = vxor.u32 %v1665, 2147483648
        %v1670 = vmul.f32 %v1669, 1.442695
        %v1671 = vpow.pop %v1670
        %v1672 = vadd.f32 %v1671, 1.0
        %v1673 = vrcp.pop %v1672
        %v1674 = vmul.f32 1.0, %v1673
        %v1675 = vxor.u32 %v1666, 2147483648
        %v1676 = vmul.f32 %v1675, 1.442695
        %v1677 = vpow.pop %v1676
        %v1678 = vadd.f32 %v1677, 1.0
        %v1679 = vrcp.pop %v1678
        %v1680 = vmul.f32 1.0, %v1679
        %v1681 = vtanh.pop %v1667
        %v1682 = vxor.u32 %v1668, 2147483648
        %v1683 = vmul.f32 %v1682, 1.442695
        %v1684 = vpow.pop %v1683
        %v1685 = vadd.f32 %v1684, 1.0
        %v1686 = vrcp.pop %v1685
        %v1687 = vmul.f32 1.0, %v1686
        %v1688 = vmul.f32 %v1680, %v1511
        %v1689 = vmul.f32 %v1674, %v1681
        %v1690 = vadd.f32 %v1688, %v1689
        %v1691 = vtanh.pop %v1690
        %v1692 = vmul.f32 %v1687, %v1691
        %s1693 = scalar_lea.vmem [#allocation10], 16
        %1694 = vst [vmem:[%s1693] sm:$0xff] %v1692
        %s1695 = smul.u32 3, 4
        %s1696 = smul.addr %s1695, 8
        %s1697 = scalar_lea.vmem [#allocation2], %s1696
        %v1698 = vld [vmem:[%s1697] sm:$0xff]
        %v1699 = vld [vmem:[%s1697 + $0x8] sm:$0xff]
        %v1700 = vld [vmem:[%s1697 + $0x10] sm:$0xff]
        %v1701 = vld [vmem:[%s1697 + $0x18] sm:$0xff]
        %1702 = vmatprep.subr.mxu0 %v1096
        %1703 = vmatpush1.msra.mxu0 %v1095
        %1704 = vmatprep.subr.mxu0 %v1100
        %1705 = vmatpush1.msra.mxu0 %v1099
        %1706 = vmatprep.subr.mxu0 %v1104
        %1707 = vmatpush1.msra.mxu0 %v1103
        %1708 = vmatprep.subr.mxu0 %v1108
        %1709 = vmatpush1.msra.mxu0 %v1107
        %1710 = vmatprep.subr.mxu0 %v1112
        %1711 = vmatpush1.msra.mxu0 %v1111
        %1712 = vmatprep.subr.mxu0 %v1116
        %1713 = vmatpush1.msra.mxu0 %v1115
        %1714 = vmatprep.subr.mxu0 %v1120
        %1715 = vmatpush1.msra.mxu0 %v1119
        %1716 = vmatprep.subr.mxu0 %v1124
        %1717 = vmatpush1.msra.mxu0 %v1123
        %1718 = vmatprep.subr.mxu0 %v1128
        %1719 = vmatpush1.msra.mxu0 %v1127
        %1720 = vmatprep.subr.mxu0 %v1132
        %1721 = vmatpush1.msra.mxu0 %v1131
        %1722 = vmatprep.subr.mxu0 %v1136
        %1723 = vmatpush1.msra.mxu0 %v1135
        %1724 = vmatprep.subr.mxu0 %v1140
        %1725 = vmatpush1.msra.mxu0 %v1139
        %1726 = vmatprep.subr.mxu0 %v1144
        %1727 = vmatpush1.msra.mxu0 %v1143
        %1728 = vmatprep.subr.mxu0 %v1148
        %1729 = vmatpush1.msra.mxu0 %v1147
        %1730 = vmatprep.subr.mxu0 %v1152
        %1731 = vmatpush1.msra.mxu0 %v1151
        %1732 = vmatprep.subr.mxu0 %v1156
        %1733 = vmatpush1.msra.mxu0 %v1155
        %1734 = vmatprep.subr.mxu0 0.0
        %1735 = vmatpush1.msra.mxu0 0.0
        %1736 = vmatprep.subr.mxu0 0.0
        %1737 = vmatpush1.msra.mxu0 0.0
        %1738 = vmatprep.subr.mxu0 0.0
        %1739 = vmatpush1.msra.mxu0 0.0
        %1740 = vmatprep.subr.mxu0 0.0
        %1741 = vmatpush1.msra.mxu0 0.0
        %1742 = vmatprep.subr.mxu0 0.0
        %1743 = vmatpush1.msra.mxu0 0.0
        %1744 = vmatprep.subr.mxu0 0.0
        %1745 = vmatpush1.msra.mxu0 0.0
        %1746 = vmatprep.subr.mxu0 0.0
        %1747 = vmatpush1.msra.mxu0 0.0
        %1748 = vmatprep.subr.mxu0 0.0
        %1749 = vmatpush1.msra.mxu0 0.0
        %1750 = vmatprep.subr.mxu0 0.0
        %1751 = vmatpush1.msra.mxu0 0.0
        %1752 = vmatprep.subr.mxu0 0.0
        %1753 = vmatpush1.msra.mxu0 0.0
        %1754 = vmatprep.subr.mxu0 0.0
        %1755 = vmatpush1.msra.mxu0 0.0
        %1756 = vmatprep.subr.mxu0 0.0
        %1757 = vmatpush1.msra.mxu0 0.0
        %1758 = vmatprep.subr.mxu0 0.0
        %1759 = vmatpush1.msra.mxu0 0.0
        %1760 = vmatprep.subr.mxu0 0.0
        %1761 = vmatpush1.msra.mxu0 0.0
        %1762 = vmatprep.subr.mxu0 0.0
        %1763 = vmatpush1.msra.mxu0 0.0
        %1764 = vmatprep.subr.mxu0 0.0
        %1765 = vmatpush1.msra.mxu0 0.0
        %1766 = vmatprep.mubr.f32.mxu0 0.0
        %1767 = vmatmul.mubr.f32.gmra.mrb[0].mxu0 %v1692
        %v1768 = vpop.f32.mrb[0].mxu0
        %v1769 = vadd.f32 0.0, %v1768
        %v1770 = vpop.f32.mrb[0].mxu0
        %v1771 = vadd.f32 0.0, %v1770
        %1772 = vdwg.mxu0
        %1773 = vmatprep.subr.mxu0 %v1098
        %1774 = vmatpush1.msra.mxu0 %v1097
        %1775 = vmatprep.subr.mxu0 %v1102
        %1776 = vmatpush1.msra.mxu0 %v1101
        %1777 = vmatprep.subr.mxu0 %v1106
        %1778 = vmatpush1.msra.mxu0 %v1105
        %1779 = vmatprep.subr.mxu0 %v1110
        %1780 = vmatpush1.msra.mxu0 %v1109
        %1781 = vmatprep.subr.mxu0 %v1114
        %1782 = vmatpush1.msra.mxu0 %v1113
        %1783 = vmatprep.subr.mxu0 %v1118
        %1784 = vmatpush1.msra.mxu0 %v1117
        %1785 = vmatprep.subr.mxu0 %v1122
        %1786 = vmatpush1.msra.mxu0 %v1121
        %1787 = vmatprep.subr.mxu0 %v1126
        %1788 = vmatpush1.msra.mxu0 %v1125
        %1789 = vmatprep.subr.mxu0 %v1130
        %1790 = vmatpush1.msra.mxu0 %v1129
        %1791 = vmatprep.subr.mxu0 %v1134
        %1792 = vmatpush1.msra.mxu0 %v1133
        %1793 = vmatprep.subr.mxu0 %v1138
        %1794 = vmatpush1.msra.mxu0 %v1137
        %1795 = vmatprep.subr.mxu0 %v1142
        %1796 = vmatpush1.msra.mxu0 %v1141
        %1797 = vmatprep.subr.mxu0 %v1146
        %1798 = vmatpush1.msra.mxu0 %v1145
        %1799 = vmatprep.subr.mxu0 %v1150
        %1800 = vmatpush1.msra.mxu0 %v1149
        %1801 = vmatprep.subr.mxu0 %v1154
        %1802 = vmatpush1.msra.mxu0 %v1153
        %1803 = vmatprep.subr.mxu0 %v1158
        %1804 = vmatpush1.msra.mxu0 %v1157
        %1805 = vmatprep.subr.mxu0 0.0
        %1806 = vmatpush1.msra.mxu0 0.0
        %1807 = vmatprep.subr.mxu0 0.0
        %1808 = vmatpush1.msra.mxu0 0.0
        %1809 = vmatprep.subr.mxu0 0.0
        %1810 = vmatpush1.msra.mxu0 0.0
        %1811 = vmatprep.subr.mxu0 0.0
        %1812 = vmatpush1.msra.mxu0 0.0
        %1813 = vmatprep.subr.mxu0 0.0
        %1814 = vmatpush1.msra.mxu0 0.0
        %1815 = vmatprep.subr.mxu0 0.0
        %1816 = vmatpush1.msra.mxu0 0.0
        %1817 = vmatprep.subr.mxu0 0.0
        %1818 = vmatpush1.msra.mxu0 0.0
        %1819 = vmatprep.subr.mxu0 0.0
        %1820 = vmatpush1.msra.mxu0 0.0
        %1821 = vmatprep.subr.mxu0 0.0
        %1822 = vmatpush1.msra.mxu0 0.0
        %1823 = vmatprep.subr.mxu0 0.0
        %1824 = vmatpush1.msra.mxu0 0.0
        %1825 = vmatprep.subr.mxu0 0.0
        %1826 = vmatpush1.msra.mxu0 0.0
        %1827 = vmatprep.subr.mxu0 0.0
        %1828 = vmatpush1.msra.mxu0 0.0
        %1829 = vmatprep.subr.mxu0 0.0
        %1830 = vmatpush1.msra.mxu0 0.0
        %1831 = vmatprep.subr.mxu0 0.0
        %1832 = vmatpush1.msra.mxu0 0.0
        %1833 = vmatprep.subr.mxu0 0.0
        %1834 = vmatpush1.msra.mxu0 0.0
        %1835 = vmatprep.subr.mxu0 0.0
        %1836 = vmatpush1.msra.mxu0 0.0
        %1837 = vmatprep.mubr.f32.mxu0 0.0
        %1838 = vmatmul.mubr.f32.gmra.mrb[0].mxu0 %v1692
        %v1839 = vpop.f32.mrb[0].mxu0
        %v1840 = vadd.f32 0.0, %v1839
        %v1841 = vpop.f32.mrb[0].mxu0
        %v1842 = vadd.f32 0.0, %v1841
        %1843 = vdwg.mxu0
        %v1844 = vadd.f32 %v1698, %v1769
        %v1845 = vadd.f32 %v1699, %v1771
        %v1846 = vadd.f32 %v1700, %v1840
        %v1847 = vadd.f32 %v1701, %v1842
        %v1848 = vxor.u32 %v1844, 2147483648
        %v1849 = vmul.f32 %v1848, 1.442695
        %v1850 = vpow.pop %v1849
        %v1851 = vadd.f32 %v1850, 1.0
        %v1852 = vrcp.pop %v1851
        %v1853 = vmul.f32 1.0, %v1852
        %v1854 = vxor.u32 %v1845, 2147483648
        %v1855 = vmul.f32 %v1854, 1.442695
        %v1856 = vpow.pop %v1855
        %v1857 = vadd.f32 %v1856, 1.0
        %v1858 = vrcp.pop %v1857
        %v1859 = vmul.f32 1.0, %v1858
        %v1860 = vtanh.pop %v1846
        %v1861 = vxor.u32 %v1847, 2147483648
        %v1862 = vmul.f32 %v1861, 1.442695
        %v1863 = vpow.pop %v1862
        %v1864 = vadd.f32 %v1863, 1.0
        %v1865 = vrcp.pop %v1864
        %v1866 = vmul.f32 1.0, %v1865
        %v1867 = vmul.f32 %v1859, %v1690
        %v1868 = vmul.f32 %v1853, %v1860
        %v1869 = vadd.f32 %v1867, %v1868
        %v1870 = vtanh.pop %v1869
        %v1871 = vmul.f32 %v1866, %v1870
        %s1872 = scalar_lea.vmem [#allocation10], 24
        %1873 = vst [vmem:[%s1872] sm:$0xff] %v1871
        %s1874 = smul.u32 4, 4
        %s1875 = smul.addr %s1874, 8
        %s1876 = scalar_lea.vmem [#allocation2], %s1875
        %v1877 = vld [vmem:[%s1876] sm:$0xff]
        %v1878 = vld [vmem:[%s1876 + $0x8] sm:$0xff]
        %v1879 = vld [vmem:[%s1876 + $0x10] sm:$0xff]
        %v1880 = vld [vmem:[%s1876 + $0x18] sm:$0xff]
        %1881 = vmatprep.subr.mxu0 %v1096
        %1882 = vmatpush1.msra.mxu0 %v1095
        %1883 = vmatprep.subr.mxu0 %v1100
        %1884 = vmatpush1.msra.mxu0 %v1099
        %1885 = vmatprep.subr.mxu0 %v1104
        %1886 = vmatpush1.msra.mxu0 %v1103
        %1887 = vmatprep.subr.mxu0 %v1108
        %1888 = vmatpush1.msra.mxu0 %v1107
        %1889 = vmatprep.subr.mxu0 %v1112
        %1890 = vmatpush1.msra.mxu0 %v1111
        %1891 = vmatprep.subr.mxu0 %v1116
        %1892 = vmatpush1.msra.mxu0 %v1115
        %1893 = vmatprep.subr.mxu0 %v1120
        %1894 = vmatpush1.msra.mxu0 %v1119
        %1895 = vmatprep.subr.mxu0 %v1124
        %1896 = vmatpush1.msra.mxu0 %v1123
        %1897 = vmatprep.subr.mxu0 %v1128
        %1898 = vmatpush1.msra.mxu0 %v1127
        %1899 = vmatprep.subr.mxu0 %v1132
        %1900 = vmatpush1.msra.mxu0 %v1131
        %1901 = vmatprep.subr.mxu0 %v1136
        %1902 = vmatpush1.msra.mxu0 %v1135
        %1903 = vmatprep.subr.mxu0 %v1140
        %1904 = vmatpush1.msra.mxu0 %v1139
        %1905 = vmatprep.subr.mxu0 %v1144
        %1906 = vmatpush1.msra.mxu0 %v1143
        %1907 = vmatprep.subr.mxu0 %v1148
        %1908 = vmatpush1.msra.mxu0 %v1147
        %1909 = vmatprep.subr.mxu0 %v1152
        %1910 = vmatpush1.msra.mxu0 %v1151
        %1911 = vmatprep.subr.mxu0 %v1156
        %1912 = vmatpush1.msra.mxu0 %v1155
        %1913 = vmatprep.subr.mxu0 0.0
        %1914 = vmatpush1.msra.mxu0 0.0
        %1915 = vmatprep.subr.mxu0 0.0
        %1916 = vmatpush1.msra.mxu0 0.0
        %1917 = vmatprep.subr.mxu0 0.0
        %1918 = vmatpush1.msra.mxu0 0.0
        %1919 = vmatprep.subr.mxu0 0.0
        %1920 = vmatpush1.msra.mxu0 0.0
        %1921 = vmatprep.subr.mxu0 0.0
        %1922 = vmatpush1.msra.mxu0 0.0
        %1923 = vmatprep.subr.mxu0 0.0
        %1924 = vmatpush1.msra.mxu0 0.0
        %1925 = vmatprep.subr.mxu0 0.0
        %1926 = vmatpush1.msra.mxu0 0.0
        %1927 = vmatprep.subr.mxu0 0.0
        %1928 = vmatpush1.msra.mxu0 0.0
        %1929 = vmatprep.subr.mxu0 0.0
        %1930 = vmatpush1.msra.mxu0 0.0
        %1931 = vmatprep.subr.mxu0 0.0
        %1932 = vmatpush1.msra.mxu0 0.0
        %1933 = vmatprep.subr.mxu0 0.0
        %1934 = vmatpush1.msra.mxu0 0.0
        %1935 = vmatprep.subr.mxu0 0.0
        %1936 = vmatpush1.msra.mxu0 0.0
        %1937 = vmatprep.subr.mxu0 0.0
        %1938 = vmatpush1.msra.mxu0 0.0
        %1939 = vmatprep.subr.mxu0 0.0
        %1940 = vmatpush1.msra.mxu0 0.0
        %1941 = vmatprep.subr.mxu0 0.0
        %1942 = vmatpush1.msra.mxu0 0.0
        %1943 = vmatprep.subr.mxu0 0.0
        %1944 = vmatpush1.msra.mxu0 0.0
        %1945 = vmatprep.mubr.f32.mxu0 0.0
        %1946 = vmatmul.mubr.f32.gmra.mrb[0].mxu0 %v1871
        %v1947 = vpop.f32.mrb[0].mxu0
        %v1948 = vadd.f32 0.0, %v1947
        %v1949 = vpop.f32.mrb[0].mxu0
        %v1950 = vadd.f32 0.0, %v1949
        %1951 = vdwg.mxu0
        %1952 = vmatprep.subr.mxu0 %v1098
        %1953 = vmatpush1.msra.mxu0 %v1097
        %1954 = vmatprep.subr.mxu0 %v1102
        %1955 = vmatpush1.msra.mxu0 %v1101
        %1956 = vmatprep.subr.mxu0 %v1106
        %1957 = vmatpush1.msra.mxu0 %v1105
        %1958 = vmatprep.subr.mxu0 %v1110
        %1959 = vmatpush1.msra.mxu0 %v1109
        %1960 = vmatprep.subr.mxu0 %v1114
        %1961 = vmatpush1.msra.mxu0 %v1113
        %1962 = vmatprep.subr.mxu0 %v1118
        %1963 = vmatpush1.msra.mxu0 %v1117
        %1964 = vmatprep.subr.mxu0 %v1122
        %1965 = vmatpush1.msra.mxu0 %v1121
        %1966 = vmatprep.subr.mxu0 %v1126
        %1967 = vmatpush1.msra.mxu0 %v1125
        %1968 = vmatprep.subr.mxu0 %v1130
        %1969 = vmatpush1.msra.mxu0 %v1129
        %1970 = vmatprep.subr.mxu0 %v1134
        %1971 = vmatpush1.msra.mxu0 %v1133
        %1972 = vmatprep.subr.mxu0 %v1138
        %1973 = vmatpush1.msra.mxu0 %v1137
        %1974 = vmatprep.subr.mxu0 %v1142
        %1975 = vmatpush1.msra.mxu0 %v1141
        %1976 = vmatprep.subr.mxu0 %v1146
        %1977 = vmatpush1.msra.mxu0 %v1145
        %1978 = vmatprep.subr.mxu0 %v1150
        %1979 = vmatpush1.msra.mxu0 %v1149
        %1980 = vmatprep.subr.mxu0 %v1154
        %1981 = vmatpush1.msra.mxu0 %v1153
        %1982 = vmatprep.subr.mxu0 %v1158
        %1983 = vmatpush1.msra.mxu0 %v1157
        %1984 = vmatprep.subr.mxu0 0.0
        %1985 = vmatpush1.msra.mxu0 0.0
        %1986 = vmatprep.subr.mxu0 0.0
        %1987 = vmatpush1.msra.mxu0 0.0
        %1988 = vmatprep.subr.mxu0 0.0
        %1989 = vmatpush1.msra.mxu0 0.0
        %1990 = vmatprep.subr.mxu0 0.0
        %1991 = vmatpush1.msra.mxu0 0.0
        %1992 = vmatprep.subr.mxu0 0.0
        %1993 = vmatpush1.msra.mxu0 0.0
        %1994 = vmatprep.subr.mxu0 0.0
        %1995 = vmatpush1.msra.mxu0 0.0
        %1996 = vmatprep.subr.mxu0 0.0
        %1997 = vmatpush1.msra.mxu0 0.0
        %1998 = vmatprep.subr.mxu0 0.0
        %1999 = vmatpush1.msra.mxu0 0.0
        %2000 = vmatprep.subr.mxu0 0.0
        %2001 = vmatpush1.msra.mxu0 0.0
        %2002 = vmatprep.subr.mxu0 0.0
        %2003 = vmatpush1.msra.mxu0 0.0
        %2004 = vmatprep.subr.mxu0 0.0
        %2005 = vmatpush1.msra.mxu0 0.0
        %2006 = vmatprep.subr.mxu0 0.0
        %2007 = vmatpush1.msra.mxu0 0.0
        %2008 = vmatprep.subr.mxu0 0.0
        %2009 = vmatpush1.msra.mxu0 0.0
        %2010 = vmatprep.subr.mxu0 0.0
        %2011 = vmatpush1.msra.mxu0 0.0
        %2012 = vmatprep.subr.mxu0 0.0
        %2013 = vmatpush1.msra.mxu0 0.0
        %2014 = vmatprep.subr.mxu0 0.0
        %2015 = vmatpush1.msra.mxu0 0.0
        %2016 = vmatprep.mubr.f32.mxu0 0.0
        %2017 = vmatmul.mubr.f32.gmra.mrb[0].mxu0 %v1871
        %v2018 = vpop.f32.mrb[0].mxu0
        %v2019 = vadd.f32 0.0, %v2018
        %v2020 = vpop.f32.mrb[0].mxu0
        %v2021 = vadd.f32 0.0, %v2020
        %2022 = vdwg.mxu0
        %v2023 = vadd.f32 %v1877, %v1948
        %v2024 = vadd.f32 %v1878, %v1950
        %v2025 = vadd.f32 %v1879, %v2019
        %v2026 = vadd.f32 %v1880, %v2021
        %v2027 = vxor.u32 %v2023, 2147483648
        %v2028 = vmul.f32 %v2027, 1.442695
        %v2029 = vpow.pop %v2028
        %v2030 = vadd.f32 %v2029, 1.0
        %v2031 = vrcp.pop %v2030
        %v2032 = vmul.f32 1.0, %v2031
        %v2033 = vxor.u32 %v2024, 2147483648
        %v2034 = vmul.f32 %v2033, 1.442695
        %v2035 = vpow.pop %v2034
        %v2036 = vadd.f32 %v2035, 1.0
        %v2037 = vrcp.pop %v2036
        %v2038 = vmul.f32 1.0, %v2037
        %v2039 = vtanh.pop %v2025
        %v2040 = vxor.u32 %v2026, 2147483648
        %v2041 = vmul.f32 %v2040, 1.442695
        %v2042 = vpow.pop %v2041
        %v2043 = vadd.f32 %v2042, 1.0
        %v2044 = vrcp.pop %v2043
        %v2045 = vmul.f32 1.0, %v2044
        %v2046 = vmul.f32 %v2038, %v1869
        %v2047 = vmul.f32 %v2032, %v2039
        %v2048 = vadd.f32 %v2046, %v2047
        %v2049 = vtanh.pop %v2048
        %v2050 = vmul.f32 %v2045, %v2049
        %s2051 = scalar_lea.vmem [#allocation10], 32
        %2052 = vst [vmem:[%s2051] sm:$0xff] %v2050
        %s2053 = smul.u32 5, 4
        %s2054 = smul.addr %s2053, 8
        %s2055 = scalar_lea.vmem [#allocation2], %s2054
        %v2056 = vld [vmem:[%s2055] sm:$0xff]
        %v2057 = vld [vmem:[%s2055 + $0x8] sm:$0xff]
        %v2058 = vld [vmem:[%s2055 + $0x10] sm:$0xff]
        %v2059 = vld [vmem:[%s2055 + $0x18] sm:$0xff]
        %2060 = vmatprep.subr.mxu0 %v1096
        %2061 = vmatpush1.msra.mxu0 %v1095
        %2062 = vmatprep.subr.mxu0 %v1100
        %2063 = vmatpush1.msra.mxu0 %v1099
        %2064 = vmatprep.subr.mxu0 %v1104
        %2065 = vmatpush1.msra.mxu0 %v1103
        %2066 = vmatprep.subr.mxu0 %v1108
        %2067 = vmatpush1.msra.mxu0 %v1107
        %2068 = vmatprep.subr.mxu0 %v1112
        %2069 = vmatpush1.msra.mxu0 %v1111
        %2070 = vmatprep.subr.mxu0 %v1116
        %2071 = vmatpush1.msra.mxu0 %v1115
        %2072 = vmatprep.subr.mxu0 %v1120
        %2073 = vmatpush1.msra.mxu0 %v1119
        %2074 = vmatprep.subr.mxu0 %v1124
        %2075 = vmatpush1.msra.mxu0 %v1123
        %2076 = vmatprep.subr.mxu0 %v1128
        %2077 = vmatpush1.msra.mxu0 %v1127
        %2078 = vmatprep.subr.mxu0 %v1132
        %2079 = vmatpush1.msra.mxu0 %v1131
        %2080 = vmatprep.subr.mxu0 %v1136
        %2081 = vmatpush1.msra.mxu0 %v1135
        %2082 = vmatprep.subr.mxu0 %v1140
        %2083 = vmatpush1.msra.mxu0 %v1139
        %2084 = vmatprep.subr.mxu0 %v1144
        %2085 = vmatpush1.msra.mxu0 %v1143
        %2086 = vmatprep.subr.mxu0 %v1148
        %2087 = vmatpush1.msra.mxu0 %v1147
        %2088 = vmatprep.subr.mxu0 %v1152
        %2089 = vmatpush1.msra.mxu0 %v1151
        %2090 = vmatprep.subr.mxu0 %v1156
        %2091 = vmatpush1.msra.mxu0 %v1155
        %2092 = vmatprep.subr.mxu0 0.0
        %2093 = vmatpush1.msra.mxu0 0.0
        %2094 = vmatprep.subr.mxu0 0.0
        %2095 = vmatpush1.msra.mxu0 0.0
        %2096 = vmatprep.subr.mxu0 0.0
        %2097 = vmatpush1.msra.mxu0 0.0
        %2098 = vmatprep.subr.mxu0 0.0
        %2099 = vmatpush1.msra.mxu0 0.0
        %2100 = vmatprep.subr.mxu0 0.0
        %2101 = vmatpush1.msra.mxu0 0.0
        %2102 = vmatprep.subr.mxu0 0.0
        %2103 = vmatpush1.msra.mxu0 0.0
        %2104 = vmatprep.subr.mxu0 0.0
        %2105 = vmatpush1.msra.mxu0 0.0
        %2106 = vmatprep.subr.mxu0 0.0
        %2107 = vmatpush1.msra.mxu0 0.0
        %2108 = vmatprep.subr.mxu0 0.0
        %2109 = vmatpush1.msra.mxu0 0.0
        %2110 = vmatprep.subr.mxu0 0.0
        %2111 = vmatpush1.msra.mxu0 0.0
        %2112 = vmatprep.subr.mxu0 0.0
        %2113 = vmatpush1.msra.mxu0 0.0
        %2114 = vmatprep.subr.mxu0 0.0
        %2115 = vmatpush1.msra.mxu0 0.0
        %2116 = vmatprep.subr.mxu0 0.0
        %2117 = vmatpush1.msra.mxu0 0.0
        %2118 = vmatprep.subr.mxu0 0.0
        %2119 = vmatpush1.msra.mxu0 0.0
        %2120 = vmatprep.subr.mxu0 0.0
        %2121 = vmatpush1.msra.mxu0 0.0
        %2122 = vmatprep.subr.mxu0 0.0
        %2123 = vmatpush1.msra.mxu0 0.0
        %2124 = vmatprep.mubr.f32.mxu0 0.0
        %2125 = vmatmul.mubr.f32.gmra.mrb[0].mxu0 %v2050
        %v2126 = vpop.f32.mrb[0].mxu0
        %v2127 = vadd.f32 0.0, %v2126
        %v2128 = vpop.f32.mrb[0].mxu0
        %v2129 = vadd.f32 0.0, %v2128
        %2130 = vdwg.mxu0
        %2131 = vmatprep.subr.mxu0 %v1098
        %2132 = vmatpush1.msra.mxu0 %v1097
        %2133 = vmatprep.subr.mxu0 %v1102
        %2134 = vmatpush1.msra.mxu0 %v1101
        %2135 = vmatprep.subr.mxu0 %v1106
        %2136 = vmatpush1.msra.mxu0 %v1105
        %2137 = vmatprep.subr.mxu0 %v1110
        %2138 = vmatpush1.msra.mxu0 %v1109
        %2139 = vmatprep.subr.mxu0 %v1114
        %2140 = vmatpush1.msra.mxu0 %v1113
        %2141 = vmatprep.subr.mxu0 %v1118
        %2142 = vmatpush1.msra.mxu0 %v1117
        %2143 = vmatprep.subr.mxu0 %v1122
        %2144 = vmatpush1.msra.mxu0 %v1121
        %2145 = vmatprep.subr.mxu0 %v1126
        %2146 = vmatpush1.msra.mxu0 %v1125
        %2147 = vmatprep.subr.mxu0 %v1130
        %2148 = vmatpush1.msra.mxu0 %v1129
        %2149 = vmatprep.subr.mxu0 %v1134
        %2150 = vmatpush1.msra.mxu0 %v1133
        %2151 = vmatprep.subr.mxu0 %v1138
        %2152 = vmatpush1.msra.mxu0 %v1137
        %2153 = vmatprep.subr.mxu0 %v1142
        %2154 = vmatpush1.msra.mxu0 %v1141
        %2155 = vmatprep.subr.mxu0 %v1146
        %2156 = vmatpush1.msra.mxu0 %v1145
        %2157 = vmatprep.subr.mxu0 %v1150
        %2158 = vmatpush1.msra.mxu0 %v1149
        %2159 = vmatprep.subr.mxu0 %v1154
        %2160 = vmatpush1.msra.mxu0 %v1153
        %2161 = vmatprep.subr.mxu0 %v1158
        %2162 = vmatpush1.msra.mxu0 %v1157
        %2163 = vmatprep.subr.mxu0 0.0
        %2164 = vmatpush1.msra.mxu0 0.0
        %2165 = vmatprep.subr.mxu0 0.0
        %2166 = vmatpush1.msra.mxu0 0.0
        %2167 = vmatprep.subr.mxu0 0.0
        %2168 = vmatpush1.msra.mxu0 0.0
        %2169 = vmatprep.subr.mxu0 0.0
        %2170 = vmatpush1.msra.mxu0 0.0
        %2171 = vmatprep.subr.mxu0 0.0
        %2172 = vmatpush1.msra.mxu0 0.0
        %2173 = vmatprep.subr.mxu0 0.0
        %2174 = vmatpush1.msra.mxu0 0.0
        %2175 = vmatprep.subr.mxu0 0.0
        %2176 = vmatpush1.msra.mxu0 0.0
        %2177 = vmatprep.subr.mxu0 0.0
        %2178 = vmatpush1.msra.mxu0 0.0
        %2179 = vmatprep.subr.mxu0 0.0
        %2180 = vmatpush1.msra.mxu0 0.0
        %2181 = vmatprep.subr.mxu0 0.0
        %2182 = vmatpush1.msra.mxu0 0.0
        %2183 = vmatprep.subr.mxu0 0.0
        %2184 = vmatpush1.msra.mxu0 0.0
        %2185 = vmatprep.subr.mxu0 0.0
        %2186 = vmatpush1.msra.mxu0 0.0
        %2187 = vmatprep.subr.mxu0 0.0
        %2188 = vmatpush1.msra.mxu0 0.0
        %2189 = vmatprep.subr.mxu0 0.0
        %2190 = vmatpush1.msra.mxu0 0.0
        %2191 = vmatprep.subr.mxu0 0.0
        %2192 = vmatpush1.msra.mxu0 0.0
        %2193 = vmatprep.subr.mxu0 0.0
        %2194 = vmatpush1.msra.mxu0 0.0
        %2195 = vmatprep.mubr.f32.mxu0 0.0
        %2196 = vmatmul.mubr.f32.gmra.mrb[0].mxu0 %v2050
        %v2197 = vpop.f32.mrb[0].mxu0
        %v2198 = vadd.f32 0.0, %v2197
        %v2199 = vpop.f32.mrb[0].mxu0
        %v2200 = vadd.f32 0.0, %v2199
        %2201 = vdwg.mxu0
        %v2202 = vadd.f32 %v2056, %v2127
        %v2203 = vadd.f32 %v2057, %v2129
        %v2204 = vadd.f32 %v2058, %v2198
        %v2205 = vadd.f32 %v2059, %v2200
        %v2206 = vxor.u32 %v2202, 2147483648
        %v2207 = vmul.f32 %v2206, 1.442695
        %v2208 = vpow.pop %v2207
        %v2209 = vadd.f32 %v2208, 1.0
        %v2210 = vrcp.pop %v2209
        %v2211 = vmul.f32 1.0, %v2210
        %v2212 = vxor.u32 %v2203, 2147483648
        %v2213 = vmul.f32 %v2212, 1.442695
        %v2214 = vpow.pop %v2213
        %v2215 = vadd.f32 %v2214, 1.0
        %v2216 = vrcp.pop %v2215
        %v2217 = vmul.f32 1.0, %v2216
        %v2218 = vtanh.pop %v2204
        %v2219 = vxor.u32 %v2205, 2147483648
        %v2220 = vmul.f32 %v2219, 1.442695
        %v2221 = vpow.pop %v2220
        %v2222 = vadd.f32 %v2221, 1.0
        %v2223 = vrcp.pop %v2222
        %v2224 = vmul.f32 1.0, %v2223
        %v2225 = vmul.f32 %v2217, %v2048
        %v2226 = vmul.f32 %v2211, %v2218
        %v2227 = vadd.f32 %v2225, %v2226
        %v2228 = vtanh.pop %v2227
        %v2229 = vmul.f32 %v2224, %v2228
        %s2230 = scalar_lea.vmem [#allocation10], 40
        %2231 = vst [vmem:[%s2230] sm:$0xff] %v2229
        %s2232 = smul.u32 6, 4
        %s2233 = smul.addr %s2232, 8
        %s2234 = scalar_lea.vmem [#allocation2], %s2233
        %v2235 = vld [vmem:[%s2234] sm:$0xff]
        %v2236 = vld [vmem:[%s2234 + $0x8] sm:$0xff]
        %v2237 = vld [vmem:[%s2234 + $0x10] sm:$0xff]
        %v2238 = vld [vmem:[%s2234 + $0x18] sm:$0xff]
        %2239 = vmatprep.subr.mxu0 %v1096
        %2240 = vmatpush1.msra.mxu0 %v1095
        %2241 = vmatprep.subr.mxu0 %v1100
        %2242 = vmatpush1.msra.mxu0 %v1099
        %2243 = vmatprep.subr.mxu0 %v1104
        %2244 = vmatpush1.msra.mxu0 %v1103
        %2245 = vmatprep.subr.mxu0 %v1108
        %2246 = vmatpush1.msra.mxu0 %v1107
        %2247 = vmatprep.subr.mxu0 %v1112
        %2248 = vmatpush1.msra.mxu0 %v1111
        %2249 = vmatprep.subr.mxu0 %v1116
        %2250 = vmatpush1.msra.mxu0 %v1115
        %2251 = vmatprep.subr.mxu0 %v1120
        %2252 = vmatpush1.msra.mxu0 %v1119
        %2253 = vmatprep.subr.mxu0 %v1124
        %2254 = vmatpush1.msra.mxu0 %v1123
        %2255 = vmatprep.subr.mxu0 %v1128
        %2256 = vmatpush1.msra.mxu0 %v1127
        %2257 = vmatprep.subr.mxu0 %v1132
        %2258 = vmatpush1.msra.mxu0 %v1131
        %2259 = vmatprep.subr.mxu0 %v1136
        %2260 = vmatpush1.msra.mxu0 %v1135
        %2261 = vmatprep.subr.mxu0 %v1140
        %2262 = vmatpush1.msra.mxu0 %v1139
        %2263 = vmatprep.subr.mxu0 %v1144
        %2264 = vmatpush1.msra.mxu0 %v1143
        %2265 = vmatprep.subr.mxu0 %v1148
        %2266 = vmatpush1.msra.mxu0 %v1147
        %2267 = vmatprep.subr.mxu0 %v1152
        %2268 = vmatpush1.msra.mxu0 %v1151
        %2269 = vmatprep.subr.mxu0 %v1156
        %2270 = vmatpush1.msra.mxu0 %v1155
        %2271 = vmatprep.subr.mxu0 0.0
        %2272 = vmatpush1.msra.mxu0 0.0
        %2273 = vmatprep.subr.mxu0 0.0
        %2274 = vmatpush1.msra.mxu0 0.0
        %2275 = vmatprep.subr.mxu0 0.0
        %2276 = vmatpush1.msra.mxu0 0.0
        %2277 = vmatprep.subr.mxu0 0.0
        %2278 = vmatpush1.msra.mxu0 0.0
        %2279 = vmatprep.subr.mxu0 0.0
        %2280 = vmatpush1.msra.mxu0 0.0
        %2281 = vmatprep.subr.mxu0 0.0
        %2282 = vmatpush1.msra.mxu0 0.0
        %2283 = vmatprep.subr.mxu0 0.0
        %2284 = vmatpush1.msra.mxu0 0.0
        %2285 = vmatprep.subr.mxu0 0.0
        %2286 = vmatpush1.msra.mxu0 0.0
        %2287 = vmatprep.subr.mxu0 0.0
        %2288 = vmatpush1.msra.mxu0 0.0
        %2289 = vmatprep.subr.mxu0 0.0
        %2290 = vmatpush1.msra.mxu0 0.0
        %2291 = vmatprep.subr.mxu0 0.0
        %2292 = vmatpush1.msra.mxu0 0.0
        %2293 = vmatprep.subr.mxu0 0.0
        %2294 = vmatpush1.msra.mxu0 0.0
        %2295 = vmatprep.subr.mxu0 0.0
        %2296 = vmatpush1.msra.mxu0 0.0
        %2297 = vmatprep.subr.mxu0 0.0
        %2298 = vmatpush1.msra.mxu0 0.0
        %2299 = vmatprep.subr.mxu0 0.0
        %2300 = vmatpush1.msra.mxu0 0.0
        %2301 = vmatprep.subr.mxu0 0.0
        %2302 = vmatpush1.msra.mxu0 0.0
        %2303 = vmatprep.mubr.f32.mxu0 0.0
        %2304 = vmatmul.mubr.f32.gmra.mrb[0].mxu0 %v2229
        %v2305 = vpop.f32.mrb[0].mxu0
        %v2306 = vadd.f32 0.0, %v2305
        %v2307 = vpop.f32.mrb[0].mxu0
        %v2308 = vadd.f32 0.0, %v2307
        %2309 = vdwg.mxu0
        %2310 = vmatprep.subr.mxu0 %v1098
        %2311 = vmatpush1.msra.mxu0 %v1097
        %2312 = vmatprep.subr.mxu0 %v1102
        %2313 = vmatpush1.msra.mxu0 %v1101
        %2314 = vmatprep.subr.mxu0 %v1106
        %2315 = vmatpush1.msra.mxu0 %v1105
        %2316 = vmatprep.subr.mxu0 %v1110
        %2317 = vmatpush1.msra.mxu0 %v1109
        %2318 = vmatprep.subr.mxu0 %v1114
        %2319 = vmatpush1.msra.mxu0 %v1113
        %2320 = vmatprep.subr.mxu0 %v1118
        %2321 = vmatpush1.msra.mxu0 %v1117
        %2322 = vmatprep.subr.mxu0 %v1122
        %2323 = vmatpush1.msra.mxu0 %v1121
        %2324 = vmatprep.subr.mxu0 %v1126
        %2325 = vmatpush1.msra.mxu0 %v1125
        %2326 = vmatprep.subr.mxu0 %v1130
        %2327 = vmatpush1.msra.mxu0 %v1129
        %2328 = vmatprep.subr.mxu0 %v1134
        %2329 = vmatpush1.msra.mxu0 %v1133
        %2330 = vmatprep.subr.mxu0 %v1138
        %2331 = vmatpush1.msra.mxu0 %v1137
        %2332 = vmatprep.subr.mxu0 %v1142
        %2333 = vmatpush1.msra.mxu0 %v1141
        %2334 = vmatprep.subr.mxu0 %v1146
        %2335 = vmatpush1.msra.mxu0 %v1145
        %2336 = vmatprep.subr.mxu0 %v1150
        %2337 = vmatpush1.msra.mxu0 %v1149
        %2338 = vmatprep.subr.mxu0 %v1154
        %2339 = vmatpush1.msra.mxu0 %v1153
        %2340 = vmatprep.subr.mxu0 %v1158
        %2341 = vmatpush1.msra.mxu0 %v1157
        %2342 = vmatprep.subr.mxu0 0.0
        %2343 = vmatpush1.msra.mxu0 0.0
        %2344 = vmatprep.subr.mxu0 0.0
        %2345 = vmatpush1.msra.mxu0 0.0
        %2346 = vmatprep.subr.mxu0 0.0
        %2347 = vmatpush1.msra.mxu0 0.0
        %2348 = vmatprep.subr.mxu0 0.0
        %2349 = vmatpush1.msra.mxu0 0.0
        %2350 = vmatprep.subr.mxu0 0.0
        %2351 = vmatpush1.msra.mxu0 0.0
        %2352 = vmatprep.subr.mxu0 0.0
        %2353 = vmatpush1.msra.mxu0 0.0
        %2354 = vmatprep.subr.mxu0 0.0
        %2355 = vmatpush1.msra.mxu0 0.0
        %2356 = vmatprep.subr.mxu0 0.0
        %2357 = vmatpush1.msra.mxu0 0.0
        %2358 = vmatprep.subr.mxu0 0.0
        %2359 = vmatpush1.msra.mxu0 0.0
        %2360 = vmatprep.subr.mxu0 0.0
        %2361 = vmatpush1.msra.mxu0 0.0
        %2362 = vmatprep.subr.mxu0 0.0
        %2363 = vmatpush1.msra.mxu0 0.0
        %2364 = vmatprep.subr.mxu0 0.0
        %2365 = vmatpush1.msra.mxu0 0.0
        %2366 = vmatprep.subr.mxu0 0.0
        %2367 = vmatpush1.msra.mxu0 0.0
        %2368 = vmatprep.subr.mxu0 0.0
        %2369 = vmatpush1.msra.mxu0 0.0
        %2370 = vmatprep.subr.mxu0 0.0
        %2371 = vmatpush1.msra.mxu0 0.0
        %2372 = vmatprep.subr.mxu0 0.0
        %2373 = vmatpush1.msra.mxu0 0.0
        %2374 = vmatprep.mubr.f32.mxu0 0.0
        %2375 = vmatmul.mubr.f32.gmra.mrb[0].mxu0 %v2229
        %v2376 = vpop.f32.mrb[0].mxu0
        %v2377 = vadd.f32 0.0, %v2376
        %v2378 = vpop.f32.mrb[0].mxu0
        %v2379 = vadd.f32 0.0, %v2378
        %2380 = vdwg.mxu0
        %v2381 = vadd.f32 %v2235, %v2306
        %v2382 = vadd.f32 %v2236, %v2308
        %v2383 = vadd.f32 %v2237, %v2377
        %v2384 = vadd.f32 %v2238, %v2379
        %v2385 = vxor.u32 %v2381, 2147483648
        %v2386 = vmul.f32 %v2385, 1.442695
        %v2387 = vpow.pop %v2386
        %v2388 = vadd.f32 %v2387, 1.0
        %v2389 = vrcp.pop %v2388
        %v2390 = vmul.f32 1.0, %v2389
        %v2391 = vxor.u32 %v2382, 2147483648
        %v2392 = vmul.f32 %v2391, 1.442695
        %v2393 = vpow.pop %v2392
        %v2394 = vadd.f32 %v2393, 1.0
        %v2395 = vrcp.pop %v2394
        %v2396 = vmul.f32 1.0, %v2395
        %v2397 = vtanh.pop %v2383
        %v2398 = vxor.u32 %v2384, 2147483648
        %v2399 = vmul.f32 %v2398, 1.442695
        %v2400 = vpow.pop %v2399
        %v2401 = vadd.f32 %v2400, 1.0
        %v2402 = vrcp.pop %v2401
        %v2403 = vmul.f32 1.0, %v2402
        %v2404 = vmul.f32 %v2396, %v2227
        %v2405 = vmul.f32 %v2390, %v2397
        %v2406 = vadd.f32 %v2404, %v2405
        %v2407 = vtanh.pop %v2406
        %v2408 = vmul.f32 %v2403, %v2407
        %s2409 = scalar_lea.vmem [#allocation10], 48
        %2410 = vst [vmem:[%s2409] sm:$0xff] %v2408
        %s2411 = smul.u32 7, 4
        %s2412 = smul.addr %s2411, 8
        %s2413 = scalar_lea.vmem [#allocation2], %s2412
        %v2414 = vld [vmem:[%s2413] sm:$0xff]
        %v2415 = vld [vmem:[%s2413 + $0x8] sm:$0xff]
        %v2416 = vld [vmem:[%s2413 + $0x10] sm:$0xff]
        %v2417 = vld [vmem:[%s2413 + $0x18] sm:$0xff]
        %2418 = vmatprep.subr.mxu0 %v1096
        %2419 = vmatpush1.msra.mxu0 %v1095
        %2420 = vmatprep.subr.mxu0 %v1100
        %2421 = vmatpush1.msra.mxu0 %v1099
        %2422 = vmatprep.subr.mxu0 %v1104
        %2423 = vmatpush1.msra.mxu0 %v1103
        %2424 = vmatprep.subr.mxu0 %v1108
        %2425 = vmatpush1.msra.mxu0 %v1107
        %2426 = vmatprep.subr.mxu0 %v1112
        %2427 = vmatpush1.msra.mxu0 %v1111
        %2428 = vmatprep.subr.mxu0 %v1116
        %2429 = vmatpush1.msra.mxu0 %v1115
        %2430 = vmatprep.subr.mxu0 %v1120
        %2431 = vmatpush1.msra.mxu0 %v1119
        %2432 = vmatprep.subr.mxu0 %v1124
        %2433 = vmatpush1.msra.mxu0 %v1123
        %2434 = vmatprep.subr.mxu0 %v1128
        %2435 = vmatpush1.msra.mxu0 %v1127
        %2436 = vmatprep.subr.mxu0 %v1132
        %2437 = vmatpush1.msra.mxu0 %v1131
        %2438 = vmatprep.subr.mxu0 %v1136
        %2439 = vmatpush1.msra.mxu0 %v1135
        %2440 = vmatprep.subr.mxu0 %v1140
        %2441 = vmatpush1.msra.mxu0 %v1139
        %2442 = vmatprep.subr.mxu0 %v1144
        %2443 = vmatpush1.msra.mxu0 %v1143
        %2444 = vmatprep.subr.mxu0 %v1148
        %2445 = vmatpush1.msra.mxu0 %v1147
        %2446 = vmatprep.subr.mxu0 %v1152
        %2447 = vmatpush1.msra.mxu0 %v1151
        %2448 = vmatprep.subr.mxu0 %v1156
        %2449 = vmatpush1.msra.mxu0 %v1155
        %2450 = vmatprep.subr.mxu0 0.0
        %2451 = vmatpush1.msra.mxu0 0.0
        %2452 = vmatprep.subr.mxu0 0.0
        %2453 = vmatpush1.msra.mxu0 0.0
        %2454 = vmatprep.subr.mxu0 0.0
        %2455 = vmatpush1.msra.mxu0 0.0
        %2456 = vmatprep.subr.mxu0 0.0
        %2457 = vmatpush1.msra.mxu0 0.0
        %2458 = vmatprep.subr.mxu0 0.0
        %2459 = vmatpush1.msra.mxu0 0.0
        %2460 = vmatprep.subr.mxu0 0.0
        %2461 = vmatpush1.msra.mxu0 0.0
        %2462 = vmatprep.subr.mxu0 0.0
        %2463 = vmatpush1.msra.mxu0 0.0
        %2464 = vmatprep.subr.mxu0 0.0
        %2465 = vmatpush1.msra.mxu0 0.0
        %2466 = vmatprep.subr.mxu0 0.0
        %2467 = vmatpush1.msra.mxu0 0.0
        %2468 = vmatprep.subr.mxu0 0.0
        %2469 = vmatpush1.msra.mxu0 0.0
        %2470 = vmatprep.subr.mxu0 0.0
        %2471 = vmatpush1.msra.mxu0 0.0
        %2472 = vmatprep.subr.mxu0 0.0
        %2473 = vmatpush1.msra.mxu0 0.0
        %2474 = vmatprep.subr.mxu0 0.0
        %2475 = vmatpush1.msra.mxu0 0.0
        %2476 = vmatprep.subr.mxu0 0.0
        %2477 = vmatpush1.msra.mxu0 0.0
        %2478 = vmatprep.subr.mxu0 0.0
        %2479 = vmatpush1.msra.mxu0 0.0
        %2480 = vmatprep.subr.mxu0 0.0
        %2481 = vmatpush1.msra.mxu0 0.0
        %2482 = vmatprep.mubr.f32.mxu0 0.0
        %2483 = vmatmul.mubr.f32.gmra.mrb[0].mxu0 %v2408
        %v2484 = vpop.f32.mrb[0].mxu0
        %v2485 = vadd.f32 0.0, %v2484
        %v2486 = vpop.f32.mrb[0].mxu0
        %v2487 = vadd.f32 0.0, %v2486
        %2488 = vdwg.mxu0
        %2489 = vmatprep.subr.mxu0 %v1098
        %2490 = vmatpush1.msra.mxu0 %v1097
        %2491 = vmatprep.subr.mxu0 %v1102
        %2492 = vmatpush1.msra.mxu0 %v1101
        %2493 = vmatprep.subr.mxu0 %v1106
        %2494 = vmatpush1.msra.mxu0 %v1105
        %2495 = vmatprep.subr.mxu0 %v1110
        %2496 = vmatpush1.msra.mxu0 %v1109
        %2497 = vmatprep.subr.mxu0 %v1114
        %2498 = vmatpush1.msra.mxu0 %v1113
        %2499 = vmatprep.subr.mxu0 %v1118
        %2500 = vmatpush1.msra.mxu0 %v1117
        %2501 = vmatprep.subr.mxu0 %v1122
        %2502 = vmatpush1.msra.mxu0 %v1121
        %2503 = vmatprep.subr.mxu0 %v1126
        %2504 = vmatpush1.msra.mxu0 %v1125
        %2505 = vmatprep.subr.mxu0 %v1130
        %2506 = vmatpush1.msra.mxu0 %v1129
        %2507 = vmatprep.subr.mxu0 %v1134
        %2508 = vmatpush1.msra.mxu0 %v1133
        %2509 = vmatprep.subr.mxu0 %v1138
        %2510 = vmatpush1.msra.mxu0 %v1137
        %2511 = vmatprep.subr.mxu0 %v1142
        %2512 = vmatpush1.msra.mxu0 %v1141
        %2513 = vmatprep.subr.mxu0 %v1146
        %2514 = vmatpush1.msra.mxu0 %v1145
        %2515 = vmatprep.subr.mxu0 %v1150
        %2516 = vmatpush1.msra.mxu0 %v1149
        %2517 = vmatprep.subr.mxu0 %v1154
        %2518 = vmatpush1.msra.mxu0 %v1153
        %2519 = vmatprep.subr.mxu0 %v1158
        %2520 = vmatpush1.msra.mxu0 %v1157
        %2521 = vmatprep.subr.mxu0 0.0
        %2522 = vmatpush1.msra.mxu0 0.0
        %2523 = vmatprep.subr.mxu0 0.0
        %2524 = vmatpush1.msra.mxu0 0.0
        %2525 = vmatprep.subr.mxu0 0.0
        %2526 = vmatpush1.msra.mxu0 0.0
        %2527 = vmatprep.subr.mxu0 0.0
        %2528 = vmatpush1.msra.mxu0 0.0
        %2529 = vmatprep.subr.mxu0 0.0
        %2530 = vmatpush1.msra.mxu0 0.0
        %2531 = vmatprep.subr.mxu0 0.0
        %2532 = vmatpush1.msra.mxu0 0.0
        %2533 = vmatprep.subr.mxu0 0.0
        %2534 = vmatpush1.msra.mxu0 0.0
        %2535 = vmatprep.subr.mxu0 0.0
        %2536 = vmatpush1.msra.mxu0 0.0
        %2537 = vmatprep.subr.mxu0 0.0
        %2538 = vmatpush1.msra.mxu0 0.0
        %2539 = vmatprep.subr.mxu0 0.0
        %2540 = vmatpush1.msra.mxu0 0.0
        %2541 = vmatprep.subr.mxu0 0.0
        %2542 = vmatpush1.msra.mxu0 0.0
        %2543 = vmatprep.subr.mxu0 0.0
        %2544 = vmatpush1.msra.mxu0 0.0
        %2545 = vmatprep.subr.mxu0 0.0
        %2546 = vmatpush1.msra.mxu0 0.0
        %2547 = vmatprep.subr.mxu0 0.0
        %2548 = vmatpush1.msra.mxu0 0.0
        %2549 = vmatprep.subr.mxu0 0.0
        %2550 = vmatpush1.msra.mxu0 0.0
        %2551 = vmatprep.subr.mxu0 0.0
        %2552 = vmatpush1.msra.mxu0 0.0
        %2553 = vmatprep.mubr.f32.mxu0 0.0
        %2554 = vmatmul.mubr.f32.gmra.mrb[0].mxu0 %v2408
        %v2555 = vpop.f32.mrb[0].mxu0
        %v2556 = vadd.f32 0.0, %v2555
        %v2557 = vpop.f32.mrb[0].mxu0
        %v2558 = vadd.f32 0.0, %v2557
        %2559 = vdwg.mxu0
        %v2560 = vadd.f32 %v2414, %v2485
        %v2561 = vadd.f32 %v2415, %v2487
        %v2562 = vadd.f32 %v2416, %v2556
        %v2563 = vadd.f32 %v2417, %v2558
        %v2564 = vxor.u32 %v2560, 2147483648
        %v2565 = vmul.f32 %v2564, 1.442695
        %v2566 = vpow.pop %v2565
        %v2567 = vadd.f32 %v2566, 1.0
        %v2568 = vrcp.pop %v2567
        %v2569 = vmul.f32 1.0, %v2568
        %v2570 = vxor.u32 %v2561, 2147483648
        %v2571 = vmul.f32 %v2570, 1.442695
        %v2572 = vpow.pop %v2571
        %v2573 = vadd.f32 %v2572, 1.0
        %v2574 = vrcp.pop %v2573
        %v2575 = vmul.f32 1.0, %v2574
        %v2576 = vtanh.pop %v2562
        %v2577 = vxor.u32 %v2563, 2147483648
        %v2578 = vmul.f32 %v2577, 1.442695
        %v2579 = vpow.pop %v2578
        %v2580 = vadd.f32 %v2579, 1.0
        %v2581 = vrcp.pop %v2580
        %v2582 = vmul.f32 1.0, %v2581
        %v2583 = vmul.f32 %v2575, %v2406
        %v2584 = vmul.f32 %v2569, %v2576
        %v2585 = vadd.f32 %v2583, %v2584
        %v2586 = vtanh.pop %v2585
        %v2587 = vmul.f32 %v2582, %v2586
        %s2588 = scalar_lea.vmem [#allocation10], 56
        %2589 = vst [vmem:[%s2588] sm:$0xff] %v2587
        %2590 = vst [vmem:[%s372] sm:$0xff] %v2587
        %2591 = vst [vmem:[%s379] sm:$0xff] %v2585
        %s2592 = sand.u32 %s25, 1
        %s2593 = scalar_lea.sflag [#allocation12], %s2592
        %s2594 = sand.u32 %s174, 1
        %s2595 = smul.addr %s2594, 8
        %s2596 = scalar_lea.vmem [#allocation11], %s2595
        %s2597 = sand.u32 %s25, 1
        %s2598 = scalar_lea.sflag [#allocation12], %s2597
        %s2599 = sand.u32 %s200, 1
        %s2600 = smul.addr %s2599, 8
        %s2601 = scalar_lea.vmem [#allocation13], %s2600
        // Predicated region
        $region65: #{tpu_custom_call.1} parent=39 // pred_check
          %p2602 = pneg %p158
        $region66: #{tpu_custom_call.1} parent=39 // pred_check_branch
          %2604 = sbr.rel (%p2602) target = $region68
        $region67: #{tpu_custom_call.1} parent=39 // pred_region
          %s2606 = ssub.s32 1024, 1024
          %2607 = vsyncadd [#allocation5], %s2606
          %s2608 = sshll.u32 [#allocation10], 4
          %s2609 = int_to_ptr.vmem [resolvable:$true] %s2608
          %2614 = dma.vmem_to_hbm [thread:$0]  %s2609, 1024, %s5, [#allocation5], 128, 128, 8
        $region68: #{tpu_custom_call.1} parent=39 // pred_fallthru
          _
        // Predicated region
        $region69: #{tpu_custom_call.1} parent=39 // pred_check
          %p2615 = pneg %p184
        $region70: #{tpu_custom_call.1} parent=39 // pred_check_branch
          %2617 = sbr.rel (%p2615) target = $region72
        $region71: #{tpu_custom_call.1} parent=39 // pred_region
          %s2619 = ssub.s32 128, 128
          %2620 = vsyncadd %s2593, %s2619
          %s2621 = smul.addr %s25, 128
          %s2622 = scalar_lea.hbm %s6, %s2621
          %s2624 = sshll.u32 %s2596, 4
          %s2625 = int_to_ptr.vmem [resolvable:$true] %s2624
          %2627 = dma.vmem_to_hbm [thread:$0]  %s2625, 128, %s2622, %s2593
        $region72: #{tpu_custom_call.1} parent=39 // pred_fallthru
          _
        // Predicated region
        $region73: #{tpu_custom_call.1} parent=39 // pred_check
          %p2628 = pneg %p210
        $region74: #{tpu_custom_call.1} parent=39 // pred_check_branch
          %2630 = sbr.rel (%p2628) target = $region76
        $region75: #{tpu_custom_call.1} parent=39 // pred_region
          %s2632 = ssub.s32 128, 128
          %2633 = vsyncadd %s2598, %s2632
          %s2634 = smul.addr %s25, 128
          %s2635 = scalar_lea.hbm %s7, %s2634
          %s2637 = sshll.u32 %s2601, 4
          %s2638 = int_to_ptr.vmem [resolvable:$true] %s2637
          %2640 = dma.vmem_to_hbm [thread:$0]  %s2638, 128, %s2635, %s2598
        $region76: #{tpu_custom_call.1} parent=39 // pred_fallthru
          _
        // Predicated region
        $region77: #{tpu_custom_call.1} parent=39 // pred_check
          %p2641 = pneg %p158
        $region78: #{tpu_custom_call.1} parent=39 // pred_check_branch
          %2643 = sbr.rel (%p2641) target = $region80
        $region79: #{tpu_custom_call.1} parent=39 // pred_region
          %2644 = dma.done [#allocation5], 1024
        $region80: #{tpu_custom_call.1} parent=39 // pred_fallthru
          _
      $region40: #{tpu_custom_call.1} parent=5 // pred_fallthru
        _
      %p2645 = scmp.le.s32.totalorder 2, %s20
      // Predicated region
      $region81: #{tpu_custom_call.1} parent=5 // pred_check
        %p2646 = pneg %p2645
      $region82: #{tpu_custom_call.1} parent=5 // pred_check_branch
        %2648 = sbr.rel (%p2646) target = $region84
      $region83: #{tpu_custom_call.1} parent=5 // pred_region
        %s2649 = ssub.s32 %s20, 2
        // Predicated region
        $region85: #{tpu_custom_call.1} parent=83 // pred_check
          %p2650 = pneg %p190
        $region86: #{tpu_custom_call.1} parent=83 // pred_check_branch
          %2652 = sbr.rel (%p2650) target = $region88
        $region87: #{tpu_custom_call.1} parent=83 // pred_region
          %s2653 = sand.u32 %s26, 1
          %s2654 = scalar_lea.sflag [#allocation12], %s2653
          %s2655 = sand.u32 %s175, 1
          %s2656 = smul.addr %s2655, 8
          %s2657 = scalar_lea.vmem [#allocation11], %s2656
          %2658 = dma.done %s2654, 128
        $region88: #{tpu_custom_call.1} parent=83 // pred_fallthru
          _
        // Predicated region
        $region89: #{tpu_custom_call.1} parent=83 // pred_check
          %p2659 = pneg %p216
        $region90: #{tpu_custom_call.1} parent=83 // pred_check_branch
          %2661 = sbr.rel (%p2659) target = $region92
        $region91: #{tpu_custom_call.1} parent=83 // pred_region
          %s2662 = sand.u32 %s26, 1
          %s2663 = scalar_lea.sflag [#allocation12], %s2662
          %s2664 = sand.u32 %s201, 1
          %s2665 = smul.addr %s2664, 8
          %s2666 = scalar_lea.vmem [#allocation13], %s2665
          %2667 = dma.done %s2663, 128
        $region92: #{tpu_custom_call.1} parent=83 // pred_fallthru
          _
      $region84: #{tpu_custom_call.1} parent=5 // pred_fallthru
        _
    $region6: #{tpu_custom_call.1} parent=1 // loop_footer
      %s24 = sadd.s32 1, %s20
    $region7: #{tpu_custom_call.1} parent=1 // loop_footer_branch
      %19 = sbr.rel target = $region3
    $region8: #{tpu_custom_call.1} parent=1 // loop_exit
      _
    %2668 = vsyncpa [#allocation4], 1
    %s2669 = scalar_lea.sflag [#allocation4], 1
    %2670 = vsyncpa %s2669, 1
    %2671 = vsyncpa [#allocation7], 1
    %2672 = vsyncpa [#allocation5], 1
    %s2673 = scalar_lea.sflag [#allocation5], 1
    %2674 = vsyncpa %s2673, 1
    %2675 = vsyncpa [#allocation12], 1
    %s2676 = scalar_lea.sflag [#allocation12], 1
    %2677 = vsyncpa %s2676, 1

</llo_original>
